<compile_context>
chip_gen: v7x
topology: tpu7x:2x2x1
jax: 0.10.0
libtpu: 0.0.40
codegen_flags: <defaults>
</compile_context>

<pallas_src>
import jax
import jax.numpy as jnp
import numpy as np
from jax.experimental import pallas as pl
from jax.experimental.pallas import tpu as pltpu

EPS = 1e-5
COL0 = 8          # interior column offset inside the padded scratch (sublane aligned)


def _fused_conv_bn_relu_x2_kernel(
        x_ref, w1_ref, b1_ref, g1_ref, be1_ref,
        w2_ref, b2_ref, g2_ref, be2_ref, out_ref,
        xpad1, xpad2, act1, act2,
        sum1, scale1, shift1, sum2, scale2, shift2):
    """Fused (Conv3x3 + BN(train) + ReLU) x 2 over a (phase, image) grid.

    x_ref  : (1, H, W, Cin)      current image block (NHWC)
    w*_ref : (9*Cin, Cout) bf16  conv weights, row = (kh*3+kw)*Cin + c
    b/g/be : (1, Cout) f32       conv bias, BN gamma, BN beta
    out_ref: (N, H, W, C2)       resident across the whole grid, written once
    xpad*  : (H+2, W+16, C) f32  zero-bordered padded image scratch
    act*   : (N, H*W, C) f32     pre-BN activations for the whole batch
    sum/scale/shift: (1, C) f32  BN statistics / folded affine params
    """
    phase = pl.program_id(0)
    n = pl.program_id(1)

    _, H, W, _ = x_ref.shape
    N, HW, C1 = act1.shape
    C2 = act2.shape[2]
    inv_count = 1.0 / float(N * H * W)        # exact at trace time (python double)

    def conv3x3(xpad_ref, w_ref, b_ref):
        """3x3 same-conv on the zero-padded scratch: one (HW, 9*Cin) bf16 matmul."""
        cin = xpad_ref.shape[-1]
        taps = []
        for kh in range(3):
            for kw in range(3):
                win = xpad_ref[pl.ds(kh, H), pl.ds(COL0 - 1 + kw, W), :]   # (H,W,cin)
                taps.append(win.reshape(HW, cin))
        col = jnp.concatenate(taps, axis=-1).astype(jnp.bfloat16)          # (HW,9*cin)
        bias = b_ref[...]                                                  # load once
        acc = jnp.dot(col, w_ref[...], preferred_element_type=jnp.float32)
        return acc + bias                                                  # (HW,Cout) f32

    def finalize_bn(sum_ref, act_ref, g_ref, be_ref, scale_ref, shift_ref):
        """Training-mode BN params from batch stats (two-pass, centered variance)."""
        mean = sum_ref[...] * inv_count                                    # (1, C)
        csq = jnp.zeros_like(mean)
        for i in range(N):              # static unroll; use fori_loop for large N
            d = act_ref[i] - mean
            csq = csq + jnp.sum(d * d, axis=0, keepdims=True)
        var = csq * inv_count                                              # biased var
        sc = g_ref[...] * jax.lax.rsqrt(var + EPS)
        scale_ref[...] = sc
        shift_ref[...] = be_ref[...] - mean * sc

    # ---- phase 0: conv1(image n) -> act1[n]; accumulate per-channel sums ----
    @pl.when(phase == 0)
    def _():
        @pl.when(n == 0)
        def _():
            xpad1[...] = jnp.zeros(xpad1.shape, jnp.float32)
            xpad2[...] = jnp.zeros(xpad2.shape, jnp.float32)
            sum1[...] = jnp.zeros(sum1.shape, jnp.float32)
            sum2[...] = jnp.zeros(sum2.shape, jnp.float32)
        # in-kernel zero padding: write interior at sublane-aligned offset,
        # borders stay zero from the one-time init above.
        xpad1[pl.ds(1, H), pl.ds(COL0, W), :] = x_ref[0]
        a = conv3x3(xpad1, w1_ref, b1_ref)
        act1[n] = a
        sum1[...] += jnp.sum(a, axis=0, keepdims=True)

    # ---- phase 1: finalize BN1 once; BN1+ReLU -> conv2(image n) -> act2[n] ---
    @pl.when(phase == 1)
    def _():
        @pl.when(n == 0)
        def _():
            finalize_bn(sum1, act1, g1_ref, be1_ref, scale1, shift1)
        y = jnp.maximum(act1[n] * scale1[...] + shift1[...], 0.0)          # (HW, C1)
        xpad2[pl.ds(1, H), pl.ds(COL0, W), :] = y.reshape(H, W, C1)
        a = conv3x3(xpad2, w2_ref, b2_ref)
        act2[n] = a
        sum2[...] += jnp.sum(a, axis=0, keepdims=True)

    # ---- phase 2: finalize BN2 once; BN2+ReLU; single output write ----------
    @pl.when(phase == 2)
    def _():
        @pl.when(n == 0)
        def _():
            finalize_bn(sum2, act2, g2_ref, be2_ref, scale2, shift2)
        y = jnp.maximum(act2[n] * scale2[...] + shift2[...], 0.0)          # (HW, C2)
        out_ref[n] = y.reshape(H, W, C2)


def conv_block_nested_forward(x_nchw, params):
    """Equivalent of conv_block_nested.forward (training-mode BatchNorm)."""
    (w1, b1, g1, be1, w2, b2, g2, be2) = params
    N, Cin, H, W = x_nchw.shape
    C1 = w1.shape[0]
    C2 = w2.shape[0]
    HW = H * W
    Hp, Wg = H + 2, W + 16     # padded rows; sublane-aligned padded columns

    # OIHW -> (9*Cin, Cout), row = (kh*3+kw)*Cin + c ; bf16 for the MXU.
    w1m = jnp.transpose(w1, (2, 3, 1, 0)).reshape(9 * Cin, C1).astype(jnp.bfloat16)
    w2m = jnp.transpose(w2, (2, 3, 1, 0)).reshape(9 * C1, C2).astype(jnp.bfloat16)

    # TODO(synk): keep the surrounding model NHWC end-to-end (and/or pad channels
    # toward the 128-lane width) so these full-tensor transposes disappear and
    # the output stores become lane-dense; at C=8 we keep NHWC + glue transpose
    # for lowering robustness.
    x = jnp.transpose(x_nchw, (0, 2, 3, 1))                 # NCHW -> NHWC

    args = (x, w1m,
            b1.reshape(1, C1), g1.reshape(1, C1), be1.reshape(1, C1),
            w2m,
            b2.reshape(1, C2), g2.reshape(1, C2), be2.reshape(1, C2))

    def img_map(p, n):
        return (n, 0, 0, 0)

    def fixed2(p, n):
        return (0, 0)

    def fixed4(p, n):
        return (0, 0, 0, 0)

    out = pl.pallas_call(
        _fused_conv_bn_relu_x2_kernel,
        out_shape=jax.ShapeDtypeStruct((N, H, W, C2), jnp.float32),
        grid_spec=pltpu.PrefetchScalarGridSpec(
            num_scalar_prefetch=0,
            grid=(3, N),                                    # (phase, image)
            in_specs=[
                pl.BlockSpec((1, H, W, Cin), img_map),      # streamed image block
                pl.BlockSpec((9 * Cin, C1), fixed2),        # w1 (resident)
                pl.BlockSpec((1, C1), fixed2),              # b1
                pl.BlockSpec((1, C1), fixed2),              # gamma1
                pl.BlockSpec((1, C1), fixed2),              # beta1
                pl.BlockSpec((9 * C1, C2), fixed2),         # w2 (resident)
                pl.BlockSpec((1, C2), fixed2),              # b2
                pl.BlockSpec((1, C2), fixed2),              # gamma2
                pl.BlockSpec((1, C2), fixed2),              # beta2
            ],
            out_specs=pl.BlockSpec((N, H, W, C2), fixed4),  # resident, flushed once
            scratch_shapes=[
                pltpu.VMEM((Hp, Wg, Cin), jnp.float32),     # xpad1
                pltpu.VMEM((Hp, Wg, C1), jnp.float32),      # xpad2
                pltpu.VMEM((N, HW, C1), jnp.float32),       # act1 (pre-BN)
                pltpu.VMEM((N, HW, C2), jnp.float32),       # act2 (pre-BN)
                pltpu.VMEM((1, C1), jnp.float32),           # sum1
                pltpu.VMEM((1, C1), jnp.float32),           # scale1
                pltpu.VMEM((1, C1), jnp.float32),           # shift1
                pltpu.VMEM((1, C2), jnp.float32),           # sum2
                pltpu.VMEM((1, C2), jnp.float32),           # scale2
                pltpu.VMEM((1, C2), jnp.float32),           # shift2
            ]),
        compiler_params=pltpu.CompilerParams(
            # Phases + whole-batch BN stat accumulation are inherently sequential.
            # TODO(synk): for v7x megacore, split the image axis per core and
            # combine per-core BN partial sums (e.g. via CMEM/VMEM_SHARED).
            dimension_semantics=("arbitrary", "arbitrary")),
    )(*args)

    return jnp.transpose(out, (0, 3, 1, 2))                 # NHWC -> NCHW


# ---------------- pure-JAX reference (NCHW, mirrors PyTorch semantics) -------
def _ref_forward(x, params):
    (w1, b1, g1, be1, w2, b2, g2, be2) = params

    def conv(x, w, b):
        y = jax.lax.conv_general_dilated(
            x, w, window_strides=(1, 1), padding=((1, 1), (1, 1)),
            dimension_numbers=("NCHW", "OIHW", "NCHW"))
        return y + b[None, :, None, None]

    def bn_relu(y, g, be):
        mean = jnp.mean(y, axis=(0, 2, 3), keepdims=True)
        var = jnp.var(y, axis=(0, 2, 3), keepdims=True)     # biased, like PyTorch train
        yn = (y - mean) * jax.lax.rsqrt(var + EPS)
        return jnp.maximum(yn * g[None, :, None, None] + be[None, :, None, None], 0.0)

    y = bn_relu(conv(x, w1, b1), g1, be1)
    return bn_relu(conv(y, w2, b2), g2, be2)


if __name__ == "__main__":
    in_ch, out_ch = 4, 8
    N, H, W = 2, 16, 16

    key = jax.random.PRNGKey(0)
    ks = jax.random.split(key, 9)
    x = jax.random.normal(ks[0], (N, in_ch, H, W), jnp.float32)     # NCHW like PyTorch

    w1 = 0.1 * jax.random.normal(ks[1], (out_ch, in_ch, 3, 3), jnp.float32)
    b1 = 0.1 * jax.random.normal(ks[2], (out_ch,), jnp.float32)
    g1 = 1.0 + 0.1 * jax.random.normal(ks[3], (out_ch,), jnp.float32)
    be1 = 0.1 * jax.random.normal(ks[4], (out_ch,), jnp.float32)
    w2 = 0.1 * jax.random.normal(ks[5], (out_ch, out_ch, 3, 3), jnp.float32)
    b2 = 0.1 * jax.random.normal(ks[6], (out_ch,), jnp.float32)
    g2 = 1.0 + 0.1 * jax.random.normal(ks[7], (out_ch,), jnp.float32)
    be2 = 0.1 * jax.random.normal(ks[8], (out_ch,), jnp.float32)

    params = (w1, b1, g1, be1, w2, b2, g2, be2)

    out = conv_block_nested_forward(x, params)
    out = jax.block_until_ready(out)

    ref = jax.block_until_ready(_ref_forward(x, params))
    assert out.shape == (N, out_ch, H, W)
    # bf16 MXU inputs (f32 accumulation) -> slightly looser tolerance than pure f32.
    np.testing.assert_allclose(np.asarray(out), np.asarray(ref), rtol=3e-2, atol=3e-2)

    print("KERNEL_OK")
</pallas_src>

<mosaic_0001>
module attributes {stable_mosaic.version = 11 : i64} {
  func.func @_fused_conv_bn_relu_x2_kernel(%arg0: i32, %arg1: i32, %arg2: memref<1x16x16x4xf32, #tpu.memory_space<vmem>>, %arg3: memref<36x8xbf16, #tpu.memory_space<vmem>>, %arg4: memref<1x8xf32, #tpu.memory_space<vmem>>, %arg5: memref<1x8xf32, #tpu.memory_space<vmem>>, %arg6: memref<1x8xf32, #tpu.memory_space<vmem>>, %arg7: memref<72x8xbf16, #tpu.memory_space<vmem>>, %arg8: memref<1x8xf32, #tpu.memory_space<vmem>>, %arg9: memref<1x8xf32, #tpu.memory_space<vmem>>, %arg10: memref<1x8xf32, #tpu.memory_space<vmem>>, %arg11: memref<2x16x16x8xf32, #tpu.memory_space<vmem>>, %arg12: memref<18x32x4xf32, #tpu.memory_space<vmem>>, %arg13: memref<18x32x8xf32, #tpu.memory_space<vmem>>, %arg14: memref<2x256x8xf32, #tpu.memory_space<vmem>>, %arg15: memref<2x256x8xf32, #tpu.memory_space<vmem>>, %arg16: memref<1x8xf32, #tpu.memory_space<vmem>>, %arg17: memref<1x8xf32, #tpu.memory_space<vmem>>, %arg18: memref<1x8xf32, #tpu.memory_space<vmem>>, %arg19: memref<1x8xf32, #tpu.memory_space<vmem>>, %arg20: memref<1x8xf32, #tpu.memory_space<vmem>>, %arg21: memref<1x8xf32, #tpu.memory_space<vmem>>) attributes {dimension_semantics = [#tpu.dimension_semantics<arbitrary>, #tpu.dimension_semantics<arbitrary>], iteration_bounds = array<i64: 3, 2>, scalar_prefetch = 0 : i64, scratch_operands = 10 : i64, tpu.core_type = #tpu.core_type<tc>, window_params = [{transform_indices = @transform_0, window_bounds = array<i64: 1, 16, 16, 4>}, {pipeline_mode = #tpu.pipeline_mode<synchronous>, transform_indices = @transform_1, window_bounds = array<i64: 36, 8>}, {pipeline_mode = #tpu.pipeline_mode<synchronous>, transform_indices = @transform_2, window_bounds = array<i64: 1, 8>}, {pipeline_mode = #tpu.pipeline_mode<synchronous>, transform_indices = @transform_3, window_bounds = array<i64: 1, 8>}, {pipeline_mode = #tpu.pipeline_mode<synchronous>, transform_indices = @transform_4, window_bounds = array<i64: 1, 8>}, {pipeline_mode = #tpu.pipeline_mode<synchronous>, transform_indices = @transform_5, window_bounds = array<i64: 72, 8>}, {pipeline_mode = #tpu.pipeline_mode<synchronous>, transform_indices = @transform_6, window_bounds = array<i64: 1, 8>}, {pipeline_mode = #tpu.pipeline_mode<synchronous>, transform_indices = @transform_7, window_bounds = array<i64: 1, 8>}, {pipeline_mode = #tpu.pipeline_mode<synchronous>, transform_indices = @transform_8, window_bounds = array<i64: 1, 8>}, {pipeline_mode = #tpu.pipeline_mode<synchronous>, transform_indices = @transform_9, window_bounds = array<i64: 2, 16, 16, 8>}]} {
    %c0_i32 = arith.constant 0 : i32
    %0 = arith.cmpi eq, %arg0, %c0_i32 : i32
    %1 = arith.extui %0 : i1 to i32
    %c0_i32_0 = arith.constant 0 : i32
    %2 = arith.cmpi ne, %1, %c0_i32_0 : i32
    scf.if %2 {
      %c0_i32_3 = arith.constant 0 : i32
      %9 = arith.cmpi eq, %arg1, %c0_i32_3 : i32
      %10 = arith.extui %9 : i1 to i32
      %c0_i32_4 = arith.constant 0 : i32
      %11 = arith.cmpi ne, %10, %c0_i32_4 : i32
      scf.if %11 {
        %cst_44 = arith.constant 0.000000e+00 : f32
        %49 = vector.broadcast %cst_44 : f32 to vector<18x32x4xf32>
        %c0_45 = arith.constant 0 : index
        %c0_46 = arith.constant 0 : index
        %c0_47 = arith.constant 0 : index
        %50 = vector.load %arg12[%c0_45, %c0_46, %c0_47] : memref<18x32x4xf32, #tpu.memory_space<vmem>>, vector<18x32x4xf32>
        tpu.vector_store %arg12[%c0_45, %c0_46, %c0_47], %49 {strides = array<i32>} : memref<18x32x4xf32, #tpu.memory_space<vmem>>, vector<18x32x4xf32>,
        %cst_48 = arith.constant 0.000000e+00 : f32
        %51 = vector.broadcast %cst_48 : f32 to vector<18x32x8xf32>
        %c0_49 = arith.constant 0 : index
        %c0_50 = arith.constant 0 : index
        %c0_51 = arith.constant 0 : index
        %52 = vector.load %arg13[%c0_49, %c0_50, %c0_51] : memref<18x32x8xf32, #tpu.memory_space<vmem>>, vector<18x32x8xf32>
        tpu.vector_store %arg13[%c0_49, %c0_50, %c0_51], %51 {strides = array<i32>} : memref<18x32x8xf32, #tpu.memory_space<vmem>>, vector<18x32x8xf32>,
        %cst_52 = arith.constant 0.000000e+00 : f32
        %53 = vector.broadcast %cst_52 : f32 to vector<1x8xf32>
        %c0_53 = arith.constant 0 : index
        %c0_54 = arith.constant 0 : index
        %54 = vector.load %arg16[%c0_53, %c0_54] : memref<1x8xf32, #tpu.memory_space<vmem>>, vector<1x8xf32>
        tpu.vector_store %arg16[%c0_53, %c0_54], %53 {strides = array<i32>} : memref<1x8xf32, #tpu.memory_space<vmem>>, vector<1x8xf32>,
        %cst_55 = arith.constant 0.000000e+00 : f32
        %55 = vector.broadcast %cst_55 : f32 to vector<1x8xf32>
        %c0_56 = arith.constant 0 : index
        %c0_57 = arith.constant 0 : index
        %56 = vector.load %arg19[%c0_56, %c0_57] : memref<1x8xf32, #tpu.memory_space<vmem>>, vector<1x8xf32>
        tpu.vector_store %arg19[%c0_56, %c0_57], %55 {strides = array<i32>} : memref<1x8xf32, #tpu.memory_space<vmem>>, vector<1x8xf32>,
      } else {
      }
      %c0 = arith.constant 0 : index
      %c0_5 = arith.constant 0 : index
      %c0_6 = arith.constant 0 : index
      %c0_7 = arith.constant 0 : index
      %12 = vector.load %arg2[%c0, %c0_5, %c0_6, %c0_7] : memref<1x16x16x4xf32, #tpu.memory_space<vmem>>, vector<1x16x16x4xf32>
      %13 = vector.shape_cast %12 : vector<1x16x16x4xf32> to vector<16x16x4xf32>
      %c1 = arith.constant 1 : index
      %c8 = arith.constant 8 : index
      %c0_8 = arith.constant 0 : index
      %14 = vector.load %arg12[%c1, %c8, %c0_8] : memref<18x32x4xf32, #tpu.memory_space<vmem>>, vector<16x16x4xf32>
      tpu.vector_store %arg12[%c1, %c8, %c0_8], %13 {strides = array<i32>} : memref<18x32x4xf32, #tpu.memory_space<vmem>>, vector<16x16x4xf32>,
      %c0_9 = arith.constant 0 : index
      %c7 = arith.constant 7 : index
      %c0_10 = arith.constant 0 : index
      %15 = vector.load %arg12[%c0_9, %c7, %c0_10] : memref<18x32x4xf32, #tpu.memory_space<vmem>>, vector<16x16x4xf32>
      %16 = vector.shape_cast %15 : vector<16x16x4xf32> to vector<256x4xf32>
      %c0_11 = arith.constant 0 : index
      %c8_12 = arith.constant 8 : index
      %c0_13 = arith.constant 0 : index
      %17 = vector.load %arg12[%c0_11, %c8_12, %c0_13] : memref<18x32x4xf32, #tpu.memory_space<vmem>>, vector<16x16x4xf32>
      %18 = vector.shape_cast %17 : vector<16x16x4xf32> to vector<256x4xf32>
      %c0_14 = arith.constant 0 : index
      %c9 = arith.constant 9 : index
      %c0_15 = arith.constant 0 : index
      %19 = vector.load %arg12[%c0_14, %c9, %c0_15] : memref<18x32x4xf32, #tpu.memory_space<vmem>>, vector<16x16x4xf32>
      %20 = vector.shape_cast %19 : vector<16x16x4xf32> to vector<256x4xf32>
      %c1_16 = arith.constant 1 : index
      %c7_17 = arith.constant 7 : index
      %c0_18 = arith.constant 0 : index
      %21 = vector.load %arg12[%c1_16, %c7_17, %c0_18] : memref<18x32x4xf32, #tpu.memory_space<vmem>>, vector<16x16x4xf32>
      %22 = vector.shape_cast %21 : vector<16x16x4xf32> to vector<256x4xf32>
      %c1_19 = arith.constant 1 : index
      %c8_20 = arith.constant 8 : index
      %c0_21 = arith.constant 0 : index
      %23 = vector.load %arg12[%c1_19, %c8_20, %c0_21] : memref<18x32x4xf32, #tpu.memory_space<vmem>>, vector<16x16x4xf32>
      %24 = vector.shape_cast %23 : vector<16x16x4xf32> to vector<256x4xf32>
      %c1_22 = arith.constant 1 : index
      %c9_23 = arith.constant 9 : index
      %c0_24 = arith.constant 0 : index
      %25 = vector.load %arg12[%c1_22, %c9_23, %c0_24] : memref<18x32x4xf32, #tpu.memory_space<vmem>>, vector<16x16x4xf32>
      %26 = vector.shape_cast %25 : vector<16x16x4xf32> to vector<256x4xf32>
      %c2 = arith.constant 2 : index
      %c7_25 = arith.constant 7 : index
      %c0_26 = arith.constant 0 : index
      %27 = vector.load %arg12[%c2, %c7_25, %c0_26] : memref<18x32x4xf32, #tpu.memory_space<vmem>>, vector<16x16x4xf32>
      %28 = vector.shape_cast %27 : vector<16x16x4xf32> to vector<256x4xf32>
      %c2_27 = arith.constant 2 : index
      %c8_28 = arith.constant 8 : index
      %c0_29 = arith.constant 0 : index
      %29 = vector.load %arg12[%c2_27, %c8_28, %c0_29] : memref<18x32x4xf32, #tpu.memory_space<vmem>>, vector<16x16x4xf32>
      %30 = vector.shape_cast %29 : vector<16x16x4xf32> to vector<256x4xf32>
      %c2_30 = arith.constant 2 : index
      %c9_31 = arith.constant 9 : index
      %c0_32 = arith.constant 0 : index
      %31 = vector.load %arg12[%c2_30, %c9_31, %c0_32] : memref<18x32x4xf32, #tpu.memory_space<vmem>>, vector<16x16x4xf32>
      %32 = vector.shape_cast %31 : vector<16x16x4xf32> to vector<256x4xf32>
      %33 = tpu.concatenate %16, %18, %20, %22, %24, %26, %28, %30, %32 in 1 : vector<256x4xf32>, vector<256x4xf32>, vector<256x4xf32>, vector<256x4xf32>, vector<256x4xf32>, vector<256x4xf32>, vector<256x4xf32>, vector<256x4xf32>, vector<256x4xf32> -> vector<256x36xf32>
      %34 = arith.truncf %33 : vector<256x36xf32> to vector<256x36xbf16>
      %c0_33 = arith.constant 0 : index
      %c0_34 = arith.constant 0 : index
      %35 = vector.load %arg4[%c0_33, %c0_34] : memref<1x8xf32, #tpu.memory_space<vmem>>, vector<1x8xf32>
      %c0_35 = arith.constant 0 : index
      %c0_36 = arith.constant 0 : index
      %36 = vector.load %arg3[%c0_35, %c0_36] : memref<36x8xbf16, #tpu.memory_space<vmem>>, vector<36x8xbf16>
      %cst = arith.constant dense<0.000000e+00> : vector<256x8xf32>
      %37 = tpu.matmul %34, %36, %cst {dimension_numbers = #tpu.dot_dimension_numbers<[1], [0], [0], [1], [0, 0, 1, 1], [], []>} : vector<256x36xbf16>, vector<36x8xbf16>, vector<256x8xf32> -> vector<256x8xf32>
      %38 = vector.broadcast %35 : vector<1x8xf32> to vector<256x8xf32>
      %39 = arith.addf %37, %38 : vector<256x8xf32>
      %40 = arith.index_cast %arg1 : i32 to index
      %c0_37 = arith.constant 0 : index
      %c0_38 = arith.constant 0 : index
      %41 = vector.load %arg14[%40, %c0_37, %c0_38] : memref<2x256x8xf32, #tpu.memory_space<vmem>>, vector<1x256x8xf32>
      %42 = vector.shape_cast %41 : vector<1x256x8xf32> to vector<256x8xf32>
      %43 = vector.shape_cast %39 : vector<256x8xf32> to vector<1x256x8xf32>
      tpu.vector_store %arg14[%40, %c0_37, %c0_38], %43 {strides = array<i32>} : memref<2x256x8xf32, #tpu.memory_space<vmem>>, vector<1x256x8xf32>,
      %c0_39 = arith.constant 0 : index
      %c0_40 = arith.constant 0 : index
      %44 = vector.load %arg16[%c0_39, %c0_40] : memref<1x8xf32, #tpu.memory_space<vmem>>, vector<1x8xf32>
      %cst_41 = arith.constant dense<0.000000e+00> : vector<8xf32>
      %45 = vector.multi_reduction <add>, %39, %cst_41 [0] : vector<256x8xf32> to vector<8xf32>
      %46 = vector.shape_cast %45 : vector<8xf32> to vector<1x8xf32>
      %47 = arith.addf %44, %46 : vector<1x8xf32>
      %c0_42 = arith.constant 0 : index
      %c0_43 = arith.constant 0 : index
      %48 = vector.load %arg16[%c0_42, %c0_43] : memref<1x8xf32, #tpu.memory_space<vmem>>, vector<1x8xf32>
      tpu.vector_store %arg16[%c0_42, %c0_43], %47 {strides = array<i32>} : memref<1x8xf32, #tpu.memory_space<vmem>>, vector<1x8xf32>,
    } else {
    }
    %c1_i32 = arith.constant 1 : i32
    %3 = arith.cmpi eq, %arg0, %c1_i32 : i32
    %4 = arith.extui %3 : i1 to i32
    %c0_i32_1 = arith.constant 0 : i32
    %5 = arith.cmpi ne, %4, %c0_i32_1 : i32
    scf.if %5 {
      %c0_i32_3 = arith.constant 0 : i32
      %9 = arith.cmpi eq, %arg1, %c0_i32_3 : i32
      %10 = arith.extui %9 : i1 to i32
      %c0_i32_4 = arith.constant 0 : i32
      %11 = arith.cmpi ne, %10, %c0_i32_4 : i32
      scf.if %11 {
        %c0_47 = arith.constant 0 : index
        %c0_48 = arith.constant 0 : index
        %59 = vector.load %arg16[%c0_47, %c0_48] : memref<1x8xf32, #tpu.memory_space<vmem>>, vector<1x8xf32>
        %cst_49 = arith.constant 0.001953125 : f32
        %60 = vector.broadcast %cst_49 : f32 to vector<1x8xf32>
        %61 = arith.mulf %59, %60 : vector<1x8xf32>
        %cst_50 = arith.constant 0.000000e+00 : f32
        %62 = vector.broadcast %cst_50 : f32 to vector<1x8xf32>
        %c0_51 = arith.constant 0 : index
        %c0_52 = arith.constant 0 : index
        %c0_53 = arith.constant 0 : index
        %63 = vector.load %arg14[%c0_51, %c0_52, %c0_53] : memref<2x256x8xf32, #tpu.memory_space<vmem>>, vector<1x256x8xf32>
        %64 = vector.shape_cast %63 : vector<1x256x8xf32> to vector<256x8xf32>
        %65 = vector.broadcast %61 : vector<1x8xf32> to vector<256x8xf32>
        %66 = arith.subf %64, %65 : vector<256x8xf32>
        %67 = arith.mulf %66, %66 : vector<256x8xf32>
        %cst_54 = arith.constant dense<0.000000e+00> : vector<8xf32>
        %68 = vector.multi_reduction <add>, %67, %cst_54 [0] : vector<256x8xf32> to vector<8xf32>
        %69 = vector.shape_cast %68 : vector<8xf32> to vector<1x8xf32>
        %70 = arith.addf %62, %69 : vector<1x8xf32>
        %c1_55 = arith.constant 1 : index
        %c0_56 = arith.constant 0 : index
        %c0_57 = arith.constant 0 : index
        %71 = vector.load %arg14[%c1_55, %c0_56, %c0_57] : memref<2x256x8xf32, #tpu.memory_space<vmem>>, vector<1x256x8xf32>
        %72 = vector.shape_cast %71 : vector<1x256x8xf32> to vector<256x8xf32>
        %73 = vector.broadcast %61 : vector<1x8xf32> to vector<256x8xf32>
        %74 = arith.subf %72, %73 : vector<256x8xf32>
        %75 = arith.mulf %74, %74 : vector<256x8xf32>
        %cst_58 = arith.constant dense<0.000000e+00> : vector<8xf32>
        %76 = vector.multi_reduction <add>, %75, %cst_58 [0] : vector<256x8xf32> to vector<8xf32>
        %77 = vector.shape_cast %76 : vector<8xf32> to vector<1x8xf32>
        %78 = arith.addf %70, %77 : vector<1x8xf32>
        %cst_59 = arith.constant 0.001953125 : f32
        %79 = vector.broadcast %cst_59 : f32 to vector<1x8xf32>
        %80 = arith.mulf %78, %79 : vector<1x8xf32>
        %c0_60 = arith.constant 0 : index
        %c0_61 = arith.constant 0 : index
        %81 = vector.load %arg5[%c0_60, %c0_61] : memref<1x8xf32, #tpu.memory_space<vmem>>, vector<1x8xf32>
        %cst_62 = arith.constant 9.99999974E-6 : f32
        %82 = vector.broadcast %cst_62 : f32 to vector<1x8xf32>
        %83 = arith.addf %80, %82 : vector<1x8xf32>
        %84 = math.rsqrt %83 : vector<1x8xf32>
        %85 = arith.mulf %81, %84 : vector<1x8xf32>
        %c0_63 = arith.constant 0 : index
        %c0_64 = arith.constant 0 : index
        %86 = vector.load %arg17[%c0_63, %c0_64] : memref<1x8xf32, #tpu.memory_space<vmem>>, vector<1x8xf32>
        tpu.vector_store %arg17[%c0_63, %c0_64], %85 {strides = array<i32>} : memref<1x8xf32, #tpu.memory_space<vmem>>, vector<1x8xf32>,
        %c0_65 = arith.constant 0 : index
        %c0_66 = arith.constant 0 : index
        %87 = vector.load %arg6[%c0_65, %c0_66] : memref<1x8xf32, #tpu.memory_space<vmem>>, vector<1x8xf32>
        %88 = arith.mulf %61, %85 : vector<1x8xf32>
        %89 = arith.subf %87, %88 : vector<1x8xf32>
        %c0_67 = arith.constant 0 : index
        %c0_68 = arith.constant 0 : index
        %90 = vector.load %arg18[%c0_67, %c0_68] : memref<1x8xf32, #tpu.memory_space<vmem>>, vector<1x8xf32>
        tpu.vector_store %arg18[%c0_67, %c0_68], %89 {strides = array<i32>} : memref<1x8xf32, #tpu.memory_space<vmem>>, vector<1x8xf32>,
      } else {
      }
      %12 = arith.index_cast %arg1 : i32 to index
      %c0 = arith.constant 0 : index
      %c0_5 = arith.constant 0 : index
      %13 = vector.load %arg14[%12, %c0, %c0_5] : memref<2x256x8xf32, #tpu.memory_space<vmem>>, vector<1x256x8xf32>
      %14 = vector.shape_cast %13 : vector<1x256x8xf32> to vector<256x8xf32>
      %c0_6 = arith.constant 0 : index
      %c0_7 = arith.constant 0 : index
      %15 = vector.load %arg17[%c0_6, %c0_7] : memref<1x8xf32, #tpu.memory_space<vmem>>, vector<1x8xf32>
      %16 = vector.broadcast %15 : vector<1x8xf32> to vector<256x8xf32>
      %17 = arith.mulf %14, %16 : vector<256x8xf32>
      %c0_8 = arith.constant 0 : index
      %c0_9 = arith.constant 0 : index
      %18 = vector.load %arg18[%c0_8, %c0_9] : memref<1x8xf32, #tpu.memory_space<vmem>>, vector<1x8xf32>
      %19 = vector.broadcast %18 : vector<1x8xf32> to vector<256x8xf32>
      %20 = arith.addf %17, %19 : vector<256x8xf32>
      %cst = arith.constant 0.000000e+00 : f32
      %21 = vector.broadcast %cst : f32 to vector<256x8xf32>
      %22 = arith.maximumf %20, %21 : vector<256x8xf32>
      %23 = vector.shape_cast %22 : vector<256x8xf32> to vector<16x16x8xf32>
      %c1 = arith.constant 1 : index
      %c8 = arith.constant 8 : index
      %c0_10 = arith.constant 0 : index
      %24 = vector.load %arg13[%c1, %c8, %c0_10] : memref<18x32x8xf32, #tpu.memory_space<vmem>>, vector<16x16x8xf32>
      tpu.vector_store %arg13[%c1, %c8, %c0_10], %23 {strides = array<i32>} : memref<18x32x8xf32, #tpu.memory_space<vmem>>, vector<16x16x8xf32>,
      %c0_11 = arith.constant 0 : index
      %c7 = arith.constant 7 : index
      %c0_12 = arith.constant 0 : index
      %25 = vector.load %arg13[%c0_11, %c7, %c0_12] : memref<18x32x8xf32, #tpu.memory_space<vmem>>, vector<16x16x8xf32>
      %26 = vector.shape_cast %25 : vector<16x16x8xf32> to vector<256x8xf32>
      %c0_13 = arith.constant 0 : index
      %c8_14 = arith.constant 8 : index
      %c0_15 = arith.constant 0 : index
      %27 = vector.load %arg13[%c0_13, %c8_14, %c0_15] : memref<18x32x8xf32, #tpu.memory_space<vmem>>, vector<16x16x8xf32>
      %28 = vector.shape_cast %27 : vector<16x16x8xf32> to vector<256x8xf32>
      %c0_16 = arith.constant 0 : index
      %c9 = arith.constant 9 : index
      %c0_17 = arith.constant 0 : index
      %29 = vector.load %arg13[%c0_16, %c9, %c0_17] : memref<18x32x8xf32, #tpu.memory_space<vmem>>, vector<16x16x8xf32>
      %30 = vector.shape_cast %29 : vector<16x16x8xf32> to vector<256x8xf32>
      %c1_18 = arith.constant 1 : index
      %c7_19 = arith.constant 7 : index
      %c0_20 = arith.constant 0 : index
      %31 = vector.load %arg13[%c1_18, %c7_19, %c0_20] : memref<18x32x8xf32, #tpu.memory_space<vmem>>, vector<16x16x8xf32>
      %32 = vector.shape_cast %31 : vector<16x16x8xf32> to vector<256x8xf32>
      %c1_21 = arith.constant 1 : index
      %c8_22 = arith.constant 8 : index
      %c0_23 = arith.constant 0 : index
      %33 = vector.load %arg13[%c1_21, %c8_22, %c0_23] : memref<18x32x8xf32, #tpu.memory_space<vmem>>, vector<16x16x8xf32>
      %34 = vector.shape_cast %33 : vector<16x16x8xf32> to vector<256x8xf32>
      %c1_24 = arith.constant 1 : index
      %c9_25 = arith.constant 9 : index
      %c0_26 = arith.constant 0 : index
      %35 = vector.load %arg13[%c1_24, %c9_25, %c0_26] : memref<18x32x8xf32, #tpu.memory_space<vmem>>, vector<16x16x8xf32>
      %36 = vector.shape_cast %35 : vector<16x16x8xf32> to vector<256x8xf32>
      %c2 = arith.constant 2 : index
      %c7_27 = arith.constant 7 : index
      %c0_28 = arith.constant 0 : index
      %37 = vector.load %arg13[%c2, %c7_27, %c0_28] : memref<18x32x8xf32, #tpu.memory_space<vmem>>, vector<16x16x8xf32>
      %38 = vector.shape_cast %37 : vector<16x16x8xf32> to vector<256x8xf32>
      %c2_29 = arith.constant 2 : index
      %c8_30 = arith.constant 8 : index
      %c0_31 = arith.constant 0 : index
      %39 = vector.load %arg13[%c2_29, %c8_30, %c0_31] : memref<18x32x8xf32, #tpu.memory_space<vmem>>, vector<16x16x8xf32>
      %40 = vector.shape_cast %39 : vector<16x16x8xf32> to vector<256x8xf32>
      %c2_32 = arith.constant 2 : index
      %c9_33 = arith.constant 9 : index
      %c0_34 = arith.constant 0 : index
      %41 = vector.load %arg13[%c2_32, %c9_33, %c0_34] : memref<18x32x8xf32, #tpu.memory_space<vmem>>, vector<16x16x8xf32>
      %42 = vector.shape_cast %41 : vector<16x16x8xf32> to vector<256x8xf32>
      %43 = tpu.concatenate %26, %28, %30, %32, %34, %36, %38, %40, %42 in 1 : vector<256x8xf32>, vector<256x8xf32>, vector<256x8xf32>, vector<256x8xf32>, vector<256x8xf32>, vector<256x8xf32>, vector<256x8xf32>, vector<256x8xf32>, vector<256x8xf32> -> vector<256x72xf32>
      %44 = arith.truncf %43 : vector<256x72xf32> to vector<256x72xbf16>
      %c0_35 = arith.constant 0 : index
      %c0_36 = arith.constant 0 : index
      %45 = vector.load %arg8[%c0_35, %c0_36] : memref<1x8xf32, #tpu.memory_space<vmem>>, vector<1x8xf32>
      %c0_37 = arith.constant 0 : index
      %c0_38 = arith.constant 0 : index
      %46 = vector.load %arg7[%c0_37, %c0_38] : memref<72x8xbf16, #tpu.memory_space<vmem>>, vector<72x8xbf16>
      %cst_39 = arith.constant dense<0.000000e+00> : vector<256x8xf32>
      %47 = tpu.matmul %44, %46, %cst_39 {dimension_numbers = #tpu.dot_dimension_numbers<[1], [0], [0], [1], [0, 0, 1, 1], [], []>} : vector<256x72xbf16>, vector<72x8xbf16>, vector<256x8xf32> -> vector<256x8xf32>
      %48 = vector.broadcast %45 : vector<1x8xf32> to vector<256x8xf32>
      %49 = arith.addf %47, %48 : vector<256x8xf32>
      %50 = arith.index_cast %arg1 : i32 to index
      %c0_40 = arith.constant 0 : index
      %c0_41 = arith.constant 0 : index
      %51 = vector.load %arg15[%50, %c0_40, %c0_41] : memref<2x256x8xf32, #tpu.memory_space<vmem>>, vector<1x256x8xf32>
      %52 = vector.shape_cast %51 : vector<1x256x8xf32> to vector<256x8xf32>
      %53 = vector.shape_cast %49 : vector<256x8xf32> to vector<1x256x8xf32>
      tpu.vector_store %arg15[%50, %c0_40, %c0_41], %53 {strides = array<i32>} : memref<2x256x8xf32, #tpu.memory_space<vmem>>, vector<1x256x8xf32>,
      %c0_42 = arith.constant 0 : index
      %c0_43 = arith.constant 0 : index
      %54 = vector.load %arg19[%c0_42, %c0_43] : memref<1x8xf32, #tpu.memory_space<vmem>>, vector<1x8xf32>
      %cst_44 = arith.constant dense<0.000000e+00> : vector<8xf32>
      %55 = vector.multi_reduction <add>, %49, %cst_44 [0] : vector<256x8xf32> to vector<8xf32>
      %56 = vector.shape_cast %55 : vector<8xf32> to vector<1x8xf32>
      %57 = arith.addf %54, %56 : vector<1x8xf32>
      %c0_45 = arith.constant 0 : index
      %c0_46 = arith.constant 0 : index
      %58 = vector.load %arg19[%c0_45, %c0_46] : memref<1x8xf32, #tpu.memory_space<vmem>>, vector<1x8xf32>
      tpu.vector_store %arg19[%c0_45, %c0_46], %57 {strides = array<i32>} : memref<1x8xf32, #tpu.memory_space<vmem>>, vector<1x8xf32>,
    } else {
    }
    %c2_i32 = arith.constant 2 : i32
    %6 = arith.cmpi eq, %arg0, %c2_i32 : i32
    %7 = arith.extui %6 : i1 to i32
    %c0_i32_2 = arith.constant 0 : i32
    %8 = arith.cmpi ne, %7, %c0_i32_2 : i32
    scf.if %8 {
      %c0_i32_3 = arith.constant 0 : i32
      %9 = arith.cmpi eq, %arg1, %c0_i32_3 : i32
      %10 = arith.extui %9 : i1 to i32
      %c0_i32_4 = arith.constant 0 : i32
      %11 = arith.cmpi ne, %10, %c0_i32_4 : i32
      scf.if %11 {
        %c0_13 = arith.constant 0 : index
        %c0_14 = arith.constant 0 : index
        %28 = vector.load %arg19[%c0_13, %c0_14] : memref<1x8xf32, #tpu.memory_space<vmem>>, vector<1x8xf32>
        %cst_15 = arith.constant 0.001953125 : f32
        %29 = vector.broadcast %cst_15 : f32 to vector<1x8xf32>
        %30 = arith.mulf %28, %29 : vector<1x8xf32>
        %cst_16 = arith.constant 0.000000e+00 : f32
        %31 = vector.broadcast %cst_16 : f32 to vector<1x8xf32>
        %c0_17 = arith.constant 0 : index
        %c0_18 = arith.constant 0 : index
        %c0_19 = arith.constant 0 : index
        %32 = vector.load %arg15[%c0_17, %c0_18, %c0_19] : memref<2x256x8xf32, #tpu.memory_space<vmem>>, vector<1x256x8xf32>
        %33 = vector.shape_cast %32 : vector<1x256x8xf32> to vector<256x8xf32>
        %34 = vector.broadcast %30 : vector<1x8xf32> to vector<256x8xf32>
        %35 = arith.subf %33, %34 : vector<256x8xf32>
        %36 = arith.mulf %35, %35 : vector<256x8xf32>
        %cst_20 = arith.constant dense<0.000000e+00> : vector<8xf32>
        %37 = vector.multi_reduction <add>, %36, %cst_20 [0] : vector<256x8xf32> to vector<8xf32>
        %38 = vector.shape_cast %37 : vector<8xf32> to vector<1x8xf32>
        %39 = arith.addf %31, %38 : vector<1x8xf32>
        %c1 = arith.constant 1 : index
        %c0_21 = arith.constant 0 : index
        %c0_22 = arith.constant 0 : index
        %40 = vector.load %arg15[%c1, %c0_21, %c0_22] : memref<2x256x8xf32, #tpu.memory_space<vmem>>, vector<1x256x8xf32>
        %41 = vector.shape_cast %40 : vector<1x256x8xf32> to vector<256x8xf32>
        %42 = vector.broadcast %30 : vector<1x8xf32> to vector<256x8xf32>
        %43 = arith.subf %41, %42 : vector<256x8xf32>
        %44 = arith.mulf %43, %43 : vector<256x8xf32>
        %cst_23 = arith.constant dense<0.000000e+00> : vector<8xf32>
        %45 = vector.multi_reduction <add>, %44, %cst_23 [0] : vector<256x8xf32> to vector<8xf32>
        %46 = vector.shape_cast %45 : vector<8xf32> to vector<1x8xf32>
        %47 = arith.addf %39, %46 : vector<1x8xf32>
        %cst_24 = arith.constant 0.001953125 : f32
        %48 = vector.broadcast %cst_24 : f32 to vector<1x8xf32>
        %49 = arith.mulf %47, %48 : vector<1x8xf32>
        %c0_25 = arith.constant 0 : index
        %c0_26 = arith.constant 0 : index
        %50 = vector.load %arg9[%c0_25, %c0_26] : memref<1x8xf32, #tpu.memory_space<vmem>>, vector<1x8xf32>
        %cst_27 = arith.constant 9.99999974E-6 : f32
        %51 = vector.broadcast %cst_27 : f32 to vector<1x8xf32>
        %52 = arith.addf %49, %51 : vector<1x8xf32>
        %53 = math.rsqrt %52 : vector<1x8xf32>
        %54 = arith.mulf %50, %53 : vector<1x8xf32>
        %c0_28 = arith.constant 0 : index
        %c0_29 = arith.constant 0 : index
        %55 = vector.load %arg20[%c0_28, %c0_29] : memref<1x8xf32, #tpu.memory_space<vmem>>, vector<1x8xf32>
        tpu.vector_store %arg20[%c0_28, %c0_29], %54 {strides = array<i32>} : memref<1x8xf32, #tpu.memory_space<vmem>>, vector<1x8xf32>,
        %c0_30 = arith.constant 0 : index
        %c0_31 = arith.constant 0 : index
        %56 = vector.load %arg10[%c0_30, %c0_31] : memref<1x8xf32, #tpu.memory_space<vmem>>, vector<1x8xf32>
        %57 = arith.mulf %30, %54 : vector<1x8xf32>
        %58 = arith.subf %56, %57 : vector<1x8xf32>
        %c0_32 = arith.constant 0 : index
        %c0_33 = arith.constant 0 : index
        %59 = vector.load %arg21[%c0_32, %c0_33] : memref<1x8xf32, #tpu.memory_space<vmem>>, vector<1x8xf32>
        tpu.vector_store %arg21[%c0_32, %c0_33], %58 {strides = array<i32>} : memref<1x8xf32, #tpu.memory_space<vmem>>, vector<1x8xf32>,
      } else {
      }
      %12 = arith.index_cast %arg1 : i32 to index
      %c0 = arith.constant 0 : index
      %c0_5 = arith.constant 0 : index
      %13 = vector.load %arg15[%12, %c0, %c0_5] : memref<2x256x8xf32, #tpu.memory_space<vmem>>, vector<1x256x8xf32>
      %14 = vector.shape_cast %13 : vector<1x256x8xf32> to vector<256x8xf32>
      %c0_6 = arith.constant 0 : index
      %c0_7 = arith.constant 0 : index
      %15 = vector.load %arg20[%c0_6, %c0_7] : memref<1x8xf32, #tpu.memory_space<vmem>>, vector<1x8xf32>
      %16 = vector.broadcast %15 : vector<1x8xf32> to vector<256x8xf32>
      %17 = arith.mulf %14, %16 : vector<256x8xf32>
      %c0_8 = arith.constant 0 : index
      %c0_9 = arith.constant 0 : index
      %18 = vector.load %arg21[%c0_8, %c0_9] : memref<1x8xf32, #tpu.memory_space<vmem>>, vector<1x8xf32>
      %19 = vector.broadcast %18 : vector<1x8xf32> to vector<256x8xf32>
      %20 = arith.addf %17, %19 : vector<256x8xf32>
      %cst = arith.constant 0.000000e+00 : f32
      %21 = vector.broadcast %cst : f32 to vector<256x8xf32>
      %22 = arith.maximumf %20, %21 : vector<256x8xf32>
      %23 = vector.shape_cast %22 : vector<256x8xf32> to vector<16x16x8xf32>
      %24 = arith.index_cast %arg1 : i32 to index
      %c0_10 = arith.constant 0 : index
      %c0_11 = arith.constant 0 : index
      %c0_12 = arith.constant 0 : index
      %25 = vector.load %arg11[%24, %c0_10, %c0_11, %c0_12] : memref<2x16x16x8xf32, #tpu.memory_space<vmem>>, vector<1x16x16x8xf32>
      %26 = vector.shape_cast %25 : vector<1x16x16x8xf32> to vector<16x16x8xf32>
      %27 = vector.shape_cast %23 : vector<16x16x8xf32> to vector<1x16x16x8xf32>
      tpu.vector_store %arg11[%24, %c0_10, %c0_11, %c0_12], %27 {strides = array<i32>} : memref<2x16x16x8xf32, #tpu.memory_space<vmem>>, vector<1x16x16x8xf32>,
    } else {
    }
    return
  }
  func.func @transform_0(%arg0: i32, %arg1: i32) -> (i32, i32, i32, i32) {
    %c0_i32 = arith.constant 0 : i32
    %c0_i32_0 = arith.constant 0 : i32
    %c0_i32_1 = arith.constant 0 : i32
    %c0_i32_2 = arith.constant 0 : i32
    return %arg1, %c0_i32, %c0_i32_0, %c0_i32_1 : i32, i32, i32, i32
  }
  func.func @transform_1(%arg0: i32, %arg1: i32) -> (i32, i32) {
    %c0_i32 = arith.constant 0 : i32
    %c0_i32_0 = arith.constant 0 : i32
    %c0_i32_1 = arith.constant 0 : i32
    return %c0_i32, %c0_i32_0 : i32, i32
  }
  func.func @transform_2(%arg0: i32, %arg1: i32) -> (i32, i32) {
    %c0_i32 = arith.constant 0 : i32
    %c0_i32_0 = arith.constant 0 : i32
    %c0_i32_1 = arith.constant 0 : i32
    return %c0_i32, %c0_i32_0 : i32, i32
  }
  func.func @transform_3(%arg0: i32, %arg1: i32) -> (i32, i32) {
    %c0_i32 = arith.constant 0 : i32
    %c0_i32_0 = arith.constant 0 : i32
    %c0_i32_1 = arith.constant 0 : i32
    return %c0_i32, %c0_i32_0 : i32, i32
  }
  func.func @transform_4(%arg0: i32, %arg1: i32) -> (i32, i32) {
    %c0_i32 = arith.constant 0 : i32
    %c0_i32_0 = arith.constant 0 : i32
    %c0_i32_1 = arith.constant 0 : i32
    return %c0_i32, %c0_i32_0 : i32, i32
  }
  func.func @transform_5(%arg0: i32, %arg1: i32) -> (i32, i32) {
    %c0_i32 = arith.constant 0 : i32
    %c0_i32_0 = arith.constant 0 : i32
    %c0_i32_1 = arith.constant 0 : i32
    return %c0_i32, %c0_i32_0 : i32, i32
  }
  func.func @transform_6(%arg0: i32, %arg1: i32) -> (i32, i32) {
    %c0_i32 = arith.constant 0 : i32
    %c0_i32_0 = arith.constant 0 : i32
    %c0_i32_1 = arith.constant 0 : i32
    return %c0_i32, %c0_i32_0 : i32, i32
  }
  func.func @transform_7(%arg0: i32, %arg1: i32) -> (i32, i32) {
    %c0_i32 = arith.constant 0 : i32
    %c0_i32_0 = arith.constant 0 : i32
    %c0_i32_1 = arith.constant 0 : i32
    return %c0_i32, %c0_i32_0 : i32, i32
  }
  func.func @transform_8(%arg0: i32, %arg1: i32) -> (i32, i32) {
    %c0_i32 = arith.constant 0 : i32
    %c0_i32_0 = arith.constant 0 : i32
    %c0_i32_1 = arith.constant 0 : i32
    return %c0_i32, %c0_i32_0 : i32, i32
  }
  func.func @transform_9(%arg0: i32, %arg1: i32) -> (i32, i32, i32, i32) {
    %c0_i32 = arith.constant 0 : i32
    %c0_i32_0 = arith.constant 0 : i32
    %c0_i32_1 = arith.constant 0 : i32
    %c0_i32_2 = arith.constant 0 : i32
    %c0_i32_3 = arith.constant 0 : i32
    return %c0_i32, %c0_i32_0, %c0_i32_1, %c0_i32_2 : i32, i32, i32, i32
  }
}

</mosaic_0001>

<llo_original>
// kernel: tpu_custom_call.1
$region0: #{tpu_custom_call.1}
  #allocation0 [shape = 'u32[]', space=smem, size = 0x4, offset = 0x4, fixed_abs, tag = 'smem constant byte address 0x4 - core index']
  #allocation1 [shape = 'u32[144,128]{1,0:T(1,128)}', space=vmem, size = 0x12000, scoped, tag = 'internal scratch']
  #allocation2 [shape = 'f32[18,32,4]{2,1,0:T(8,128)}', space=vmem, size = 0x48000, scoped, tag = 'scratch operand']
  #allocation3 [shape = 'f32[18,32,8]{2,1,0:T(8,128)}', space=vmem, size = 0x48000, scoped, tag = 'scratch operand']
  #allocation4 [shape = 'f32[2,256,8]{2,1,0:T(8,128)}', space=vmem, size = 0x40000, scoped, tag = 'scratch operand']
  #allocation5 [shape = 'f32[2,256,8]{2,1,0:T(8,128)}', space=vmem, size = 0x40000, scoped, tag = 'scratch operand']
  #allocation6 [shape = 'f32[1,8]{1,0:T(1,128)}', space=vmem, size = 0x200, scoped, tag = 'scratch operand']
  #allocation7 [shape = 'f32[1,8]{1,0:T(1,128)}', space=vmem, size = 0x200, scoped, tag = 'scratch operand']
  #allocation8 [shape = 'f32[1,8]{1,0:T(1,128)}', space=vmem, size = 0x200, scoped, tag = 'scratch operand']
  #allocation9 [shape = 'f32[1,8]{1,0:T(1,128)}', space=vmem, size = 0x200, scoped, tag = 'scratch operand']
  #allocation10 [shape = 'f32[1,8]{1,0:T(1,128)}', space=vmem, size = 0x200, scoped, tag = 'scratch operand']
  #allocation11 [shape = 'f32[1,8]{1,0:T(1,128)}', space=vmem, size = 0x200, scoped, tag = 'scratch operand']
  %s0 = inlined_call_operand.vmem [shape: f32[2,16,16,4], index: 0, kind: input, shape index: {}]
  %s1 = inlined_call_operand.vmem [shape: bf16[36,8], index: 1, kind: input, shape index: {}]
  %s2 = inlined_call_operand.vmem [shape: f32[1,8], index: 2, kind: input, shape index: {}]
  %s3 = inlined_call_operand.vmem [shape: f32[1,8], index: 3, kind: input, shape index: {}]
  %s4 = inlined_call_operand.vmem [shape: f32[1,8], index: 4, kind: input, shape index: {}]
  %s5 = inlined_call_operand.vmem [shape: bf16[72,8], index: 5, kind: input, shape index: {}]
  %s6 = inlined_call_operand.vmem [shape: f32[1,8], index: 6, kind: input, shape index: {}]
  %s7 = inlined_call_operand.vmem [shape: f32[1,8], index: 7, kind: input, shape index: {}]
  %s8 = inlined_call_operand.vmem [shape: f32[1,8], index: 8, kind: input, shape index: {}]
  %s9 = inlined_call_operand.vmem [shape: f32[2,16,16,8], index: 9, kind: output, shape index: {}]
  %s10 = sld [smem:[#allocation0]]
  $region93: #{tpu_custom_call.1} parent=0
    _
  %s12 = ssub.s32 1, %s10
  %s13 = scalar_select 0, %s12, %s10
  loop: start=0, step=1, limit=8
  $region2: #{tpu_custom_call.1} parent=0 // loop_pre_header
    _
  $region3: #{tpu_custom_call.1} parent=0 // loop_header
    %s15 = sphi 0, %s19
    %p16 = scmp.ge.s32.totalorder %s15, 8
    %s22 = sphi 0, %s34
    %s23 = sphi 0, %s30
    %s24 = sphi 0, %s22
    %s25 = sphi 0, %s23
    %s26 = sphi 0, %s24
    %s27 = sphi 0, %s25
    %s37 = sphi 0, %s39
    %s40 = sphi 0, %s37
    %s41 = sphi 0, %s40
    %s57 = sphi 0, %s41
    %s61 = sphi 0, %s61
    %s63 = sphi 0, %s61
    %s64 = sphi 0, %s63
    %s78 = sphi 0, %s64
    %s82 = sphi 0, %s82
    %s84 = sphi 0, %s82
    %s85 = sphi 0, %s84
    %s99 = sphi 0, %s85
    %s103 = sphi 0, %s103
    %s105 = sphi 0, %s103
    %s106 = sphi 0, %s105
    %s120 = sphi 0, %s106
    %s124 = sphi 0, %s124
    %s126 = sphi 0, %s124
    %s127 = sphi 0, %s126
    %s141 = sphi 0, %s127
    %s145 = sphi 0, %s145
    %s147 = sphi 0, %s145
    %s148 = sphi 0, %s147
    %s162 = sphi 0, %s148
    %s166 = sphi 0, %s166
    %s168 = sphi 0, %s166
    %s169 = sphi 0, %s168
    %s183 = sphi 0, %s169
    %s187 = sphi 0, %s187
    %s189 = sphi 0, %s187
    %s190 = sphi 0, %s189
    %s204 = sphi 0, %s190
    %s208 = sphi 0, %s208
    %s210 = sphi 0, %s208
    %s211 = sphi 0, %s210
    %s225 = sphi 0, %s211
    %s229 = sphi 0, %s229
    %s231 = sphi 0, %s229
    %s232 = sphi 0, %s231
    %s246 = sphi 0, %s232
  $region4: #{tpu_custom_call.1} parent=0 // loop_header_branch
    %18 = sbr.rel (%p16) target = $region8
  $region5: #{tpu_custom_call.1} parent=0 // loop_body
    %s20 = ssub.s32 %s15, 1
    %s21 = ssub.s32 %s15, 2
    %s28 = sadd.s32 1, %s23
    %p29 = scmp.ge.s32.totalorder %s28, 2
    %s30 = scalar_select %p29, 0, %s28
    %s31 = sadd.s32 1, %s22
    %s32 = scalar_select %p29, %s31, %s22
    %p33 = scmp.ge.s32.totalorder %s32, 3
    %s34 = scalar_select %p33, 0, %s32
    %s35 = ssub.s32 %s23, %s30
    %p36 = scmp.eq.s32.totalorder %s35, 0
    %s38 = sadd.s32 %s37, 1
    %s39 = scalar_select %p36, %s37, %s38
    %p42 = pneg %p36
    %p43 = scmp.eq.s32.totalorder %s15, 5
    %p44 = por %p42, %p43
    %p45 = scmp.ne.s32.totalorder %s37, %s40
    %p46 = scmp.eq.s32.totalorder %s15, 0
    %p47 = por %p45, %p46
    %p48 = scmp.ne.s32.totalorder %s37, %s40
    %p49 = scmp.eq.s32.totalorder %s20, 5
    %p50 = por %p48, %p49
    %p51 = scmp.ne.s32.totalorder %s40, %s41
    %p52 = scmp.eq.s32.totalorder %s20, 0
    %p53 = por %p51, %p52
    %p54 = scmp.ne.s32.totalorder %s40, %s41
    %p55 = scmp.eq.s32.totalorder %s21, 5
    %p56 = por %p54, %p55
    %p58 = scmp.ne.s32.totalorder %s41, %s57
    %p59 = scmp.eq.s32.totalorder %s21, 0
    %p60 = por %p58, %p59
    %s62 = sadd.s32 %s61, 1
    %p65 = scmp.eq.s32.totalorder %s15, 5
    %p66 = scmp.ne.s32.totalorder %s61, %s63
    %p67 = scmp.eq.s32.totalorder %s15, 0
    %p68 = por %p66, %p67
    %p69 = scmp.ne.s32.totalorder %s61, %s63
    %p70 = scmp.eq.s32.totalorder %s20, 5
    %p71 = por %p69, %p70
    %p72 = scmp.ne.s32.totalorder %s63, %s64
    %p73 = scmp.eq.s32.totalorder %s20, 0
    %p74 = por %p72, %p73
    %p75 = scmp.ne.s32.totalorder %s63, %s64
    %p76 = scmp.eq.s32.totalorder %s21, 5
    %p77 = por %p75, %p76
    %p79 = scmp.ne.s32.totalorder %s64, %s78
    %p80 = scmp.eq.s32.totalorder %s21, 0
    %p81 = por %p79, %p80
    %s83 = sadd.s32 %s82, 1
    %p86 = scmp.eq.s32.totalorder %s15, 5
    %p87 = scmp.ne.s32.totalorder %s82, %s84
    %p88 = scmp.eq.s32.totalorder %s15, 0
    %p89 = por %p87, %p88
    %p90 = scmp.ne.s32.totalorder %s82, %s84
    %p91 = scmp.eq.s32.totalorder %s20, 5
    %p92 = por %p90, %p91
    %p93 = scmp.ne.s32.totalorder %s84, %s85
    %p94 = scmp.eq.s32.totalorder %s20, 0
    %p95 = por %p93, %p94
    %p96 = scmp.ne.s32.totalorder %s84, %s85
    %p97 = scmp.eq.s32.totalorder %s21, 5
    %p98 = por %p96, %p97
    %p100 = scmp.ne.s32.totalorder %s85, %s99
    %p101 = scmp.eq.s32.totalorder %s21, 0
    %p102 = por %p100, %p101
    %s104 = sadd.s32 %s103, 1
    %p107 = scmp.eq.s32.totalorder %s15, 5
    %p108 = scmp.ne.s32.totalorder %s103, %s105
    %p109 = scmp.eq.s32.totalorder %s15, 0
    %p110 = por %p108, %p109
    %p111 = scmp.ne.s32.totalorder %s103, %s105
    %p112 = scmp.eq.s32.totalorder %s20, 5
    %p113 = por %p111, %p112
    %p114 = scmp.ne.s32.totalorder %s105, %s106
    %p115 = scmp.eq.s32.totalorder %s20, 0
    %p116 = por %p114, %p115
    %p117 = scmp.ne.s32.totalorder %s105, %s106
    %p118 = scmp.eq.s32.totalorder %s21, 5
    %p119 = por %p117, %p118
    %p121 = scmp.ne.s32.totalorder %s106, %s120
    %p122 = scmp.eq.s32.totalorder %s21, 0
    %p123 = por %p121, %p122
    %s125 = sadd.s32 %s124, 1
    %p128 = scmp.eq.s32.totalorder %s15, 5
    %p129 = scmp.ne.s32.totalorder %s124, %s126
    %p130 = scmp.eq.s32.totalorder %s15, 0
    %p131 = por %p129, %p130
    %p132 = scmp.ne.s32.totalorder %s124, %s126
    %p133 = scmp.eq.s32.totalorder %s20, 5
    %p134 = por %p132, %p133
    %p135 = scmp.ne.s32.totalorder %s126, %s127
    %p136 = scmp.eq.s32.totalorder %s20, 0
    %p137 = por %p135, %p136
    %p138 = scmp.ne.s32.totalorder %s126, %s127
    %p139 = scmp.eq.s32.totalorder %s21, 5
    %p140 = por %p138, %p139
    %p142 = scmp.ne.s32.totalorder %s127, %s141
    %p143 = scmp.eq.s32.totalorder %s21, 0
    %p144 = por %p142, %p143
    %s146 = sadd.s32 %s145, 1
    %p149 = scmp.eq.s32.totalorder %s15, 5
    %p150 = scmp.ne.s32.totalorder %s145, %s147
    %p151 = scmp.eq.s32.totalorder %s15, 0
    %p152 = por %p150, %p151
    %p153 = scmp.ne.s32.totalorder %s145, %s147
    %p154 = scmp.eq.s32.totalorder %s20, 5
    %p155 = por %p153, %p154
    %p156 = scmp.ne.s32.totalorder %s147, %s148
    %p157 = scmp.eq.s32.totalorder %s20, 0
    %p158 = por %p156, %p157
    %p159 = scmp.ne.s32.totalorder %s147, %s148
    %p160 = scmp.eq.s32.totalorder %s21, 5
    %p161 = por %p159, %p160
    %p163 = scmp.ne.s32.totalorder %s148, %s162
    %p164 = scmp.eq.s32.totalorder %s21, 0
    %p165 = por %p163, %p164
    %s167 = sadd.s32 %s166, 1
    %p170 = scmp.eq.s32.totalorder %s15, 5
    %p171 = scmp.ne.s32.totalorder %s166, %s168
    %p172 = scmp.eq.s32.totalorder %s15, 0
    %p173 = por %p171, %p172
    %p174 = scmp.ne.s32.totalorder %s166, %s168
    %p175 = scmp.eq.s32.totalorder %s20, 5
    %p176 = por %p174, %p175
    %p177 = scmp.ne.s32.totalorder %s168, %s169
    %p178 = scmp.eq.s32.totalorder %s20, 0
    %p179 = por %p177, %p178
    %p180 = scmp.ne.s32.totalorder %s168, %s169
    %p181 = scmp.eq.s32.totalorder %s21, 5
    %p182 = por %p180, %p181
    %p184 = scmp.ne.s32.totalorder %s169, %s183
    %p185 = scmp.eq.s32.totalorder %s21, 0
    %p186 = por %p184, %p185
    %s188 = sadd.s32 %s187, 1
    %p191 = scmp.eq.s32.totalorder %s15, 5
    %p192 = scmp.ne.s32.totalorder %s187, %s189
    %p193 = scmp.eq.s32.totalorder %s15, 0
    %p194 = por %p192, %p193
    %p195 = scmp.ne.s32.totalorder %s187, %s189
    %p196 = scmp.eq.s32.totalorder %s20, 5
    %p197 = por %p195, %p196
    %p198 = scmp.ne.s32.totalorder %s189, %s190
    %p199 = scmp.eq.s32.totalorder %s20, 0
    %p200 = por %p198, %p199
    %p201 = scmp.ne.s32.totalorder %s189, %s190
    %p202 = scmp.eq.s32.totalorder %s21, 5
    %p203 = por %p201, %p202
    %p205 = scmp.ne.s32.totalorder %s190, %s204
    %p206 = scmp.eq.s32.totalorder %s21, 0
    %p207 = por %p205, %p206
    %s209 = sadd.s32 %s208, 1
    %p212 = scmp.eq.s32.totalorder %s15, 5
    %p213 = scmp.ne.s32.totalorder %s208, %s210
    %p214 = scmp.eq.s32.totalorder %s15, 0
    %p215 = por %p213, %p214
    %p216 = scmp.ne.s32.totalorder %s208, %s210
    %p217 = scmp.eq.s32.totalorder %s20, 5
    %p218 = por %p216, %p217
    %p219 = scmp.ne.s32.totalorder %s210, %s211
    %p220 = scmp.eq.s32.totalorder %s20, 0
    %p221 = por %p219, %p220
    %p222 = scmp.ne.s32.totalorder %s210, %s211
    %p223 = scmp.eq.s32.totalorder %s21, 5
    %p224 = por %p222, %p223
    %p226 = scmp.ne.s32.totalorder %s211, %s225
    %p227 = scmp.eq.s32.totalorder %s21, 0
    %p228 = por %p226, %p227
    %s230 = sadd.s32 %s229, 1
    %p233 = scmp.eq.s32.totalorder %s15, 5
    %p234 = scmp.ne.s32.totalorder %s229, %s231
    %p235 = scmp.eq.s32.totalorder %s15, 0
    %p236 = por %p234, %p235
    %p237 = scmp.ne.s32.totalorder %s229, %s231
    %p238 = scmp.eq.s32.totalorder %s20, 5
    %p239 = por %p237, %p238
    %p240 = scmp.ne.s32.totalorder %s231, %s232
    %p241 = scmp.eq.s32.totalorder %s20, 0
    %p242 = por %p240, %p241
    %p243 = scmp.ne.s32.totalorder %s231, %s232
    %p244 = scmp.eq.s32.totalorder %s21, 5
    %p245 = por %p243, %p244
    %p247 = scmp.ne.s32.totalorder %s232, %s246
    %p248 = scmp.eq.s32.totalorder %s21, 0
    %p249 = por %p247, %p248
    %p250 = scmp.le.s32.totalorder 1, %s15
    %p251 = scmp.lt.s32.totalorder %s15, 7
    %p252 = pnand %p250, %p251
    %p253 = pneg %p252
    // Predicated region
    $region9: #{tpu_custom_call.1} parent=5 // pred_check
      _
    $region10: #{tpu_custom_call.1} parent=5 // pred_check_branch
      %255 = sbr.rel (%p252) target = $region12
    $region11: #{tpu_custom_call.1} parent=5 // pred_region
      %s256 = ssub.s32 %s15, 1
      // Predicated region
      $region13: #{tpu_custom_call.1} parent=11 // pred_check
        %p257 = pneg %p74
      $region14: #{tpu_custom_call.1} parent=11 // pred_check_branch
        %259 = sbr.rel (%p257) target = $region16
      $region15: #{tpu_custom_call.1} parent=11 // pred_region
        _
      $region16: #{tpu_custom_call.1} parent=11 // pred_fallthru
        _
      // Predicated region
      $region17: #{tpu_custom_call.1} parent=11 // pred_check
        %p260 = pneg %p95
      $region18: #{tpu_custom_call.1} parent=11 // pred_check_branch
        %262 = sbr.rel (%p260) target = $region20
      $region19: #{tpu_custom_call.1} parent=11 // pred_region
        _
      $region20: #{tpu_custom_call.1} parent=11 // pred_fallthru
        _
      // Predicated region
      $region21: #{tpu_custom_call.1} parent=11 // pred_check
        %p263 = pneg %p116
      $region22: #{tpu_custom_call.1} parent=11 // pred_check_branch
        %265 = sbr.rel (%p263) target = $region24
      $region23: #{tpu_custom_call.1} parent=11 // pred_region
        _
      $region24: #{tpu_custom_call.1} parent=11 // pred_fallthru
        _
      // Predicated region
      $region25: #{tpu_custom_call.1} parent=11 // pred_check
        %p266 = pneg %p137
      $region26: #{tpu_custom_call.1} parent=11 // pred_check_branch
        %268 = sbr.rel (%p266) target = $region28
      $region27: #{tpu_custom_call.1} parent=11 // pred_region
        _
      $region28: #{tpu_custom_call.1} parent=11 // pred_fallthru
        _
      // Predicated region
      $region29: #{tpu_custom_call.1} parent=11 // pred_check
        %p269 = pneg %p158
      $region30: #{tpu_custom_call.1} parent=11 // pred_check_branch
        %271 = sbr.rel (%p269) target = $region32
      $region31: #{tpu_custom_call.1} parent=11 // pred_region
        _
      $region32: #{tpu_custom_call.1} parent=11 // pred_fallthru
        _
      // Predicated region
      $region33: #{tpu_custom_call.1} parent=11 // pred_check
        %p272 = pneg %p179
      $region34: #{tpu_custom_call.1} parent=11 // pred_check_branch
        %274 = sbr.rel (%p272) target = $region36
      $region35: #{tpu_custom_call.1} parent=11 // pred_region
        _
      $region36: #{tpu_custom_call.1} parent=11 // pred_fallthru
        _
      // Predicated region
      $region37: #{tpu_custom_call.1} parent=11 // pred_check
        %p275 = pneg %p200
      $region38: #{tpu_custom_call.1} parent=11 // pred_check_branch
        %277 = sbr.rel (%p275) target = $region40
      $region39: #{tpu_custom_call.1} parent=11 // pred_region
        _
      $region40: #{tpu_custom_call.1} parent=11 // pred_fallthru
        _
      // Predicated region
      $region41: #{tpu_custom_call.1} parent=11 // pred_check
        %p278 = pneg %p221
      $region42: #{tpu_custom_call.1} parent=11 // pred_check_branch
        %280 = sbr.rel (%p278) target = $region44
      $region43: #{tpu_custom_call.1} parent=11 // pred_region
        _
      $region44: #{tpu_custom_call.1} parent=11 // pred_fallthru
        _
    $region12: #{tpu_custom_call.1} parent=5 // pred_fallthru
      _
    %p281 = scmp.lt.s32.totalorder %s15, 6
    // Predicated region
    $region45: #{tpu_custom_call.1} parent=5 // pred_check
      %p282 = pneg %p281
    $region46: #{tpu_custom_call.1} parent=5 // pred_check_branch
      %284 = sbr.rel (%p282) target = $region48
    $region47: #{tpu_custom_call.1} parent=5 // pred_region
      // Predicated region
      $region49: #{tpu_custom_call.1} parent=47 // pred_check
        %p285 = pneg %p47
      $region50: #{tpu_custom_call.1} parent=47 // pred_check_branch
        %287 = sbr.rel (%p285) target = $region52
      $region51: #{tpu_custom_call.1} parent=47 // pred_region
        %p288 = scmp.lt.s32.totalorder %s23, 1
        %s289 = scalar_select %p288, %s23, 1
        %s290 = smul.addr %s289, 32
        %s291 = smul.addr %s290, 8
        %s292 = scalar_lea.vmem %s0, %s291
      $region52: #{tpu_custom_call.1} parent=47 // pred_fallthru
        _
    $region48: #{tpu_custom_call.1} parent=5 // pred_fallthru
      _
    %p293 = scmp.le.s32.totalorder 1, %s15
    %p294 = scmp.lt.s32.totalorder %s15, 7
    %p295 = pnand %p293, %p294
    %p296 = pneg %p295
    // Predicated region
    $region53: #{tpu_custom_call.1} parent=5 // pred_check
      _
    $region54: #{tpu_custom_call.1} parent=5 // pred_check_branch
      %298 = sbr.rel (%p295) target = $region56
    $region55: #{tpu_custom_call.1} parent=5 // pred_region
      %s299 = ssub.s32 %s15, 1
      %p300 = scmp.lt.s32.totalorder %s25, 1
      %s301 = scalar_select %p300, %s25, 1
      %s302 = smul.addr %s301, 32
      %s303 = smul.addr %s302, 8
      %s304 = scalar_lea.vmem %s0, %s303
      %p305 = pneg %p53
      %p306 = pneg %p50
      %p307 = pneg %p74
      %p308 = pneg %p71
      %p309 = pneg %p95
      %p310 = pneg %p92
      %p311 = pneg %p116
      %p312 = pneg %p113
      %p313 = pneg %p137
      %p314 = pneg %p134
      %p315 = pneg %p158
      %p316 = pneg %p155
      %p317 = pneg %p179
      %p318 = pneg %p176
      %p319 = pneg %p200
      %p320 = pneg %p197
      %p321 = pneg %p221
      %p322 = pneg %p218
      %p323 = pneg %p242
      %p324 = pneg %p239
      %p325 = scmp.lt.s32.totalorder %s25, 1
      %s326 = scalar_select %p325, %s25, 1
      %s327 = smul.addr %s326, 32
      %s328 = smul.addr %s327, 8
      %s329 = scalar_lea.vmem %s0, %s328
      %p331 = scmp.eq.s32.totalorder %s24, 0
      // Predicated region
      $region57: #{tpu_custom_call.1} parent=55 // pred_check
        %p332 = pneg %p331
      $region58: #{tpu_custom_call.1} parent=55 // pred_check_branch
        %334 = sbr.rel (%p332) target = $region60
      $region59: #{tpu_custom_call.1} parent=55 // pred_region
        %p335 = scmp.eq.s32.totalorder %s25, 0
        // Predicated region
        $region61: #{tpu_custom_call.1} parent=59 // pred_check
          %p336 = pneg %p335
        $region62: #{tpu_custom_call.1} parent=59 // pred_check_branch
          %338 = sbr.rel (%p336) target = $region64
        $region63: #{tpu_custom_call.1} parent=59 // pred_region
          %vm339 = vcmask 31744
          %340 = vst.msk [vmem:[#allocation2] sm:$0xff] %vm339, 0.0
          %341 = vst.msk [vmem:[#allocation2 + $0x8] sm:$0xff] %vm339, 0.0
          %342 = vst.msk [vmem:[#allocation2 + $0x10] sm:$0xff] %vm339, 0.0
          %343 = vst.msk [vmem:[#allocation2 + $0x18] sm:$0xff] %vm339, 0.0
          %344 = vst.msk [vmem:[#allocation2 + $0x20] sm:$0xff] %vm339, 0.0
          %345 = vst.msk [vmem:[#allocation2 + $0x28] sm:$0xff] %vm339, 0.0
          %346 = vst.msk [vmem:[#allocation2 + $0x30] sm:$0xff] %vm339, 0.0
          %347 = vst.msk [vmem:[#allocation2 + $0x38] sm:$0xff] %vm339, 0.0
          %348 = vst.msk [vmem:[#allocation2 + $0x40] sm:$0xff] %vm339, 0.0
          %349 = vst.msk [vmem:[#allocation2 + $0x48] sm:$0xff] %vm339, 0.0
          %350 = vst.msk [vmem:[#allocation2 + $0x50] sm:$0xff] %vm339, 0.0
          %351 = vst.msk [vmem:[#allocation2 + $0x58] sm:$0xff] %vm339, 0.0
          %352 = vst.msk [vmem:[#allocation2 + $0x60] sm:$0xff] %vm339, 0.0
          %353 = vst.msk [vmem:[#allocation2 + $0x68] sm:$0xff] %vm339, 0.0
          %354 = vst.msk [vmem:[#allocation2 + $0x70] sm:$0xff] %vm339, 0.0
          %355 = vst.msk [vmem:[#allocation2 + $0x78] sm:$0xff] %vm339, 0.0
          %356 = vst.msk [vmem:[#allocation2 + $0x80] sm:$0xff] %vm339, 0.0
          %357 = vst.msk [vmem:[#allocation2 + $0x88] sm:$0xff] %vm339, 0.0
          %358 = vst.msk [vmem:[#allocation2 + $0x90] sm:$0xff] %vm339, 0.0
          %359 = vst.msk [vmem:[#allocation2 + $0x98] sm:$0xff] %vm339, 0.0
          %360 = vst.msk [vmem:[#allocation2 + $0xa0] sm:$0xff] %vm339, 0.0
          %361 = vst.msk [vmem:[#allocation2 + $0xa8] sm:$0xff] %vm339, 0.0
          %362 = vst.msk [vmem:[#allocation2 + $0xb0] sm:$0xff] %vm339, 0.0
          %363 = vst.msk [vmem:[#allocation2 + $0xb8] sm:$0xff] %vm339, 0.0
          %364 = vst.msk [vmem:[#allocation2 + $0xc0] sm:$0xff] %vm339, 0.0
          %365 = vst.msk [vmem:[#allocation2 + $0xc8] sm:$0xff] %vm339, 0.0
          %366 = vst.msk [vmem:[#allocation2 + $0xd0] sm:$0xff] %vm339, 0.0
          %367 = vst.msk [vmem:[#allocation2 + $0xd8] sm:$0xff] %vm339, 0.0
          %368 = vst.msk [vmem:[#allocation2 + $0xe0] sm:$0xff] %vm339, 0.0
          %369 = vst.msk [vmem:[#allocation2 + $0xe8] sm:$0xff] %vm339, 0.0
          %370 = vst.msk [vmem:[#allocation2 + $0xf0] sm:$0xff] %vm339, 0.0
          %371 = vst.msk [vmem:[#allocation2 + $0xf8] sm:$0xff] %vm339, 0.0
          %372 = vst.msk [vmem:[#allocation2 + $0x100] sm:$0xff] %vm339, 0.0
          %373 = vst.msk [vmem:[#allocation2 + $0x108] sm:$0xff] %vm339, 0.0
          %374 = vst.msk [vmem:[#allocation2 + $0x110] sm:$0xff] %vm339, 0.0
          %375 = vst.msk [vmem:[#allocation2 + $0x118] sm:$0xff] %vm339, 0.0
          %376 = vst.msk [vmem:[#allocation2 + $0x120] sm:$0xff] %vm339, 0.0
          %377 = vst.msk [vmem:[#allocation2 + $0x128] sm:$0xff] %vm339, 0.0
          %378 = vst.msk [vmem:[#allocation2 + $0x130] sm:$0xff] %vm339, 0.0
          %379 = vst.msk [vmem:[#allocation2 + $0x138] sm:$0xff] %vm339, 0.0
          %380 = vst.msk [vmem:[#allocation2 + $0x140] sm:$0xff] %vm339, 0.0
          %381 = vst.msk [vmem:[#allocation2 + $0x148] sm:$0xff] %vm339, 0.0
          %382 = vst.msk [vmem:[#allocation2 + $0x150] sm:$0xff] %vm339, 0.0
          %383 = vst.msk [vmem:[#allocation2 + $0x158] sm:$0xff] %vm339, 0.0
          %384 = vst.msk [vmem:[#allocation2 + $0x160] sm:$0xff] %vm339, 0.0
          %385 = vst.msk [vmem:[#allocation2 + $0x168] sm:$0xff] %vm339, 0.0
          %386 = vst.msk [vmem:[#allocation2 + $0x170] sm:$0xff] %vm339, 0.0
          %387 = vst.msk [vmem:[#allocation2 + $0x178] sm:$0xff] %vm339, 0.0
          %388 = vst.msk [vmem:[#allocation2 + $0x180] sm:$0xff] %vm339, 0.0
          %389 = vst.msk [vmem:[#allocation2 + $0x188] sm:$0xff] %vm339, 0.0
          %390 = vst.msk [vmem:[#allocation2 + $0x190] sm:$0xff] %vm339, 0.0
          %391 = vst.msk [vmem:[#allocation2 + $0x198] sm:$0xff] %vm339, 0.0
          %392 = vst.msk [vmem:[#allocation2 + $0x1a0] sm:$0xff] %vm339, 0.0
          %393 = vst.msk [vmem:[#allocation2 + $0x1a8] sm:$0xff] %vm339, 0.0
          %394 = vst.msk [vmem:[#allocation2 + $0x1b0] sm:$0xff] %vm339, 0.0
          %395 = vst.msk [vmem:[#allocation2 + $0x1b8] sm:$0xff] %vm339, 0.0
          %396 = vst.msk [vmem:[#allocation2 + $0x1c0] sm:$0xff] %vm339, 0.0
          %397 = vst.msk [vmem:[#allocation2 + $0x1c8] sm:$0xff] %vm339, 0.0
          %398 = vst.msk [vmem:[#allocation2 + $0x1d0] sm:$0xff] %vm339, 0.0
          %399 = vst.msk [vmem:[#allocation2 + $0x1d8] sm:$0xff] %vm339, 0.0
          %400 = vst.msk [vmem:[#allocation2 + $0x1e0] sm:$0xff] %vm339, 0.0
          %401 = vst.msk [vmem:[#allocation2 + $0x1e8] sm:$0xff] %vm339, 0.0
          %402 = vst.msk [vmem:[#allocation2 + $0x1f0] sm:$0xff] %vm339, 0.0
          %403 = vst.msk [vmem:[#allocation2 + $0x1f8] sm:$0xff] %vm339, 0.0
          %404 = vst.msk [vmem:[#allocation2 + $0x200] sm:$0xff] %vm339, 0.0
          %405 = vst.msk [vmem:[#allocation2 + $0x208] sm:$0xff] %vm339, 0.0
          %406 = vst.msk [vmem:[#allocation2 + $0x210] sm:$0xff] %vm339, 0.0
          %407 = vst.msk [vmem:[#allocation2 + $0x218] sm:$0xff] %vm339, 0.0
          %408 = vst.msk [vmem:[#allocation2 + $0x220] sm:$0xff] %vm339, 0.0
          %409 = vst.msk [vmem:[#allocation2 + $0x228] sm:$0xff] %vm339, 0.0
          %410 = vst.msk [vmem:[#allocation2 + $0x230] sm:$0xff] %vm339, 0.0
          %411 = vst.msk [vmem:[#allocation2 + $0x238] sm:$0xff] %vm339, 0.0
          %vm412 = vcmask 64512
          %413 = vst.msk [vmem:[#allocation3] sm:$0xff] %vm412, 0.0
          %414 = vst.msk [vmem:[#allocation3 + $0x8] sm:$0xff] %vm412, 0.0
          %415 = vst.msk [vmem:[#allocation3 + $0x10] sm:$0xff] %vm412, 0.0
          %416 = vst.msk [vmem:[#allocation3 + $0x18] sm:$0xff] %vm412, 0.0
          %417 = vst.msk [vmem:[#allocation3 + $0x20] sm:$0xff] %vm412, 0.0
          %418 = vst.msk [vmem:[#allocation3 + $0x28] sm:$0xff] %vm412, 0.0
          %419 = vst.msk [vmem:[#allocation3 + $0x30] sm:$0xff] %vm412, 0.0
          %420 = vst.msk [vmem:[#allocation3 + $0x38] sm:$0xff] %vm412, 0.0
          %421 = vst.msk [vmem:[#allocation3 + $0x40] sm:$0xff] %vm412, 0.0
          %422 = vst.msk [vmem:[#allocation3 + $0x48] sm:$0xff] %vm412, 0.0
          %423 = vst.msk [vmem:[#allocation3 + $0x50] sm:$0xff] %vm412, 0.0
          %424 = vst.msk [vmem:[#allocation3 + $0x58] sm:$0xff] %vm412, 0.0
          %425 = vst.msk [vmem:[#allocation3 + $0x60] sm:$0xff] %vm412, 0.0
          %426 = vst.msk [vmem:[#allocation3 + $0x68] sm:$0xff] %vm412, 0.0
          %427 = vst.msk [vmem:[#allocation3 + $0x70] sm:$0xff] %vm412, 0.0
          %428 = vst.msk [vmem:[#allocation3 + $0x78] sm:$0xff] %vm412, 0.0
          %429 = vst.msk [vmem:[#allocation3 + $0x80] sm:$0xff] %vm412, 0.0
          %430 = vst.msk [vmem:[#allocation3 + $0x88] sm:$0xff] %vm412, 0.0
          %431 = vst.msk [vmem:[#allocation3 + $0x90] sm:$0xff] %vm412, 0.0
          %432 = vst.msk [vmem:[#allocation3 + $0x98] sm:$0xff] %vm412, 0.0
          %433 = vst.msk [vmem:[#allocation3 + $0xa0] sm:$0xff] %vm412, 0.0
          %434 = vst.msk [vmem:[#allocation3 + $0xa8] sm:$0xff] %vm412, 0.0
          %435 = vst.msk [vmem:[#allocation3 + $0xb0] sm:$0xff] %vm412, 0.0
          %436 = vst.msk [vmem:[#allocation3 + $0xb8] sm:$0xff] %vm412, 0.0
          %437 = vst.msk [vmem:[#allocation3 + $0xc0] sm:$0xff] %vm412, 0.0
          %438 = vst.msk [vmem:[#allocation3 + $0xc8] sm:$0xff] %vm412, 0.0
          %439 = vst.msk [vmem:[#allocation3 + $0xd0] sm:$0xff] %vm412, 0.0
          %440 = vst.msk [vmem:[#allocation3 + $0xd8] sm:$0xff] %vm412, 0.0
          %441 = vst.msk [vmem:[#allocation3 + $0xe0] sm:$0xff] %vm412, 0.0
          %442 = vst.msk [vmem:[#allocation3 + $0xe8] sm:$0xff] %vm412, 0.0
          %443 = vst.msk [vmem:[#allocation3 + $0xf0] sm:$0xff] %vm412, 0.0
          %444 = vst.msk [vmem:[#allocation3 + $0xf8] sm:$0xff] %vm412, 0.0
          %445 = vst.msk [vmem:[#allocation3 + $0x100] sm:$0xff] %vm412, 0.0
          %446 = vst.msk [vmem:[#allocation3 + $0x108] sm:$0xff] %vm412, 0.0
          %447 = vst.msk [vmem:[#allocation3 + $0x110] sm:$0xff] %vm412, 0.0
          %448 = vst.msk [vmem:[#allocation3 + $0x118] sm:$0xff] %vm412, 0.0
          %449 = vst.msk [vmem:[#allocation3 + $0x120] sm:$0xff] %vm412, 0.0
          %450 = vst.msk [vmem:[#allocation3 + $0x128] sm:$0xff] %vm412, 0.0
          %451 = vst.msk [vmem:[#allocation3 + $0x130] sm:$0xff] %vm412, 0.0
          %452 = vst.msk [vmem:[#allocation3 + $0x138] sm:$0xff] %vm412, 0.0
          %453 = vst.msk [vmem:[#allocation3 + $0x140] sm:$0xff] %vm412, 0.0
          %454 = vst.msk [vmem:[#allocation3 + $0x148] sm:$0xff] %vm412, 0.0
          %455 = vst.msk [vmem:[#allocation3 + $0x150] sm:$0xff] %vm412, 0.0
          %456 = vst.msk [vmem:[#allocation3 + $0x158] sm:$0xff] %vm412, 0.0
          %457 = vst.msk [vmem:[#allocation3 + $0x160] sm:$0xff] %vm412, 0.0
          %458 = vst.msk [vmem:[#allocation3 + $0x168] sm:$0xff] %vm412, 0.0
          %459 = vst.msk [vmem:[#allocation3 + $0x170] sm:$0xff] %vm412, 0.0
          %460 = vst.msk [vmem:[#allocation3 + $0x178] sm:$0xff] %vm412, 0.0
          %461 = vst.msk [vmem:[#allocation3 + $0x180] sm:$0xff] %vm412, 0.0
          %462 = vst.msk [vmem:[#allocation3 + $0x188] sm:$0xff] %vm412, 0.0
          %463 = vst.msk [vmem:[#allocation3 + $0x190] sm:$0xff] %vm412, 0.0
          %464 = vst.msk [vmem:[#allocation3 + $0x198] sm:$0xff] %vm412, 0.0
          %465 = vst.msk [vmem:[#allocation3 + $0x1a0] sm:$0xff] %vm412, 0.0
          %466 = vst.msk [vmem:[#allocation3 + $0x1a8] sm:$0xff] %vm412, 0.0
          %467 = vst.msk [vmem:[#allocation3 + $0x1b0] sm:$0xff] %vm412, 0.0
          %468 = vst.msk [vmem:[#allocation3 + $0x1b8] sm:$0xff] %vm412, 0.0
          %469 = vst.msk [vmem:[#allocation3 + $0x1c0] sm:$0xff] %vm412, 0.0
          %470 = vst.msk [vmem:[#allocation3 + $0x1c8] sm:$0xff] %vm412, 0.0
          %471 = vst.msk [vmem:[#allocation3 + $0x1d0] sm:$0xff] %vm412, 0.0
          %472 = vst.msk [vmem:[#allocation3 + $0x1d8] sm:$0xff] %vm412, 0.0
          %473 = vst.msk [vmem:[#allocation3 + $0x1e0] sm:$0xff] %vm412, 0.0
          %474 = vst.msk [vmem:[#allocation3 + $0x1e8] sm:$0xff] %vm412, 0.0
          %475 = vst.msk [vmem:[#allocation3 + $0x1f0] sm:$0xff] %vm412, 0.0
          %476 = vst.msk [vmem:[#allocation3 + $0x1f8] sm:$0xff] %vm412, 0.0
          %477 = vst.msk [vmem:[#allocation3 + $0x200] sm:$0xff] %vm412, 0.0
          %478 = vst.msk [vmem:[#allocation3 + $0x208] sm:$0xff] %vm412, 0.0
          %479 = vst.msk [vmem:[#allocation3 + $0x210] sm:$0xff] %vm412, 0.0
          %480 = vst.msk [vmem:[#allocation3 + $0x218] sm:$0xff] %vm412, 0.0
          %481 = vst.msk [vmem:[#allocation3 + $0x220] sm:$0xff] %vm412, 0.0
          %482 = vst.msk [vmem:[#allocation3 + $0x228] sm:$0xff] %vm412, 0.0
          %483 = vst.msk [vmem:[#allocation3 + $0x230] sm:$0xff] %vm412, 0.0
          %484 = vst.msk [vmem:[#allocation3 + $0x238] sm:$0xff] %vm412, 0.0
          %vm485 = vcmask 57344
          %486 = vst.msk [vmem:[#allocation6] sm:$0x1] %vm485, 0.0
          %487 = vst.msk [vmem:[#allocation9] sm:$0x1] %vm485, 0.0
        $region64: #{tpu_custom_call.1} parent=59 // pred_fallthru
          _
        %v488 = vld [vmem:[%s329] sm:$0xff]
        %v489 = vld [vmem:[%s329 + $0x8] sm:$0xff]
        %v490 = vld [vmem:[%s329 + $0x10] sm:$0xff]
        %v491 = vld [vmem:[%s329 + $0x18] sm:$0xff]
        %v492 = vld [vmem:[%s329 + $0x20] sm:$0xff]
        %v493 = vld [vmem:[%s329 + $0x28] sm:$0xff]
        %v494 = vld [vmem:[%s329 + $0x30] sm:$0xff]
        %v495 = vld [vmem:[%s329 + $0x38] sm:$0xff]
        %v496 = vld [vmem:[%s329 + $0x40] sm:$0xff]
        %v497 = vld [vmem:[%s329 + $0x48] sm:$0xff]
        %v498 = vld [vmem:[%s329 + $0x50] sm:$0xff]
        %v499 = vld [vmem:[%s329 + $0x58] sm:$0xff]
        %v500 = vld [vmem:[%s329 + $0x60] sm:$0xff]
        %v501 = vld [vmem:[%s329 + $0x68] sm:$0xff]
        %v502 = vld [vmem:[%s329 + $0x70] sm:$0xff]
        %v503 = vld [vmem:[%s329 + $0x78] sm:$0xff]
        %v504 = vld [vmem:[%s329 + $0x80] sm:$0xff]
        %v505 = vld [vmem:[%s329 + $0x88] sm:$0xff]
        %v506 = vld [vmem:[%s329 + $0x90] sm:$0xff]
        %v507 = vld [vmem:[%s329 + $0x98] sm:$0xff]
        %v508 = vld [vmem:[%s329 + $0xa0] sm:$0xff]
        %v509 = vld [vmem:[%s329 + $0xa8] sm:$0xff]
        %v510 = vld [vmem:[%s329 + $0xb0] sm:$0xff]
        %v511 = vld [vmem:[%s329 + $0xb8] sm:$0xff]
        %v512 = vld [vmem:[%s329 + $0xc0] sm:$0xff]
        %v513 = vld [vmem:[%s329 + $0xc8] sm:$0xff]
        %v514 = vld [vmem:[%s329 + $0xd0] sm:$0xff]
        %v515 = vld [vmem:[%s329 + $0xd8] sm:$0xff]
        %v516 = vld [vmem:[%s329 + $0xe0] sm:$0xff]
        %v517 = vld [vmem:[%s329 + $0xe8] sm:$0xff]
        %v518 = vld [vmem:[%s329 + $0xf0] sm:$0xff]
        %v519 = vld [vmem:[%s329 + $0xf8] sm:$0xff]
        %s520 = scalar_lea.vmem [#allocation2], 32
        %vm521 = vcmask 31744
        %522 = vst.msk [vmem:[%s520 + $0x8] sm:$0xff] %vm521, %v488
        %523 = vst.msk [vmem:[%s520 + $0x10] sm:$0xff] %vm521, %v489
        %524 = vst.msk [vmem:[%s520 + $0x28] sm:$0xff] %vm521, %v490
        %525 = vst.msk [vmem:[%s520 + $0x30] sm:$0xff] %vm521, %v491
        %526 = vst.msk [vmem:[%s520 + $0x48] sm:$0xff] %vm521, %v492
        %527 = vst.msk [vmem:[%s520 + $0x50] sm:$0xff] %vm521, %v493
        %528 = vst.msk [vmem:[%s520 + $0x68] sm:$0xff] %vm521, %v494
        %529 = vst.msk [vmem:[%s520 + $0x70] sm:$0xff] %vm521, %v495
        %530 = vst.msk [vmem:[%s520 + $0x88] sm:$0xff] %vm521, %v496
        %531 = vst.msk [vmem:[%s520 + $0x90] sm:$0xff] %vm521, %v497
        %532 = vst.msk [vmem:[%s520 + $0xa8] sm:$0xff] %vm521, %v498
        %533 = vst.msk [vmem:[%s520 + $0xb0] sm:$0xff] %vm521, %v499
        %534 = vst.msk [vmem:[%s520 + $0xc8] sm:$0xff] %vm521, %v500
        %535 = vst.msk [vmem:[%s520 + $0xd0] sm:$0xff] %vm521, %v501
        %536 = vst.msk [vmem:[%s520 + $0xe8] sm:$0xff] %vm521, %v502
        %537 = vst.msk [vmem:[%s520 + $0xf0] sm:$0xff] %vm521, %v503
        %538 = vst.msk [vmem:[%s520 + $0x108] sm:$0xff] %vm521, %v504
        %539 = vst.msk [vmem:[%s520 + $0x110] sm:$0xff] %vm521, %v505
        %540 = vst.msk [vmem:[%s520 + $0x128] sm:$0xff] %vm521, %v506
        %541 = vst.msk [vmem:[%s520 + $0x130] sm:$0xff] %vm521, %v507
        %542 = vst.msk [vmem:[%s520 + $0x148] sm:$0xff] %vm521, %v508
        %543 = vst.msk [vmem:[%s520 + $0x150] sm:$0xff] %vm521, %v509
        %544 = vst.msk [vmem:[%s520 + $0x168] sm:$0xff] %vm521, %v510
        %545 = vst.msk [vmem:[%s520 + $0x170] sm:$0xff] %vm521, %v511
        %546 = vst.msk [vmem:[%s520 + $0x188] sm:$0xff] %vm521, %v512
        %547 = vst.msk [vmem:[%s520 + $0x190] sm:$0xff] %vm521, %v513
        %548 = vst.msk [vmem:[%s520 + $0x1a8] sm:$0xff] %vm521, %v514
        %549 = vst.msk [vmem:[%s520 + $0x1b0] sm:$0xff] %vm521, %v515
        %550 = vst.msk [vmem:[%s520 + $0x1c8] sm:$0xff] %vm521, %v516
        %551 = vst.msk [vmem:[%s520 + $0x1d0] sm:$0xff] %vm521, %v517
        %552 = vst.msk [vmem:[%s520 + $0x1e8] sm:$0xff] %vm521, %v518
        %553 = vst.msk [vmem:[%s520 + $0x1f0] sm:$0xff] %vm521, %v519
        %v554 = vld [vmem:[#allocation2 + $0x7] sm:$0xff]
        %v555 = vld [vmem:[#allocation2 + $0xf] sm:$0xff]
        %v556 = vld [vmem:[#allocation2 + $0x27] sm:$0xff]
        %v557 = vld [vmem:[#allocation2 + $0x2f] sm:$0xff]
        %v558 = vld [vmem:[#allocation2 + $0x47] sm:$0xff]
        %v559 = vld [vmem:[#allocation2 + $0x4f] sm:$0xff]
        %v560 = vld [vmem:[#allocation2 + $0x67] sm:$0xff]
        %v561 = vld [vmem:[#allocation2 + $0x6f] sm:$0xff]
        %v562 = vld [vmem:[#allocation2 + $0x87] sm:$0xff]
        %v563 = vld [vmem:[#allocation2 + $0x8f] sm:$0xff]
        %v564 = vld [vmem:[#allocation2 + $0xa7] sm:$0xff]
        %v565 = vld [vmem:[#allocation2 + $0xaf] sm:$0xff]
        %v566 = vld [vmem:[#allocation2 + $0xc7] sm:$0xff]
        %v567 = vld [vmem:[#allocation2 + $0xcf] sm:$0xff]
        %v568 = vld [vmem:[#allocation2 + $0xe7] sm:$0xff]
        %v569 = vld [vmem:[#allocation2 + $0xef] sm:$0xff]
        %v570 = vld [vmem:[#allocation2 + $0x107] sm:$0xff]
        %v571 = vld [vmem:[#allocation2 + $0x10f] sm:$0xff]
        %v572 = vld [vmem:[#allocation2 + $0x127] sm:$0xff]
        %v573 = vld [vmem:[#allocation2 + $0x12f] sm:$0xff]
        %v574 = vld [vmem:[#allocation2 + $0x147] sm:$0xff]
        %v575 = vld [vmem:[#allocation2 + $0x14f] sm:$0xff]
        %v576 = vld [vmem:[#allocation2 + $0x167] sm:$0xff]
        %v577 = vld [vmem:[#allocation2 + $0x16f] sm:$0xff]
        %v578 = vld [vmem:[#allocation2 + $0x187] sm:$0xff]
        %v579 = vld [vmem:[#allocation2 + $0x18f] sm:$0xff]
        %v580 = vld [vmem:[#allocation2 + $0x1a7] sm:$0xff]
        %v581 = vld [vmem:[#allocation2 + $0x1af] sm:$0xff]
        %v582 = vld [vmem:[#allocation2 + $0x1c7] sm:$0xff]
        %v583 = vld [vmem:[#allocation2 + $0x1cf] sm:$0xff]
        %v584 = vld [vmem:[#allocation2 + $0x1e7] sm:$0xff]
        %v585 = vld [vmem:[#allocation2 + $0x1ef] sm:$0xff]
        %v586 = vld [vmem:[#allocation2 + $0x8] sm:$0xff]
        %v587 = vld [vmem:[#allocation2 + $0x10] sm:$0xff]
        %v588 = vld [vmem:[#allocation2 + $0x28] sm:$0xff]
        %v589 = vld [vmem:[#allocation2 + $0x30] sm:$0xff]
        %v590 = vld [vmem:[#allocation2 + $0x48] sm:$0xff]
        %v591 = vld [vmem:[#allocation2 + $0x50] sm:$0xff]
        %v592 = vld [vmem:[#allocation2 + $0x68] sm:$0xff]
        %v593 = vld [vmem:[#allocation2 + $0x70] sm:$0xff]
        %v594 = vld [vmem:[#allocation2 + $0x88] sm:$0xff]
        %v595 = vld [vmem:[#allocation2 + $0x90] sm:$0xff]
        %v596 = vld [vmem:[#allocation2 + $0xa8] sm:$0xff]
        %v597 = vld [vmem:[#allocation2 + $0xb0] sm:$0xff]
        %v598 = vld [vmem:[#allocation2 + $0xc8] sm:$0xff]
        %v599 = vld [vmem:[#allocation2 + $0xd0] sm:$0xff]
        %v600 = vld [vmem:[#allocation2 + $0xe8] sm:$0xff]
        %v601 = vld [vmem:[#allocation2 + $0xf0] sm:$0xff]
        %v602 = vld [vmem:[#allocation2 + $0x108] sm:$0xff]
        %v603 = vld [vmem:[#allocation2 + $0x110] sm:$0xff]
        %v604 = vld [vmem:[#allocation2 + $0x128] sm:$0xff]
        %v605 = vld [vmem:[#allocation2 + $0x130] sm:$0xff]
        %v606 = vld [vmem:[#allocation2 + $0x148] sm:$0xff]
        %v607 = vld [vmem:[#allocation2 + $0x150] sm:$0xff]
        %v608 = vld [vmem:[#allocation2 + $0x168] sm:$0xff]
        %v609 = vld [vmem:[#allocation2 + $0x170] sm:$0xff]
        %v610 = vld [vmem:[#allocation2 + $0x188] sm:$0xff]
        %v611 = vld [vmem:[#allocation2 + $0x190] sm:$0xff]
        %v612 = vld [vmem:[#allocation2 + $0x1a8] sm:$0xff]
        %v613 = vld [vmem:[#allocation2 + $0x1b0] sm:$0xff]
        %v614 = vld [vmem:[#allocation2 + $0x1c8] sm:$0xff]
        %v615 = vld [vmem:[#allocation2 + $0x1d0] sm:$0xff]
        %v616 = vld [vmem:[#allocation2 + $0x1e8] sm:$0xff]
        %v617 = vld [vmem:[#allocation2 + $0x1f0] sm:$0xff]
        %v618 = vld [vmem:[#allocation2 + $0x9] sm:$0xff]
        %v619 = vld [vmem:[#allocation2 + $0x11] sm:$0xff]
        %v620 = vld [vmem:[#allocation2 + $0x29] sm:$0xff]
        %v621 = vld [vmem:[#allocation2 + $0x31] sm:$0xff]
        %v622 = vld [vmem:[#allocation2 + $0x49] sm:$0xff]
        %v623 = vld [vmem:[#allocation2 + $0x51] sm:$0xff]
        %v624 = vld [vmem:[#allocation2 + $0x69] sm:$0xff]
        %v625 = vld [vmem:[#allocation2 + $0x71] sm:$0xff]
        %v626 = vld [vmem:[#allocation2 + $0x89] sm:$0xff]
        %v627 = vld [vmem:[#allocation2 + $0x91] sm:$0xff]
        %v628 = vld [vmem:[#allocation2 + $0xa9] sm:$0xff]
        %v629 = vld [vmem:[#allocation2 + $0xb1] sm:$0xff]
        %v630 = vld [vmem:[#allocation2 + $0xc9] sm:$0xff]
        %v631 = vld [vmem:[#allocation2 + $0xd1] sm:$0xff]
        %v632 = vld [vmem:[#allocation2 + $0xe9] sm:$0xff]
        %v633 = vld [vmem:[#allocation2 + $0xf1] sm:$0xff]
        %v634 = vld [vmem:[#allocation2 + $0x109] sm:$0xff]
        %v635 = vld [vmem:[#allocation2 + $0x111] sm:$0xff]
        %v636 = vld [vmem:[#allocation2 + $0x129] sm:$0xff]
        %v637 = vld [vmem:[#allocation2 + $0x131] sm:$0xff]
        %v638 = vld [vmem:[#allocation2 + $0x149] sm:$0xff]
        %v639 = vld [vmem:[#allocation2 + $0x151] sm:$0xff]
        %v640 = vld [vmem:[#allocation2 + $0x169] sm:$0xff]
        %v641 = vld [vmem:[#allocation2 + $0x171] sm:$0xff]
        %v642 = vld [vmem:[#allocation2 + $0x189] sm:$0xff]
        %v643 = vld [vmem:[#allocation2 + $0x191] sm:$0xff]
        %v644 = vld [vmem:[#allocation2 + $0x1a9] sm:$0xff]
        %v645 = vld [vmem:[#allocation2 + $0x1b1] sm:$0xff]
        %v646 = vld [vmem:[#allocation2 + $0x1c9] sm:$0xff]
        %v647 = vld [vmem:[#allocation2 + $0x1d1] sm:$0xff]
        %v648 = vld [vmem:[#allocation2 + $0x1e9] sm:$0xff]
        %v649 = vld [vmem:[#allocation2 + $0x1f1] sm:$0xff]
        %v650 = vld [vmem:[%s520 + $0x7] sm:$0xff]
        %v651 = vld [vmem:[%s520 + $0xf] sm:$0xff]
        %v652 = vld [vmem:[%s520 + $0x27] sm:$0xff]
        %v653 = vld [vmem:[%s520 + $0x2f] sm:$0xff]
        %v654 = vld [vmem:[%s520 + $0x47] sm:$0xff]
        %v655 = vld [vmem:[%s520 + $0x4f] sm:$0xff]
        %v656 = vld [vmem:[%s520 + $0x67] sm:$0xff]
        %v657 = vld [vmem:[%s520 + $0x6f] sm:$0xff]
        %v658 = vld [vmem:[%s520 + $0x87] sm:$0xff]
        %v659 = vld [vmem:[%s520 + $0x8f] sm:$0xff]
        %v660 = vld [vmem:[%s520 + $0xa7] sm:$0xff]
        %v661 = vld [vmem:[%s520 + $0xaf] sm:$0xff]
        %v662 = vld [vmem:[%s520 + $0xc7] sm:$0xff]
        %v663 = vld [vmem:[%s520 + $0xcf] sm:$0xff]
        %v664 = vld [vmem:[%s520 + $0xe7] sm:$0xff]
        %v665 = vld [vmem:[%s520 + $0xef] sm:$0xff]
        %v666 = vld [vmem:[%s520 + $0x107] sm:$0xff]
        %v667 = vld [vmem:[%s520 + $0x10f] sm:$0xff]
        %v668 = vld [vmem:[%s520 + $0x127] sm:$0xff]
        %v669 = vld [vmem:[%s520 + $0x12f] sm:$0xff]
        %v670 = vld [vmem:[%s520 + $0x147] sm:$0xff]
        %v671 = vld [vmem:[%s520 + $0x14f] sm:$0xff]
        %v672 = vld [vmem:[%s520 + $0x167] sm:$0xff]
        %v673 = vld [vmem:[%s520 + $0x16f] sm:$0xff]
        %v674 = vld [vmem:[%s520 + $0x187] sm:$0xff]
        %v675 = vld [vmem:[%s520 + $0x18f] sm:$0xff]
        %v676 = vld [vmem:[%s520 + $0x1a7] sm:$0xff]
        %v677 = vld [vmem:[%s520 + $0x1af] sm:$0xff]
        %v678 = vld [vmem:[%s520 + $0x1c7] sm:$0xff]
        %v679 = vld [vmem:[%s520 + $0x1cf] sm:$0xff]
        %v680 = vld [vmem:[%s520 + $0x1e7] sm:$0xff]
        %v681 = vld [vmem:[%s520 + $0x1ef] sm:$0xff]
        %v682 = vld [vmem:[%s520 + $0x8] sm:$0xff]
        %v683 = vld [vmem:[%s520 + $0x10] sm:$0xff]
        %v684 = vld [vmem:[%s520 + $0x28] sm:$0xff]
        %v685 = vld [vmem:[%s520 + $0x30] sm:$0xff]
        %v686 = vld [vmem:[%s520 + $0x48] sm:$0xff]
        %v687 = vld [vmem:[%s520 + $0x50] sm:$0xff]
        %v688 = vld [vmem:[%s520 + $0x68] sm:$0xff]
        %v689 = vld [vmem:[%s520 + $0x70] sm:$0xff]
        %v690 = vld [vmem:[%s520 + $0x88] sm:$0xff]
        %v691 = vld [vmem:[%s520 + $0x90] sm:$0xff]
        %v692 = vld [vmem:[%s520 + $0xa8] sm:$0xff]
        %v693 = vld [vmem:[%s520 + $0xb0] sm:$0xff]
        %v694 = vld [vmem:[%s520 + $0xc8] sm:$0xff]
        %v695 = vld [vmem:[%s520 + $0xd0] sm:$0xff]
        %v696 = vld [vmem:[%s520 + $0xe8] sm:$0xff]
        %v697 = vld [vmem:[%s520 + $0xf0] sm:$0xff]
        %v698 = vld [vmem:[%s520 + $0x108] sm:$0xff]
        %v699 = vld [vmem:[%s520 + $0x110] sm:$0xff]
        %v700 = vld [vmem:[%s520 + $0x128] sm:$0xff]
        %v701 = vld [vmem:[%s520 + $0x130] sm:$0xff]
        %v702 = vld [vmem:[%s520 + $0x148] sm:$0xff]
        %v703 = vld [vmem:[%s520 + $0x150] sm:$0xff]
        %v704 = vld [vmem:[%s520 + $0x168] sm:$0xff]
        %v705 = vld [vmem:[%s520 + $0x170] sm:$0xff]
        %v706 = vld [vmem:[%s520 + $0x188] sm:$0xff]
        %v707 = vld [vmem:[%s520 + $0x190] sm:$0xff]
        %v708 = vld [vmem:[%s520 + $0x1a8] sm:$0xff]
        %v709 = vld [vmem:[%s520 + $0x1b0] sm:$0xff]
        %v710 = vld [vmem:[%s520 + $0x1c8] sm:$0xff]
        %v711 = vld [vmem:[%s520 + $0x1d0] sm:$0xff]
        %v712 = vld [vmem:[%s520 + $0x1e8] sm:$0xff]
        %v713 = vld [vmem:[%s520 + $0x1f0] sm:$0xff]
        %v714 = vld [vmem:[%s520 + $0x9] sm:$0xff]
        %v715 = vld [vmem:[%s520 + $0x11] sm:$0xff]
        %v716 = vld [vmem:[%s520 + $0x29] sm:$0xff]
        %v717 = vld [vmem:[%s520 + $0x31] sm:$0xff]
        %v718 = vld [vmem:[%s520 + $0x49] sm:$0xff]
        %v719 = vld [vmem:[%s520 + $0x51] sm:$0xff]
        %v720 = vld [vmem:[%s520 + $0x69] sm:$0xff]
        %v721 = vld [vmem:[%s520 + $0x71] sm:$0xff]
        %v722 = vld [vmem:[%s520 + $0x89] sm:$0xff]
        %v723 = vld [vmem:[%s520 + $0x91] sm:$0xff]
        %v724 = vld [vmem:[%s520 + $0xa9] sm:$0xff]
        %v725 = vld [vmem:[%s520 + $0xb1] sm:$0xff]
        %v726 = vld [vmem:[%s520 + $0xc9] sm:$0xff]
        %v727 = vld [vmem:[%s520 + $0xd1] sm:$0xff]
        %v728 = vld [vmem:[%s520 + $0xe9] sm:$0xff]
        %v729 = vld [vmem:[%s520 + $0xf1] sm:$0xff]
        %v730 = vld [vmem:[%s520 + $0x109] sm:$0xff]
        %v731 = vld [vmem:[%s520 + $0x111] sm:$0xff]
        %v732 = vld [vmem:[%s520 + $0x129] sm:$0xff]
        %v733 = vld [vmem:[%s520 + $0x131] sm:$0xff]
        %v734 = vld [vmem:[%s520 + $0x149] sm:$0xff]
        %v735 = vld [vmem:[%s520 + $0x151] sm:$0xff]
        %v736 = vld [vmem:[%s520 + $0x169] sm:$0xff]
        %v737 = vld [vmem:[%s520 + $0x171] sm:$0xff]
        %v738 = vld [vmem:[%s520 + $0x189] sm:$0xff]
        %v739 = vld [vmem:[%s520 + $0x191] sm:$0xff]
        %v740 = vld [vmem:[%s520 + $0x1a9] sm:$0xff]
        %v741 = vld [vmem:[%s520 + $0x1b1] sm:$0xff]
        %v742 = vld [vmem:[%s520 + $0x1c9] sm:$0xff]
        %v743 = vld [vmem:[%s520 + $0x1d1] sm:$0xff]
        %v744 = vld [vmem:[%s520 + $0x1e9] sm:$0xff]
        %v745 = vld [vmem:[%s520 + $0x1f1] sm:$0xff]
        %s746 = scalar_lea.vmem [#allocation2], 64
        %v747 = vld [vmem:[%s746 + $0x7] sm:$0xff]
        %v748 = vld [vmem:[%s746 + $0xf] sm:$0xff]
        %v749 = vld [vmem:[%s746 + $0x27] sm:$0xff]
        %v750 = vld [vmem:[%s746 + $0x2f] sm:$0xff]
        %v751 = vld [vmem:[%s746 + $0x47] sm:$0xff]
        %v752 = vld [vmem:[%s746 + $0x4f] sm:$0xff]
        %v753 = vld [vmem:[%s746 + $0x67] sm:$0xff]
        %v754 = vld [vmem:[%s746 + $0x6f] sm:$0xff]
        %v755 = vld [vmem:[%s746 + $0x87] sm:$0xff]
        %v756 = vld [vmem:[%s746 + $0x8f] sm:$0xff]
        %v757 = vld [vmem:[%s746 + $0xa7] sm:$0xff]
        %v758 = vld [vmem:[%s746 + $0xaf] sm:$0xff]
        %v759 = vld [vmem:[%s746 + $0xc7] sm:$0xff]
        %v760 = vld [vmem:[%s746 + $0xcf] sm:$0xff]
        %v761 = vld [vmem:[%s746 + $0xe7] sm:$0xff]
        %v762 = vld [vmem:[%s746 + $0xef] sm:$0xff]
        %v763 = vld [vmem:[%s746 + $0x107] sm:$0xff]
        %v764 = vld [vmem:[%s746 + $0x10f] sm:$0xff]
        %v765 = vld [vmem:[%s746 + $0x127] sm:$0xff]
        %v766 = vld [vmem:[%s746 + $0x12f] sm:$0xff]
        %v767 = vld [vmem:[%s746 + $0x147] sm:$0xff]
        %v768 = vld [vmem:[%s746 + $0x14f] sm:$0xff]
        %v769 = vld [vmem:[%s746 + $0x167] sm:$0xff]
        %v770 = vld [vmem:[%s746 + $0x16f] sm:$0xff]
        %v771 = vld [vmem:[%s746 + $0x187] sm:$0xff]
        %v772 = vld [vmem:[%s746 + $0x18f] sm:$0xff]
        %v773 = vld [vmem:[%s746 + $0x1a7] sm:$0xff]
        %v774 = vld [vmem:[%s746 + $0x1af] sm:$0xff]
        %v775 = vld [vmem:[%s746 + $0x1c7] sm:$0xff]
        %v776 = vld [vmem:[%s746 + $0x1cf] sm:$0xff]
        %v777 = vld [vmem:[%s746 + $0x1e7] sm:$0xff]
        %v778 = vld [vmem:[%s746 + $0x1ef] sm:$0xff]
        %v779 = vld [vmem:[%s746 + $0x8] sm:$0xff]
        %v780 = vld [vmem:[%s746 + $0x10] sm:$0xff]
        %v781 = vld [vmem:[%s746 + $0x28] sm:$0xff]
        %v782 = vld [vmem:[%s746 + $0x30] sm:$0xff]
        %v783 = vld [vmem:[%s746 + $0x48] sm:$0xff]
        %v784 = vld [vmem:[%s746 + $0x50] sm:$0xff]
        %v785 = vld [vmem:[%s746 + $0x68] sm:$0xff]
        %v786 = vld [vmem:[%s746 + $0x70] sm:$0xff]
        %v787 = vld [vmem:[%s746 + $0x88] sm:$0xff]
        %v788 = vld [vmem:[%s746 + $0x90] sm:$0xff]
        %v789 = vld [vmem:[%s746 + $0xa8] sm:$0xff]
        %v790 = vld [vmem:[%s746 + $0xb0] sm:$0xff]
        %v791 = vld [vmem:[%s746 + $0xc8] sm:$0xff]
        %v792 = vld [vmem:[%s746 + $0xd0] sm:$0xff]
        %v793 = vld [vmem:[%s746 + $0xe8] sm:$0xff]
        %v794 = vld [vmem:[%s746 + $0xf0] sm:$0xff]
        %v795 = vld [vmem:[%s746 + $0x108] sm:$0xff]
        %v796 = vld [vmem:[%s746 + $0x110] sm:$0xff]
        %v797 = vld [vmem:[%s746 + $0x128] sm:$0xff]
        %v798 = vld [vmem:[%s746 + $0x130] sm:$0xff]
        %v799 = vld [vmem:[%s746 + $0x148] sm:$0xff]
        %v800 = vld [vmem:[%s746 + $0x150] sm:$0xff]
        %v801 = vld [vmem:[%s746 + $0x168] sm:$0xff]
        %v802 = vld [vmem:[%s746 + $0x170] sm:$0xff]
        %v803 = vld [vmem:[%s746 + $0x188] sm:$0xff]
        %v804 = vld [vmem:[%s746 + $0x190] sm:$0xff]
        %v805 = vld [vmem:[%s746 + $0x1a8] sm:$0xff]
        %v806 = vld [vmem:[%s746 + $0x1b0] sm:$0xff]
        %v807 = vld [vmem:[%s746 + $0x1c8] sm:$0xff]
        %v808 = vld [vmem:[%s746 + $0x1d0] sm:$0xff]
        %v809 = vld [vmem:[%s746 + $0x1e8] sm:$0xff]
        %v810 = vld [vmem:[%s746 + $0x1f0] sm:$0xff]
        %v811 = vld [vmem:[%s746 + $0x9] sm:$0xff]
        %v812 = vld [vmem:[%s746 + $0x11] sm:$0xff]
        %v813 = vld [vmem:[%s746 + $0x29] sm:$0xff]
        %v814 = vld [vmem:[%s746 + $0x31] sm:$0xff]
        %v815 = vld [vmem:[%s746 + $0x49] sm:$0xff]
        %v816 = vld [vmem:[%s746 + $0x51] sm:$0xff]
        %v817 = vld [vmem:[%s746 + $0x69] sm:$0xff]
        %v818 = vld [vmem:[%s746 + $0x71] sm:$0xff]
        %v819 = vld [vmem:[%s746 + $0x89] sm:$0xff]
        %v820 = vld [vmem:[%s746 + $0x91] sm:$0xff]
        %v821 = vld [vmem:[%s746 + $0xa9] sm:$0xff]
        %v822 = vld [vmem:[%s746 + $0xb1] sm:$0xff]
        %v823 = vld [vmem:[%s746 + $0xc9] sm:$0xff]
        %v824 = vld [vmem:[%s746 + $0xd1] sm:$0xff]
        %v825 = vld [vmem:[%s746 + $0xe9] sm:$0xff]
        %v826 = vld [vmem:[%s746 + $0xf1] sm:$0xff]
        %v827 = vld [vmem:[%s746 + $0x109] sm:$0xff]
        %v828 = vld [vmem:[%s746 + $0x111] sm:$0xff]
        %v829 = vld [vmem:[%s746 + $0x129] sm:$0xff]
        %v830 = vld [vmem:[%s746 + $0x131] sm:$0xff]
        %v831 = vld [vmem:[%s746 + $0x149] sm:$0xff]
        %v832 = vld [vmem:[%s746 + $0x151] sm:$0xff]
        %v833 = vld [vmem:[%s746 + $0x169] sm:$0xff]
        %v834 = vld [vmem:[%s746 + $0x171] sm:$0xff]
        %v835 = vld [vmem:[%s746 + $0x189] sm:$0xff]
        %v836 = vld [vmem:[%s746 + $0x191] sm:$0xff]
        %v837 = vld [vmem:[%s746 + $0x1a9] sm:$0xff]
        %v838 = vld [vmem:[%s746 + $0x1b1] sm:$0xff]
        %v839 = vld [vmem:[%s746 + $0x1c9] sm:$0xff]
        %v840 = vld [vmem:[%s746 + $0x1d1] sm:$0xff]
        %v841 = vld [vmem:[%s746 + $0x1e9] sm:$0xff]
        %v842 = vld [vmem:[%s746 + $0x1f1] sm:$0xff]
        %875 = vrot.lane.b32.xlu0 %v586, 4
        %v876 = vpop.permute.xlu0 %875
        %877 = vrot.lane.b32.xlu0 %v587, 4
        %v878 = vpop.permute.xlu0 %877
        %879 = vrot.lane.b32.xlu0 %v588, 4
        %v880 = vpop.permute.xlu0 %879
        %881 = vrot.lane.b32.xlu0 %v589, 4
        %v882 = vpop.permute.xlu0 %881
        %883 = vrot.lane.b32.xlu0 %v590, 4
        %v884 = vpop.permute.xlu0 %883
        %885 = vrot.lane.b32.xlu0 %v591, 4
        %v886 = vpop.permute.xlu0 %885
        %887 = vrot.lane.b32.xlu0 %v592, 4
        %v888 = vpop.permute.xlu0 %887
        %889 = vrot.lane.b32.xlu0 %v593, 4
        %v890 = vpop.permute.xlu0 %889
        %891 = vrot.lane.b32.xlu0 %v594, 4
        %v892 = vpop.permute.xlu0 %891
        %893 = vrot.lane.b32.xlu0 %v595, 4
        %v894 = vpop.permute.xlu0 %893
        %895 = vrot.lane.b32.xlu0 %v596, 4
        %v896 = vpop.permute.xlu0 %895
        %897 = vrot.lane.b32.xlu0 %v597, 4
        %v898 = vpop.permute.xlu0 %897
        %899 = vrot.lane.b32.xlu0 %v598, 4
        %v900 = vpop.permute.xlu0 %899
        %901 = vrot.lane.b32.xlu0 %v599, 4
        %v902 = vpop.permute.xlu0 %901
        %903 = vrot.lane.b32.xlu0 %v600, 4
        %v904 = vpop.permute.xlu0 %903
        %905 = vrot.lane.b32.xlu0 %v601, 4
        %v906 = vpop.permute.xlu0 %905
        %907 = vrot.lane.b32.xlu0 %v602, 4
        %v908 = vpop.permute.xlu0 %907
        %909 = vrot.lane.b32.xlu0 %v603, 4
        %v910 = vpop.permute.xlu0 %909
        %911 = vrot.lane.b32.xlu0 %v604, 4
        %v912 = vpop.permute.xlu0 %911
        %913 = vrot.lane.b32.xlu0 %v605, 4
        %v914 = vpop.permute.xlu0 %913
        %915 = vrot.lane.b32.xlu0 %v606, 4
        %v916 = vpop.permute.xlu0 %915
        %917 = vrot.lane.b32.xlu0 %v607, 4
        %v918 = vpop.permute.xlu0 %917
        %919 = vrot.lane.b32.xlu0 %v608, 4
        %v920 = vpop.permute.xlu0 %919
        %921 = vrot.lane.b32.xlu0 %v609, 4
        %v922 = vpop.permute.xlu0 %921
        %923 = vrot.lane.b32.xlu0 %v610, 4
        %v924 = vpop.permute.xlu0 %923
        %925 = vrot.lane.b32.xlu0 %v611, 4
        %v926 = vpop.permute.xlu0 %925
        %927 = vrot.lane.b32.xlu0 %v612, 4
        %v928 = vpop.permute.xlu0 %927
        %929 = vrot.lane.b32.xlu0 %v613, 4
        %v930 = vpop.permute.xlu0 %929
        %931 = vrot.lane.b32.xlu0 %v614, 4
        %v932 = vpop.permute.xlu0 %931
        %933 = vrot.lane.b32.xlu0 %v615, 4
        %v934 = vpop.permute.xlu0 %933
        %935 = vrot.lane.b32.xlu0 %v616, 4
        %v936 = vpop.permute.xlu0 %935
        %937 = vrot.lane.b32.xlu0 %v617, 4
        %v938 = vpop.permute.xlu0 %937
        %1003 = vrot.lane.b32.xlu0 %v618, 8
        %v1004 = vpop.permute.xlu0 %1003
        %1005 = vrot.lane.b32.xlu0 %v619, 8
        %v1006 = vpop.permute.xlu0 %1005
        %1007 = vrot.lane.b32.xlu0 %v620, 8
        %v1008 = vpop.permute.xlu0 %1007
        %1009 = vrot.lane.b32.xlu0 %v621, 8
        %v1010 = vpop.permute.xlu0 %1009
        %1011 = vrot.lane.b32.xlu0 %v622, 8
        %v1012 = vpop.permute.xlu0 %1011
        %1013 = vrot.lane.b32.xlu0 %v623, 8
        %v1014 = vpop.permute.xlu0 %1013
        %1015 = vrot.lane.b32.xlu0 %v624, 8
        %v1016 = vpop.permute.xlu0 %1015
        %1017 = vrot.lane.b32.xlu0 %v625, 8
        %v1018 = vpop.permute.xlu0 %1017
        %1019 = vrot.lane.b32.xlu0 %v626, 8
        %v1020 = vpop.permute.xlu0 %1019
        %1021 = vrot.lane.b32.xlu0 %v627, 8
        %v1022 = vpop.permute.xlu0 %1021
        %1023 = vrot.lane.b32.xlu0 %v628, 8
        %v1024 = vpop.permute.xlu0 %1023
        %1025 = vrot.lane.b32.xlu0 %v629, 8
        %v1026 = vpop.permute.xlu0 %1025
        %1027 = vrot.lane.b32.xlu0 %v630, 8
        %v1028 = vpop.permute.xlu0 %1027
        %1029 = vrot.lane.b32.xlu0 %v631, 8
        %v1030 = vpop.permute.xlu0 %1029
        %1031 = vrot.lane.b32.xlu0 %v632, 8
        %v1032 = vpop.permute.xlu0 %1031
        %1033 = vrot.lane.b32.xlu0 %v633, 8
        %v1034 = vpop.permute.xlu0 %1033
        %1035 = vrot.lane.b32.xlu0 %v634, 8
        %v1036 = vpop.permute.xlu0 %1035
        %1037 = vrot.lane.b32.xlu0 %v635, 8
        %v1038 = vpop.permute.xlu0 %1037
        %1039 = vrot.lane.b32.xlu0 %v636, 8
        %v1040 = vpop.permute.xlu0 %1039
        %1041 = vrot.lane.b32.xlu0 %v637, 8
        %v1042 = vpop.permute.xlu0 %1041
        %1043 = vrot.lane.b32.xlu0 %v638, 8
        %v1044 = vpop.permute.xlu0 %1043
        %1045 = vrot.lane.b32.xlu0 %v639, 8
        %v1046 = vpop.permute.xlu0 %1045
        %1047 = vrot.lane.b32.xlu0 %v640, 8
        %v1048 = vpop.permute.xlu0 %1047
        %1049 = vrot.lane.b32.xlu0 %v641, 8
        %v1050 = vpop.permute.xlu0 %1049
        %1051 = vrot.lane.b32.xlu0 %v642, 8
        %v1052 = vpop.permute.xlu0 %1051
        %1053 = vrot.lane.b32.xlu0 %v643, 8
        %v1054 = vpop.permute.xlu0 %1053
        %1055 = vrot.lane.b32.xlu0 %v644, 8
        %v1056 = vpop.permute.xlu0 %1055
        %1057 = vrot.lane.b32.xlu0 %v645, 8
        %v1058 = vpop.permute.xlu0 %1057
        %1059 = vrot.lane.b32.xlu0 %v646, 8
        %v1060 = vpop.permute.xlu0 %1059
        %1061 = vrot.lane.b32.xlu0 %v647, 8
        %v1062 = vpop.permute.xlu0 %1061
        %1063 = vrot.lane.b32.xlu0 %v648, 8
        %v1064 = vpop.permute.xlu0 %1063
        %1065 = vrot.lane.b32.xlu0 %v649, 8
        %v1066 = vpop.permute.xlu0 %1065
        %1131 = vrot.lane.b32.xlu0 %v650, 12
        %v1132 = vpop.permute.xlu0 %1131
        %1133 = vrot.lane.b32.xlu0 %v651, 12
        %v1134 = vpop.permute.xlu0 %1133
        %1135 = vrot.lane.b32.xlu0 %v652, 12
        %v1136 = vpop.permute.xlu0 %1135
        %1137 = vrot.lane.b32.xlu0 %v653, 12
        %v1138 = vpop.permute.xlu0 %1137
        %1139 = vrot.lane.b32.xlu0 %v654, 12
        %v1140 = vpop.permute.xlu0 %1139
        %1141 = vrot.lane.b32.xlu0 %v655, 12
        %v1142 = vpop.permute.xlu0 %1141
        %1143 = vrot.lane.b32.xlu0 %v656, 12
        %v1144 = vpop.permute.xlu0 %1143
        %1145 = vrot.lane.b32.xlu0 %v657, 12
        %v1146 = vpop.permute.xlu0 %1145
        %1147 = vrot.lane.b32.xlu0 %v658, 12
        %v1148 = vpop.permute.xlu0 %1147
        %1149 = vrot.lane.b32.xlu0 %v659, 12
        %v1150 = vpop.permute.xlu0 %1149
        %1151 = vrot.lane.b32.xlu0 %v660, 12
        %v1152 = vpop.permute.xlu0 %1151
        %1153 = vrot.lane.b32.xlu0 %v661, 12
        %v1154 = vpop.permute.xlu0 %1153
        %1155 = vrot.lane.b32.xlu0 %v662, 12
        %v1156 = vpop.permute.xlu0 %1155
        %1157 = vrot.lane.b32.xlu0 %v663, 12
        %v1158 = vpop.permute.xlu0 %1157
        %1159 = vrot.lane.b32.xlu0 %v664, 12
        %v1160 = vpop.permute.xlu0 %1159
        %1161 = vrot.lane.b32.xlu0 %v665, 12
        %v1162 = vpop.permute.xlu0 %1161
        %1163 = vrot.lane.b32.xlu0 %v666, 12
        %v1164 = vpop.permute.xlu0 %1163
        %1165 = vrot.lane.b32.xlu0 %v667, 12
        %v1166 = vpop.permute.xlu0 %1165
        %1167 = vrot.lane.b32.xlu0 %v668, 12
        %v1168 = vpop.permute.xlu0 %1167
        %1169 = vrot.lane.b32.xlu0 %v669, 12
        %v1170 = vpop.permute.xlu0 %1169
        %1171 = vrot.lane.b32.xlu0 %v670, 12
        %v1172 = vpop.permute.xlu0 %1171
        %1173 = vrot.lane.b32.xlu0 %v671, 12
        %v1174 = vpop.permute.xlu0 %1173
        %1175 = vrot.lane.b32.xlu0 %v672, 12
        %v1176 = vpop.permute.xlu0 %1175
        %1177 = vrot.lane.b32.xlu0 %v673, 12
        %v1178 = vpop.permute.xlu0 %1177
        %1179 = vrot.lane.b32.xlu0 %v674, 12
        %v1180 = vpop.permute.xlu0 %1179
        %1181 = vrot.lane.b32.xlu0 %v675, 12
        %v1182 = vpop.permute.xlu0 %1181
        %1183 = vrot.lane.b32.xlu0 %v676, 12
        %v1184 = vpop.permute.xlu0 %1183
        %1185 = vrot.lane.b32.xlu0 %v677, 12
        %v1186 = vpop.permute.xlu0 %1185
        %1187 = vrot.lane.b32.xlu0 %v678, 12
        %v1188 = vpop.permute.xlu0 %1187
        %1189 = vrot.lane.b32.xlu0 %v679, 12
        %v1190 = vpop.permute.xlu0 %1189
        %1191 = vrot.lane.b32.xlu0 %v680, 12
        %v1192 = vpop.permute.xlu0 %1191
        %1193 = vrot.lane.b32.xlu0 %v681, 12
        %v1194 = vpop.permute.xlu0 %1193
        %1259 = vrot.lane.b32.xlu0 %v682, 16
        %v1260 = vpop.permute.xlu0 %1259
        %1261 = vrot.lane.b32.xlu0 %v683, 16
        %v1262 = vpop.permute.xlu0 %1261
        %1263 = vrot.lane.b32.xlu0 %v684, 16
        %v1264 = vpop.permute.xlu0 %1263
        %1265 = vrot.lane.b32.xlu0 %v685, 16
        %v1266 = vpop.permute.xlu0 %1265
        %1267 = vrot.lane.b32.xlu0 %v686, 16
        %v1268 = vpop.permute.xlu0 %1267
        %1269 = vrot.lane.b32.xlu0 %v687, 16
        %v1270 = vpop.permute.xlu0 %1269
        %1271 = vrot.lane.b32.xlu0 %v688, 16
        %v1272 = vpop.permute.xlu0 %1271
        %1273 = vrot.lane.b32.xlu0 %v689, 16
        %v1274 = vpop.permute.xlu0 %1273
        %1275 = vrot.lane.b32.xlu0 %v690, 16
        %v1276 = vpop.permute.xlu0 %1275
        %1277 = vrot.lane.b32.xlu0 %v691, 16
        %v1278 = vpop.permute.xlu0 %1277
        %1279 = vrot.lane.b32.xlu0 %v692, 16
        %v1280 = vpop.permute.xlu0 %1279
        %1281 = vrot.lane.b32.xlu0 %v693, 16
        %v1282 = vpop.permute.xlu0 %1281
        %1283 = vrot.lane.b32.xlu0 %v694, 16
        %v1284 = vpop.permute.xlu0 %1283
        %1285 = vrot.lane.b32.xlu0 %v695, 16
        %v1286 = vpop.permute.xlu0 %1285
        %1287 = vrot.lane.b32.xlu0 %v696, 16
        %v1288 = vpop.permute.xlu0 %1287
        %1289 = vrot.lane.b32.xlu0 %v697, 16
        %v1290 = vpop.permute.xlu0 %1289
        %1291 = vrot.lane.b32.xlu0 %v698, 16
        %v1292 = vpop.permute.xlu0 %1291
        %1293 = vrot.lane.b32.xlu0 %v699, 16
        %v1294 = vpop.permute.xlu0 %1293
        %1295 = vrot.lane.b32.xlu0 %v700, 16
        %v1296 = vpop.permute.xlu0 %1295
        %1297 = vrot.lane.b32.xlu0 %v701, 16
        %v1298 = vpop.permute.xlu0 %1297
        %1299 = vrot.lane.b32.xlu0 %v702, 16
        %v1300 = vpop.permute.xlu0 %1299
        %1301 = vrot.lane.b32.xlu0 %v703, 16
        %v1302 = vpop.permute.xlu0 %1301
        %1303 = vrot.lane.b32.xlu0 %v704, 16
        %v1304 = vpop.permute.xlu0 %1303
        %1305 = vrot.lane.b32.xlu0 %v705, 16
        %v1306 = vpop.permute.xlu0 %1305
        %1307 = vrot.lane.b32.xlu0 %v706, 16
        %v1308 = vpop.permute.xlu0 %1307
        %1309 = vrot.lane.b32.xlu0 %v707, 16
        %v1310 = vpop.permute.xlu0 %1309
        %1311 = vrot.lane.b32.xlu0 %v708, 16
        %v1312 = vpop.permute.xlu0 %1311
        %1313 = vrot.lane.b32.xlu0 %v709, 16
        %v1314 = vpop.permute.xlu0 %1313
        %1315 = vrot.lane.b32.xlu0 %v710, 16
        %v1316 = vpop.permute.xlu0 %1315
        %1317 = vrot.lane.b32.xlu0 %v711, 16
        %v1318 = vpop.permute.xlu0 %1317
        %1319 = vrot.lane.b32.xlu0 %v712, 16
        %v1320 = vpop.permute.xlu0 %1319
        %1321 = vrot.lane.b32.xlu0 %v713, 16
        %v1322 = vpop.permute.xlu0 %1321
        %1387 = vrot.lane.b32.xlu0 %v714, 20
        %v1388 = vpop.permute.xlu0 %1387
        %1389 = vrot.lane.b32.xlu0 %v715, 20
        %v1390 = vpop.permute.xlu0 %1389
        %1391 = vrot.lane.b32.xlu0 %v716, 20
        %v1392 = vpop.permute.xlu0 %1391
        %1393 = vrot.lane.b32.xlu0 %v717, 20
        %v1394 = vpop.permute.xlu0 %1393
        %1395 = vrot.lane.b32.xlu0 %v718, 20
        %v1396 = vpop.permute.xlu0 %1395
        %1397 = vrot.lane.b32.xlu0 %v719, 20
        %v1398 = vpop.permute.xlu0 %1397
        %1399 = vrot.lane.b32.xlu0 %v720, 20
        %v1400 = vpop.permute.xlu0 %1399
        %1401 = vrot.lane.b32.xlu0 %v721, 20
        %v1402 = vpop.permute.xlu0 %1401
        %1403 = vrot.lane.b32.xlu0 %v722, 20
        %v1404 = vpop.permute.xlu0 %1403
        %1405 = vrot.lane.b32.xlu0 %v723, 20
        %v1406 = vpop.permute.xlu0 %1405
        %1407 = vrot.lane.b32.xlu0 %v724, 20
        %v1408 = vpop.permute.xlu0 %1407
        %1409 = vrot.lane.b32.xlu0 %v725, 20
        %v1410 = vpop.permute.xlu0 %1409
        %1411 = vrot.lane.b32.xlu0 %v726, 20
        %v1412 = vpop.permute.xlu0 %1411
        %1413 = vrot.lane.b32.xlu0 %v727, 20
        %v1414 = vpop.permute.xlu0 %1413
        %1415 = vrot.lane.b32.xlu0 %v728, 20
        %v1416 = vpop.permute.xlu0 %1415
        %1417 = vrot.lane.b32.xlu0 %v729, 20
        %v1418 = vpop.permute.xlu0 %1417
        %1419 = vrot.lane.b32.xlu0 %v730, 20
        %v1420 = vpop.permute.xlu0 %1419
        %1421 = vrot.lane.b32.xlu0 %v731, 20
        %v1422 = vpop.permute.xlu0 %1421
        %1423 = vrot.lane.b32.xlu0 %v732, 20
        %v1424 = vpop.permute.xlu0 %1423
        %1425 = vrot.lane.b32.xlu0 %v733, 20
        %v1426 = vpop.permute.xlu0 %1425
        %1427 = vrot.lane.b32.xlu0 %v734, 20
        %v1428 = vpop.permute.xlu0 %1427
        %1429 = vrot.lane.b32.xlu0 %v735, 20
        %v1430 = vpop.permute.xlu0 %1429
        %1431 = vrot.lane.b32.xlu0 %v736, 20
        %v1432 = vpop.permute.xlu0 %1431
        %1433 = vrot.lane.b32.xlu0 %v737, 20
        %v1434 = vpop.permute.xlu0 %1433
        %1435 = vrot.lane.b32.xlu0 %v738, 20
        %v1436 = vpop.permute.xlu0 %1435
        %1437 = vrot.lane.b32.xlu0 %v739, 20
        %v1438 = vpop.permute.xlu0 %1437
        %1439 = vrot.lane.b32.xlu0 %v740, 20
        %v1440 = vpop.permute.xlu0 %1439
        %1441 = vrot.lane.b32.xlu0 %v741, 20
        %v1442 = vpop.permute.xlu0 %1441
        %1443 = vrot.lane.b32.xlu0 %v742, 20
        %v1444 = vpop.permute.xlu0 %1443
        %1445 = vrot.lane.b32.xlu0 %v743, 20
        %v1446 = vpop.permute.xlu0 %1445
        %1447 = vrot.lane.b32.xlu0 %v744, 20
        %v1448 = vpop.permute.xlu0 %1447
        %1449 = vrot.lane.b32.xlu0 %v745, 20
        %v1450 = vpop.permute.xlu0 %1449
        %1515 = vrot.lane.b32.xlu0 %v747, 24
        %v1516 = vpop.permute.xlu0 %1515
        %1517 = vrot.lane.b32.xlu0 %v748, 24
        %v1518 = vpop.permute.xlu0 %1517
        %1519 = vrot.lane.b32.xlu0 %v749, 24
        %v1520 = vpop.permute.xlu0 %1519
        %1521 = vrot.lane.b32.xlu0 %v750, 24
        %v1522 = vpop.permute.xlu0 %1521
        %1523 = vrot.lane.b32.xlu0 %v751, 24
        %v1524 = vpop.permute.xlu0 %1523
        %1525 = vrot.lane.b32.xlu0 %v752, 24
        %v1526 = vpop.permute.xlu0 %1525
        %1527 = vrot.lane.b32.xlu0 %v753, 24
        %v1528 = vpop.permute.xlu0 %1527
        %1529 = vrot.lane.b32.xlu0 %v754, 24
        %v1530 = vpop.permute.xlu0 %1529
        %1531 = vrot.lane.b32.xlu0 %v755, 24
        %v1532 = vpop.permute.xlu0 %1531
        %1533 = vrot.lane.b32.xlu0 %v756, 24
        %v1534 = vpop.permute.xlu0 %1533
        %1535 = vrot.lane.b32.xlu0 %v757, 24
        %v1536 = vpop.permute.xlu0 %1535
        %1537 = vrot.lane.b32.xlu0 %v758, 24
        %v1538 = vpop.permute.xlu0 %1537
        %1539 = vrot.lane.b32.xlu0 %v759, 24
        %v1540 = vpop.permute.xlu0 %1539
        %1541 = vrot.lane.b32.xlu0 %v760, 24
        %v1542 = vpop.permute.xlu0 %1541
        %1543 = vrot.lane.b32.xlu0 %v761, 24
        %v1544 = vpop.permute.xlu0 %1543
        %1545 = vrot.lane.b32.xlu0 %v762, 24
        %v1546 = vpop.permute.xlu0 %1545
        %1547 = vrot.lane.b32.xlu0 %v763, 24
        %v1548 = vpop.permute.xlu0 %1547
        %1549 = vrot.lane.b32.xlu0 %v764, 24
        %v1550 = vpop.permute.xlu0 %1549
        %1551 = vrot.lane.b32.xlu0 %v765, 24
        %v1552 = vpop.permute.xlu0 %1551
        %1553 = vrot.lane.b32.xlu0 %v766, 24
        %v1554 = vpop.permute.xlu0 %1553
        %1555 = vrot.lane.b32.xlu0 %v767, 24
        %v1556 = vpop.permute.xlu0 %1555
        %1557 = vrot.lane.b32.xlu0 %v768, 24
        %v1558 = vpop.permute.xlu0 %1557
        %1559 = vrot.lane.b32.xlu0 %v769, 24
        %v1560 = vpop.permute.xlu0 %1559
        %1561 = vrot.lane.b32.xlu0 %v770, 24
        %v1562 = vpop.permute.xlu0 %1561
        %1563 = vrot.lane.b32.xlu0 %v771, 24
        %v1564 = vpop.permute.xlu0 %1563
        %1565 = vrot.lane.b32.xlu0 %v772, 24
        %v1566 = vpop.permute.xlu0 %1565
        %1567 = vrot.lane.b32.xlu0 %v773, 24
        %v1568 = vpop.permute.xlu0 %1567
        %1569 = vrot.lane.b32.xlu0 %v774, 24
        %v1570 = vpop.permute.xlu0 %1569
        %1571 = vrot.lane.b32.xlu0 %v775, 24
        %v1572 = vpop.permute.xlu0 %1571
        %1573 = vrot.lane.b32.xlu0 %v776, 24
        %v1574 = vpop.permute.xlu0 %1573
        %1575 = vrot.lane.b32.xlu0 %v777, 24
        %v1576 = vpop.permute.xlu0 %1575
        %1577 = vrot.lane.b32.xlu0 %v778, 24
        %v1578 = vpop.permute.xlu0 %1577
        %1643 = vrot.lane.b32.xlu0 %v779, 28
        %v1644 = vpop.permute.xlu0 %1643
        %1645 = vrot.lane.b32.xlu0 %v780, 28
        %v1646 = vpop.permute.xlu0 %1645
        %1647 = vrot.lane.b32.xlu0 %v781, 28
        %v1648 = vpop.permute.xlu0 %1647
        %1649 = vrot.lane.b32.xlu0 %v782, 28
        %v1650 = vpop.permute.xlu0 %1649
        %1651 = vrot.lane.b32.xlu0 %v783, 28
        %v1652 = vpop.permute.xlu0 %1651
        %1653 = vrot.lane.b32.xlu0 %v784, 28
        %v1654 = vpop.permute.xlu0 %1653
        %1655 = vrot.lane.b32.xlu0 %v785, 28
        %v1656 = vpop.permute.xlu0 %1655
        %1657 = vrot.lane.b32.xlu0 %v786, 28
        %v1658 = vpop.permute.xlu0 %1657
        %1659 = vrot.lane.b32.xlu0 %v787, 28
        %v1660 = vpop.permute.xlu0 %1659
        %1661 = vrot.lane.b32.xlu0 %v788, 28
        %v1662 = vpop.permute.xlu0 %1661
        %1663 = vrot.lane.b32.xlu0 %v789, 28
        %v1664 = vpop.permute.xlu0 %1663
        %1665 = vrot.lane.b32.xlu0 %v790, 28
        %v1666 = vpop.permute.xlu0 %1665
        %1667 = vrot.lane.b32.xlu0 %v791, 28
        %v1668 = vpop.permute.xlu0 %1667
        %1669 = vrot.lane.b32.xlu0 %v792, 28
        %v1670 = vpop.permute.xlu0 %1669
        %1671 = vrot.lane.b32.xlu0 %v793, 28
        %v1672 = vpop.permute.xlu0 %1671
        %1673 = vrot.lane.b32.xlu0 %v794, 28
        %v1674 = vpop.permute.xlu0 %1673
        %1675 = vrot.lane.b32.xlu0 %v795, 28
        %v1676 = vpop.permute.xlu0 %1675
        %1677 = vrot.lane.b32.xlu0 %v796, 28
        %v1678 = vpop.permute.xlu0 %1677
        %1679 = vrot.lane.b32.xlu0 %v797, 28
        %v1680 = vpop.permute.xlu0 %1679
        %1681 = vrot.lane.b32.xlu0 %v798, 28
        %v1682 = vpop.permute.xlu0 %1681
        %1683 = vrot.lane.b32.xlu0 %v799, 28
        %v1684 = vpop.permute.xlu0 %1683
        %1685 = vrot.lane.b32.xlu0 %v800, 28
        %v1686 = vpop.permute.xlu0 %1685
        %1687 = vrot.lane.b32.xlu0 %v801, 28
        %v1688 = vpop.permute.xlu0 %1687
        %1689 = vrot.lane.b32.xlu0 %v802, 28
        %v1690 = vpop.permute.xlu0 %1689
        %1691 = vrot.lane.b32.xlu0 %v803, 28
        %v1692 = vpop.permute.xlu0 %1691
        %1693 = vrot.lane.b32.xlu0 %v804, 28
        %v1694 = vpop.permute.xlu0 %1693
        %1695 = vrot.lane.b32.xlu0 %v805, 28
        %v1696 = vpop.permute.xlu0 %1695
        %1697 = vrot.lane.b32.xlu0 %v806, 28
        %v1698 = vpop.permute.xlu0 %1697
        %1699 = vrot.lane.b32.xlu0 %v807, 28
        %v1700 = vpop.permute.xlu0 %1699
        %1701 = vrot.lane.b32.xlu0 %v808, 28
        %v1702 = vpop.permute.xlu0 %1701
        %1703 = vrot.lane.b32.xlu0 %v809, 28
        %v1704 = vpop.permute.xlu0 %1703
        %1705 = vrot.lane.b32.xlu0 %v810, 28
        %v1706 = vpop.permute.xlu0 %1705
        %1771 = vrot.lane.b32.xlu0 %v811, 32
        %v1772 = vpop.permute.xlu0 %1771
        %1773 = vrot.lane.b32.xlu0 %v812, 32
        %v1774 = vpop.permute.xlu0 %1773
        %1775 = vrot.lane.b32.xlu0 %v813, 32
        %v1776 = vpop.permute.xlu0 %1775
        %1777 = vrot.lane.b32.xlu0 %v814, 32
        %v1778 = vpop.permute.xlu0 %1777
        %1779 = vrot.lane.b32.xlu0 %v815, 32
        %v1780 = vpop.permute.xlu0 %1779
        %1781 = vrot.lane.b32.xlu0 %v816, 32
        %v1782 = vpop.permute.xlu0 %1781
        %1783 = vrot.lane.b32.xlu0 %v817, 32
        %v1784 = vpop.permute.xlu0 %1783
        %1785 = vrot.lane.b32.xlu0 %v818, 32
        %v1786 = vpop.permute.xlu0 %1785
        %1787 = vrot.lane.b32.xlu0 %v819, 32
        %v1788 = vpop.permute.xlu0 %1787
        %1789 = vrot.lane.b32.xlu0 %v820, 32
        %v1790 = vpop.permute.xlu0 %1789
        %1791 = vrot.lane.b32.xlu0 %v821, 32
        %v1792 = vpop.permute.xlu0 %1791
        %1793 = vrot.lane.b32.xlu0 %v822, 32
        %v1794 = vpop.permute.xlu0 %1793
        %1795 = vrot.lane.b32.xlu0 %v823, 32
        %v1796 = vpop.permute.xlu0 %1795
        %1797 = vrot.lane.b32.xlu0 %v824, 32
        %v1798 = vpop.permute.xlu0 %1797
        %1799 = vrot.lane.b32.xlu0 %v825, 32
        %v1800 = vpop.permute.xlu0 %1799
        %1801 = vrot.lane.b32.xlu0 %v826, 32
        %v1802 = vpop.permute.xlu0 %1801
        %1803 = vrot.lane.b32.xlu0 %v827, 32
        %v1804 = vpop.permute.xlu0 %1803
        %1805 = vrot.lane.b32.xlu0 %v828, 32
        %v1806 = vpop.permute.xlu0 %1805
        %1807 = vrot.lane.b32.xlu0 %v829, 32
        %v1808 = vpop.permute.xlu0 %1807
        %1809 = vrot.lane.b32.xlu0 %v830, 32
        %v1810 = vpop.permute.xlu0 %1809
        %1811 = vrot.lane.b32.xlu0 %v831, 32
        %v1812 = vpop.permute.xlu0 %1811
        %1813 = vrot.lane.b32.xlu0 %v832, 32
        %v1814 = vpop.permute.xlu0 %1813
        %1815 = vrot.lane.b32.xlu0 %v833, 32
        %v1816 = vpop.permute.xlu0 %1815
        %1817 = vrot.lane.b32.xlu0 %v834, 32
        %v1818 = vpop.permute.xlu0 %1817
        %1819 = vrot.lane.b32.xlu0 %v835, 32
        %v1820 = vpop.permute.xlu0 %1819
        %1821 = vrot.lane.b32.xlu0 %v836, 32
        %v1822 = vpop.permute.xlu0 %1821
        %1823 = vrot.lane.b32.xlu0 %v837, 32
        %v1824 = vpop.permute.xlu0 %1823
        %1825 = vrot.lane.b32.xlu0 %v838, 32
        %v1826 = vpop.permute.xlu0 %1825
        %1827 = vrot.lane.b32.xlu0 %v839, 32
        %v1828 = vpop.permute.xlu0 %1827
        %1829 = vrot.lane.b32.xlu0 %v840, 32
        %v1830 = vpop.permute.xlu0 %1829
        %1831 = vrot.lane.b32.xlu0 %v841, 32
        %v1832 = vpop.permute.xlu0 %1831
        %1833 = vrot.lane.b32.xlu0 %v842, 32
        %v1834 = vpop.permute.xlu0 %1833
        %v1867 = vsel %vm521, %v554, %v876
        %v1868 = vsel %vm521, %v555, %v878
        %v1869 = vsel %vm521, %v556, %v880
        %v1870 = vsel %vm521, %v557, %v882
        %v1871 = vsel %vm521, %v558, %v884
        %v1872 = vsel %vm521, %v559, %v886
        %v1873 = vsel %vm521, %v560, %v888
        %v1874 = vsel %vm521, %v561, %v890
        %v1875 = vsel %vm521, %v562, %v892
        %v1876 = vsel %vm521, %v563, %v894
        %v1877 = vsel %vm521, %v564, %v896
        %v1878 = vsel %vm521, %v565, %v898
        %v1879 = vsel %vm521, %v566, %v900
        %v1880 = vsel %vm521, %v567, %v902
        %v1881 = vsel %vm521, %v568, %v904
        %v1882 = vsel %vm521, %v569, %v906
        %v1883 = vsel %vm521, %v570, %v908
        %v1884 = vsel %vm521, %v571, %v910
        %v1885 = vsel %vm521, %v572, %v912
        %v1886 = vsel %vm521, %v573, %v914
        %v1887 = vsel %vm521, %v574, %v916
        %v1888 = vsel %vm521, %v575, %v918
        %v1889 = vsel %vm521, %v576, %v920
        %v1890 = vsel %vm521, %v577, %v922
        %v1891 = vsel %vm521, %v578, %v924
        %v1892 = vsel %vm521, %v579, %v926
        %v1893 = vsel %vm521, %v580, %v928
        %v1894 = vsel %vm521, %v581, %v930
        %v1895 = vsel %vm521, %v582, %v932
        %v1896 = vsel %vm521, %v583, %v934
        %v1897 = vsel %vm521, %v584, %v936
        %v1898 = vsel %vm521, %v585, %v938
        %vm1899 = vcmask 64512
        %v1900 = vsel %vm1899, %v1867, %v1004
        %v1901 = vsel %vm1899, %v1868, %v1006
        %v1902 = vsel %vm1899, %v1869, %v1008
        %v1903 = vsel %vm1899, %v1870, %v1010
        %v1904 = vsel %vm1899, %v1871, %v1012
        %v1905 = vsel %vm1899, %v1872, %v1014
        %v1906 = vsel %vm1899, %v1873, %v1016
        %v1907 = vsel %vm1899, %v1874, %v1018
        %v1908 = vsel %vm1899, %v1875, %v1020
        %v1909 = vsel %vm1899, %v1876, %v1022
        %v1910 = vsel %vm1899, %v1877, %v1024
        %v1911 = vsel %vm1899, %v1878, %v1026
        %v1912 = vsel %vm1899, %v1879, %v1028
        %v1913 = vsel %vm1899, %v1880, %v1030
        %v1914 = vsel %vm1899, %v1881, %v1032
        %v1915 = vsel %vm1899, %v1882, %v1034
        %v1916 = vsel %vm1899, %v1883, %v1036
        %v1917 = vsel %vm1899, %v1884, %v1038
        %v1918 = vsel %vm1899, %v1885, %v1040
        %v1919 = vsel %vm1899, %v1886, %v1042
        %v1920 = vsel %vm1899, %v1887, %v1044
        %v1921 = vsel %vm1899, %v1888, %v1046
        %v1922 = vsel %vm1899, %v1889, %v1048
        %v1923 = vsel %vm1899, %v1890, %v1050
        %v1924 = vsel %vm1899, %v1891, %v1052
        %v1925 = vsel %vm1899, %v1892, %v1054
        %v1926 = vsel %vm1899, %v1893, %v1056
        %v1927 = vsel %vm1899, %v1894, %v1058
        %v1928 = vsel %vm1899, %v1895, %v1060
        %v1929 = vsel %vm1899, %v1896, %v1062
        %v1930 = vsel %vm1899, %v1897, %v1064
        %v1931 = vsel %vm1899, %v1898, %v1066
        %vm1932 = vcmask 97280
        %v1933 = vsel %vm1932, %v1900, %v1132
        %v1934 = vsel %vm1932, %v1901, %v1134
        %v1935 = vsel %vm1932, %v1902, %v1136
        %v1936 = vsel %vm1932, %v1903, %v1138
        %v1937 = vsel %vm1932, %v1904, %v1140
        %v1938 = vsel %vm1932, %v1905, %v1142
        %v1939 = vsel %vm1932, %v1906, %v1144
        %v1940 = vsel %vm1932, %v1907, %v1146
        %v1941 = vsel %vm1932, %v1908, %v1148
        %v1942 = vsel %vm1932, %v1909, %v1150
        %v1943 = vsel %vm1932, %v1910, %v1152
        %v1944 = vsel %vm1932, %v1911, %v1154
        %v1945 = vsel %vm1932, %v1912, %v1156
        %v1946 = vsel %vm1932, %v1913, %v1158
        %v1947 = vsel %vm1932, %v1914, %v1160
        %v1948 = vsel %vm1932, %v1915, %v1162
        %v1949 = vsel %vm1932, %v1916, %v1164
        %v1950 = vsel %vm1932, %v1917, %v1166
        %v1951 = vsel %vm1932, %v1918, %v1168
        %v1952 = vsel %vm1932, %v1919, %v1170
        %v1953 = vsel %vm1932, %v1920, %v1172
        %v1954 = vsel %vm1932, %v1921, %v1174
        %v1955 = vsel %vm1932, %v1922, %v1176
        %v1956 = vsel %vm1932, %v1923, %v1178
        %v1957 = vsel %vm1932, %v1924, %v1180
        %v1958 = vsel %vm1932, %v1925, %v1182
        %v1959 = vsel %vm1932, %v1926, %v1184
        %v1960 = vsel %vm1932, %v1927, %v1186
        %v1961 = vsel %vm1932, %v1928, %v1188
        %v1962 = vsel %vm1932, %v1929, %v1190
        %v1963 = vsel %vm1932, %v1930, %v1192
        %v1964 = vsel %vm1932, %v1931, %v1194
        %vm1965 = vcmask 130048
        %v1966 = vsel %vm1965, %v1933, %v1260
        %v1967 = vsel %vm1965, %v1934, %v1262
        %v1968 = vsel %vm1965, %v1935, %v1264
        %v1969 = vsel %vm1965, %v1936, %v1266
        %v1970 = vsel %vm1965, %v1937, %v1268
        %v1971 = vsel %vm1965, %v1938, %v1270
        %v1972 = vsel %vm1965, %v1939, %v1272
        %v1973 = vsel %vm1965, %v1940, %v1274
        %v1974 = vsel %vm1965, %v1941, %v1276
        %v1975 = vsel %vm1965, %v1942, %v1278
        %v1976 = vsel %vm1965, %v1943, %v1280
        %v1977 = vsel %vm1965, %v1944, %v1282
        %v1978 = vsel %vm1965, %v1945, %v1284
        %v1979 = vsel %vm1965, %v1946, %v1286
        %v1980 = vsel %vm1965, %v1947, %v1288
        %v1981 = vsel %vm1965, %v1948, %v1290
        %v1982 = vsel %vm1965, %v1949, %v1292
        %v1983 = vsel %vm1965, %v1950, %v1294
        %v1984 = vsel %vm1965, %v1951, %v1296
        %v1985 = vsel %vm1965, %v1952, %v1298
        %v1986 = vsel %vm1965, %v1953, %v1300
        %v1987 = vsel %vm1965, %v1954, %v1302
        %v1988 = vsel %vm1965, %v1955, %v1304
        %v1989 = vsel %vm1965, %v1956, %v1306
        %v1990 = vsel %vm1965, %v1957, %v1308
        %v1991 = vsel %vm1965, %v1958, %v1310
        %v1992 = vsel %vm1965, %v1959, %v1312
        %v1993 = vsel %vm1965, %v1960, %v1314
        %v1994 = vsel %vm1965, %v1961, %v1316
        %v1995 = vsel %vm1965, %v1962, %v1318
        %v1996 = vsel %vm1965, %v1963, %v1320
        %v1997 = vsel %vm1965, %v1964, %v1322
        %vm1998 = vcmask 162816
        %v1999 = vsel %vm1998, %v1966, %v1388
        %v2000 = vsel %vm1998, %v1967, %v1390
        %v2001 = vsel %vm1998, %v1968, %v1392
        %v2002 = vsel %vm1998, %v1969, %v1394
        %v2003 = vsel %vm1998, %v1970, %v1396
        %v2004 = vsel %vm1998, %v1971, %v1398
        %v2005 = vsel %vm1998, %v1972, %v1400
        %v2006 = vsel %vm1998, %v1973, %v1402
        %v2007 = vsel %vm1998, %v1974, %v1404
        %v2008 = vsel %vm1998, %v1975, %v1406
        %v2009 = vsel %vm1998, %v1976, %v1408
        %v2010 = vsel %vm1998, %v1977, %v1410
        %v2011 = vsel %vm1998, %v1978, %v1412
        %v2012 = vsel %vm1998, %v1979, %v1414
        %v2013 = vsel %vm1998, %v1980, %v1416
        %v2014 = vsel %vm1998, %v1981, %v1418
        %v2015 = vsel %vm1998, %v1982, %v1420
        %v2016 = vsel %vm1998, %v1983, %v1422
        %v2017 = vsel %vm1998, %v1984, %v1424
        %v2018 = vsel %vm1998, %v1985, %v1426
        %v2019 = vsel %vm1998, %v1986, %v1428
        %v2020 = vsel %vm1998, %v1987, %v1430
        %v2021 = vsel %vm1998, %v1988, %v1432
        %v2022 = vsel %vm1998, %v1989, %v1434
        %v2023 = vsel %vm1998, %v1990, %v1436
        %v2024 = vsel %vm1998, %v1991, %v1438
        %v2025 = vsel %vm1998, %v1992, %v1440
        %v2026 = vsel %vm1998, %v1993, %v1442
        %v2027 = vsel %vm1998, %v1994, %v1444
        %v2028 = vsel %vm1998, %v1995, %v1446
        %v2029 = vsel %vm1998, %v1996, %v1448
        %v2030 = vsel %vm1998, %v1997, %v1450
        %vm2031 = vcmask 195584
        %v2032 = vsel %vm2031, %v1999, %v1516
        %v2033 = vsel %vm2031, %v2000, %v1518
        %v2034 = vsel %vm2031, %v2001, %v1520
        %v2035 = vsel %vm2031, %v2002, %v1522
        %v2036 = vsel %vm2031, %v2003, %v1524
        %v2037 = vsel %vm2031, %v2004, %v1526
        %v2038 = vsel %vm2031, %v2005, %v1528
        %v2039 = vsel %vm2031, %v2006, %v1530
        %v2040 = vsel %vm2031, %v2007, %v1532
        %v2041 = vsel %vm2031, %v2008, %v1534
        %v2042 = vsel %vm2031, %v2009, %v1536
        %v2043 = vsel %vm2031, %v2010, %v1538
        %v2044 = vsel %vm2031, %v2011, %v1540
        %v2045 = vsel %vm2031, %v2012, %v1542
        %v2046 = vsel %vm2031, %v2013, %v1544
        %v2047 = vsel %vm2031, %v2014, %v1546
        %v2048 = vsel %vm2031, %v2015, %v1548
        %v2049 = vsel %vm2031, %v2016, %v1550
        %v2050 = vsel %vm2031, %v2017, %v1552
        %v2051 = vsel %vm2031, %v2018, %v1554
        %v2052 = vsel %vm2031, %v2019, %v1556
        %v2053 = vsel %vm2031, %v2020, %v1558
        %v2054 = vsel %vm2031, %v2021, %v1560
        %v2055 = vsel %vm2031, %v2022, %v1562
        %v2056 = vsel %vm2031, %v2023, %v1564
        %v2057 = vsel %vm2031, %v2024, %v1566
        %v2058 = vsel %vm2031, %v2025, %v1568
        %v2059 = vsel %vm2031, %v2026, %v1570
        %v2060 = vsel %vm2031, %v2027, %v1572
        %v2061 = vsel %vm2031, %v2028, %v1574
        %v2062 = vsel %vm2031, %v2029, %v1576
        %v2063 = vsel %vm2031, %v2030, %v1578
        %vm2064 = vcmask 228352
        %v2065 = vsel %vm2064, %v2032, %v1644
        %v2066 = vsel %vm2064, %v2033, %v1646
        %v2067 = vsel %vm2064, %v2034, %v1648
        %v2068 = vsel %vm2064, %v2035, %v1650
        %v2069 = vsel %vm2064, %v2036, %v1652
        %v2070 = vsel %vm2064, %v2037, %v1654
        %v2071 = vsel %vm2064, %v2038, %v1656
        %v2072 = vsel %vm2064, %v2039, %v1658
        %v2073 = vsel %vm2064, %v2040, %v1660
        %v2074 = vsel %vm2064, %v2041, %v1662
        %v2075 = vsel %vm2064, %v2042, %v1664
        %v2076 = vsel %vm2064, %v2043, %v1666
        %v2077 = vsel %vm2064, %v2044, %v1668
        %v2078 = vsel %vm2064, %v2045, %v1670
        %v2079 = vsel %vm2064, %v2046, %v1672
        %v2080 = vsel %vm2064, %v2047, %v1674
        %v2081 = vsel %vm2064, %v2048, %v1676
        %v2082 = vsel %vm2064, %v2049, %v1678
        %v2083 = vsel %vm2064, %v2050, %v1680
        %v2084 = vsel %vm2064, %v2051, %v1682
        %v2085 = vsel %vm2064, %v2052, %v1684
        %v2086 = vsel %vm2064, %v2053, %v1686
        %v2087 = vsel %vm2064, %v2054, %v1688
        %v2088 = vsel %vm2064, %v2055, %v1690
        %v2089 = vsel %vm2064, %v2056, %v1692
        %v2090 = vsel %vm2064, %v2057, %v1694
        %v2091 = vsel %vm2064, %v2058, %v1696
        %v2092 = vsel %vm2064, %v2059, %v1698
        %v2093 = vsel %vm2064, %v2060, %v1700
        %v2094 = vsel %vm2064, %v2061, %v1702
        %v2095 = vsel %vm2064, %v2062, %v1704
        %v2096 = vsel %vm2064, %v2063, %v1706
        %vm2097 = vcmask 261120
        %v2098 = vsel %vm2097, %v2065, %v1772
        %v2099 = vsel %vm2097, %v2066, %v1774
        %v2100 = vsel %vm2097, %v2067, %v1776
        %v2101 = vsel %vm2097, %v2068, %v1778
        %v2102 = vsel %vm2097, %v2069, %v1780
        %v2103 = vsel %vm2097, %v2070, %v1782
        %v2104 = vsel %vm2097, %v2071, %v1784
        %v2105 = vsel %vm2097, %v2072, %v1786
        %v2106 = vsel %vm2097, %v2073, %v1788
        %v2107 = vsel %vm2097, %v2074, %v1790
        %v2108 = vsel %vm2097, %v2075, %v1792
        %v2109 = vsel %vm2097, %v2076, %v1794
        %v2110 = vsel %vm2097, %v2077, %v1796
        %v2111 = vsel %vm2097, %v2078, %v1798
        %v2112 = vsel %vm2097, %v2079, %v1800
        %v2113 = vsel %vm2097, %v2080, %v1802
        %v2114 = vsel %vm2097, %v2081, %v1804
        %v2115 = vsel %vm2097, %v2082, %v1806
        %v2116 = vsel %vm2097, %v2083, %v1808
        %v2117 = vsel %vm2097, %v2084, %v1810
        %v2118 = vsel %vm2097, %v2085, %v1812
        %v2119 = vsel %vm2097, %v2086, %v1814
        %v2120 = vsel %vm2097, %v2087, %v1816
        %v2121 = vsel %vm2097, %v2088, %v1818
        %v2122 = vsel %vm2097, %v2089, %v1820
        %v2123 = vsel %vm2097, %v2090, %v1822
        %v2124 = vsel %vm2097, %v2091, %v1824
        %v2125 = vsel %vm2097, %v2092, %v1826
        %v2126 = vsel %vm2097, %v2093, %v1828
        %v2127 = vsel %vm2097, %v2094, %v1830
        %v2128 = vsel %vm2097, %v2095, %v1832
        %v2129 = vsel %vm2097, %v2096, %v1834
        %v2130 = vpack.c.bf16 %v2099, %v2098
        %v2131 = vpack.c.bf16 %v2101, %v2100
        %v2132 = vpack.c.bf16 %v2103, %v2102
        %v2133 = vpack.c.bf16 %v2105, %v2104
        %v2134 = vpack.c.bf16 %v2107, %v2106
        %v2135 = vpack.c.bf16 %v2109, %v2108
        %v2136 = vpack.c.bf16 %v2111, %v2110
        %v2137 = vpack.c.bf16 %v2113, %v2112
        %v2138 = vpack.c.bf16 %v2115, %v2114
        %v2139 = vpack.c.bf16 %v2117, %v2116
        %v2140 = vpack.c.bf16 %v2119, %v2118
        %v2141 = vpack.c.bf16 %v2121, %v2120
        %v2142 = vpack.c.bf16 %v2123, %v2122
        %v2143 = vpack.c.bf16 %v2125, %v2124
        %v2144 = vpack.c.bf16 %v2127, %v2126
        %v2145 = vpack.c.bf16 %v2129, %v2128
        %v2146 = vld [vmem:[%s2] sm:$0x1]
        %v2147 = vld [vmem:[%s1] sm:$0xf]
        %v2148 = vld [vmem:[%s1 + $0x4] sm:$0xf]
        %v2149 = vld [vmem:[%s1 + $0x8] sm:$0xf]
        %v2150 = vld [vmem:[%s1 + $0xc] sm:$0xf]
        %v2151 = vld [vmem:[%s1 + $0x10] sm:$0x3]
        %v2153 = vlaneseq
        %v2154 = vshrl.u32 %v2153, 7
        %v2155 = vsub.s32 0, %v2154
        %v2156 = vrot.slane %v2146, %v2155
        %v2163 = vunpack.c.l.b16 %v2147
        %v2164 = vunpack.c.l.b16 %v2148
        %v2165 = vunpack.c.l.b16 %v2149
        %v2166 = vunpack.c.l.b16 %v2150
        %v2167 = vunpack.c.l.b16 %v2151
        %v2168 = vpack.c.b16 %v2164, %v2163
        %v2169 = vpack.c.b16 %v2166, %v2165
        %v2170 = vpack.c.b16 %v2167, %v2167
        %vm2173 = vcmask 293888
        %v2175 = vsel %vm2173, %v2130, 0
        %v2178 = vsel %vm2173, %v2131, 0
        %v2181 = vsel %vm2173, %v2132, 0
        %v2184 = vsel %vm2173, %v2133, 0
        %v2187 = vsel %vm2173, %v2134, 0
        %v2190 = vsel %vm2173, %v2135, 0
        %v2193 = vsel %vm2173, %v2136, 0
        %v2196 = vsel %vm2173, %v2137, 0
        %v2199 = vsel %vm2173, %v2138, 0
        %v2202 = vsel %vm2173, %v2139, 0
        %v2205 = vsel %vm2173, %v2140, 0
        %v2208 = vsel %vm2173, %v2141, 0
        %v2211 = vsel %vm2173, %v2142, 0
        %v2214 = vsel %vm2173, %v2143, 0
        %v2217 = vsel %vm2173, %v2144, 0
        %v2220 = vsel %vm2173, %v2145, 0
        %vm2222 = vcmask 1041408
        %v2224 = vsel %vm2222, %v2170, 0
        %2226 = vmatprep.subr.bf16.mxu0 0
        %2227 = vmatpush1.bf16.msra.mxu0 %v2168
        %2228 = vmatprep.subr.bf16.mxu0 0
        %2229 = vmatpush1.bf16.msra.mxu0 %v2169
        %2230 = vmatprep.subr.bf16.mxu0 0
        %2231 = vmatpush1.bf16.msra.mxu0 %v2224
        %2232 = vmatprep.subr.bf16.mxu0 0
        %2233 = vmatpush1.bf16.msra.mxu0 0
        %2234 = vmatprep.subr.bf16.mxu0 0
        %2235 = vmatpush1.bf16.msra.mxu0 0
        %2236 = vmatprep.subr.bf16.mxu0 0
        %2237 = vmatpush1.bf16.msra.mxu0 0
        %2238 = vmatprep.subr.bf16.mxu0 0
        %2239 = vmatpush1.bf16.msra.mxu0 0
        %2240 = vmatprep.subr.bf16.mxu0 0
        %2241 = vmatpush1.bf16.msra.mxu0 0
        %2242 = vmatprep.subr.bf16.mxu0 0
        %2243 = vmatpush1.bf16.msra.mxu0 0
        %2244 = vmatprep.subr.bf16.mxu0 0
        %2245 = vmatpush1.bf16.msra.mxu0 0
        %2246 = vmatprep.subr.bf16.mxu0 0
        %2247 = vmatpush1.bf16.msra.mxu0 0
        %2248 = vmatprep.subr.bf16.mxu0 0
        %2249 = vmatpush1.bf16.msra.mxu0 0
        %2250 = vmatprep.subr.bf16.mxu0 0
        %2251 = vmatpush1.bf16.msra.mxu0 0
        %2252 = vmatprep.subr.bf16.mxu0 0
        %2253 = vmatpush1.bf16.msra.mxu0 0
        %2254 = vmatprep.subr.bf16.mxu0 0
        %2255 = vmatpush1.bf16.msra.mxu0 0
        %2256 = vmatprep.subr.bf16.mxu0 0
        %2257 = vmatpush1.bf16.msra.mxu0 0
        %2258 = vmatprep.mubr.bf16.mxu0 0
        %2259 = vmatmul.mubr.bf16.gmra.mrb[0].mxu0 %v2175
        %v2260 = vpop.f32.mrb[0].mxu0
        %v2261 = vadd.f32 %v2156, %v2260
        %v2262 = vpop.f32.mrb[0].mxu0
        %v2263 = vpop.f32.mrb[0].mxu0
        %v2264 = vadd.f32 %v2156, %v2263
        %v2265 = vpop.f32.mrb[0].mxu0
        %2266 = vmatprep.mubr.bf16.mxu0 0
        %2267 = vmatmul.mubr.bf16.gmra.mrb[0].mxu0 %v2178
        %v2268 = vpop.f32.mrb[0].mxu0
        %v2269 = vadd.f32 %v2156, %v2268
        %v2270 = vpop.f32.mrb[0].mxu0
        %v2271 = vpop.f32.mrb[0].mxu0
        %v2272 = vadd.f32 %v2156, %v2271
        %v2273 = vpop.f32.mrb[0].mxu0
        %2274 = vmatprep.mubr.bf16.mxu0 0
        %2275 = vmatmul.mubr.bf16.gmra.mrb[0].mxu0 %v2181
        %v2276 = vpop.f32.mrb[0].mxu0
        %v2277 = vadd.f32 %v2156, %v2276
        %v2278 = vpop.f32.mrb[0].mxu0
        %v2279 = vpop.f32.mrb[0].mxu0
        %v2280 = vadd.f32 %v2156, %v2279
        %v2281 = vpop.f32.mrb[0].mxu0
        %2282 = vmatprep.mubr.bf16.mxu0 0
        %2283 = vmatmul.mubr.bf16.gmra.mrb[0].mxu0 %v2184
        %v2284 = vpop.f32.mrb[0].mxu0
        %v2285 = vadd.f32 %v2156, %v2284
        %v2286 = vpop.f32.mrb[0].mxu0
        %v2287 = vpop.f32.mrb[0].mxu0
        %v2288 = vadd.f32 %v2156, %v2287
        %v2289 = vpop.f32.mrb[0].mxu0
        %2290 = vmatprep.mubr.bf16.mxu0 0
        %2291 = vmatmul.mubr.bf16.gmra.mrb[0].mxu0 %v2187
        %v2292 = vpop.f32.mrb[0].mxu0
        %v2293 = vadd.f32 %v2156, %v2292
        %v2294 = vpop.f32.mrb[0].mxu0
        %v2295 = vpop.f32.mrb[0].mxu0
        %v2296 = vadd.f32 %v2156, %v2295
        %v2297 = vpop.f32.mrb[0].mxu0
        %2298 = vmatprep.mubr.bf16.mxu0 0
        %2299 = vmatmul.mubr.bf16.gmra.mrb[0].mxu0 %v2190
        %v2300 = vpop.f32.mrb[0].mxu0
        %v2301 = vadd.f32 %v2156, %v2300
        %v2302 = vpop.f32.mrb[0].mxu0
        %v2303 = vpop.f32.mrb[0].mxu0
        %v2304 = vadd.f32 %v2156, %v2303
        %v2305 = vpop.f32.mrb[0].mxu0
        %2306 = vmatprep.mubr.bf16.mxu0 0
        %2307 = vmatmul.mubr.bf16.gmra.mrb[0].mxu0 %v2193
        %v2308 = vpop.f32.mrb[0].mxu0
        %v2309 = vadd.f32 %v2156, %v2308
        %v2310 = vpop.f32.mrb[0].mxu0
        %v2311 = vpop.f32.mrb[0].mxu0
        %v2312 = vadd.f32 %v2156, %v2311
        %v2313 = vpop.f32.mrb[0].mxu0
        %2314 = vmatprep.mubr.bf16.mxu0 0
        %2315 = vmatmul.mubr.bf16.gmra.mrb[0].mxu0 %v2196
        %v2316 = vpop.f32.mrb[0].mxu0
        %v2317 = vadd.f32 %v2156, %v2316
        %v2318 = vpop.f32.mrb[0].mxu0
        %v2319 = vpop.f32.mrb[0].mxu0
        %v2320 = vadd.f32 %v2156, %v2319
        %v2321 = vpop.f32.mrb[0].mxu0
        %2322 = vmatprep.mubr.bf16.mxu0 0
        %2323 = vmatmul.mubr.bf16.gmra.mrb[0].mxu0 %v2199
        %v2324 = vpop.f32.mrb[0].mxu0
        %v2325 = vadd.f32 %v2156, %v2324
        %v2326 = vpop.f32.mrb[0].mxu0
        %v2327 = vpop.f32.mrb[0].mxu0
        %v2328 = vadd.f32 %v2156, %v2327
        %v2329 = vpop.f32.mrb[0].mxu0
        %2330 = vmatprep.mubr.bf16.mxu0 0
        %2331 = vmatmul.mubr.bf16.gmra.mrb[0].mxu0 %v2202
        %v2332 = vpop.f32.mrb[0].mxu0
        %v2333 = vadd.f32 %v2156, %v2332
        %v2334 = vpop.f32.mrb[0].mxu0
        %v2335 = vpop.f32.mrb[0].mxu0
        %v2336 = vadd.f32 %v2156, %v2335
        %v2337 = vpop.f32.mrb[0].mxu0
        %2338 = vmatprep.mubr.bf16.mxu0 0
        %2339 = vmatmul.mubr.bf16.gmra.mrb[0].mxu0 %v2205
        %v2340 = vpop.f32.mrb[0].mxu0
        %v2341 = vadd.f32 %v2156, %v2340
        %v2342 = vpop.f32.mrb[0].mxu0
        %v2343 = vpop.f32.mrb[0].mxu0
        %v2344 = vadd.f32 %v2156, %v2343
        %v2345 = vpop.f32.mrb[0].mxu0
        %2346 = vmatprep.mubr.bf16.mxu0 0
        %2347 = vmatmul.mubr.bf16.gmra.mrb[0].mxu0 %v2208
        %v2348 = vpop.f32.mrb[0].mxu0
        %v2349 = vadd.f32 %v2156, %v2348
        %v2350 = vpop.f32.mrb[0].mxu0
        %v2351 = vpop.f32.mrb[0].mxu0
        %v2352 = vadd.f32 %v2156, %v2351
        %v2353 = vpop.f32.mrb[0].mxu0
        %2354 = vmatprep.mubr.bf16.mxu0 0
        %2355 = vmatmul.mubr.bf16.gmra.mrb[0].mxu0 %v2211
        %v2356 = vpop.f32.mrb[0].mxu0
        %v2357 = vadd.f32 %v2156, %v2356
        %v2358 = vpop.f32.mrb[0].mxu0
        %v2359 = vpop.f32.mrb[0].mxu0
        %v2360 = vadd.f32 %v2156, %v2359
        %v2361 = vpop.f32.mrb[0].mxu0
        %2362 = vmatprep.mubr.bf16.mxu0 0
        %2363 = vmatmul.mubr.bf16.gmra.mrb[0].mxu0 %v2214
        %v2364 = vpop.f32.mrb[0].mxu0
        %v2365 = vadd.f32 %v2156, %v2364
        %v2366 = vpop.f32.mrb[0].mxu0
        %v2367 = vpop.f32.mrb[0].mxu0
        %v2368 = vadd.f32 %v2156, %v2367
        %v2369 = vpop.f32.mrb[0].mxu0
        %2370 = vmatprep.mubr.bf16.mxu0 0
        %2371 = vmatmul.mubr.bf16.gmra.mrb[0].mxu0 %v2217
        %v2372 = vpop.f32.mrb[0].mxu0
        %v2373 = vadd.f32 %v2156, %v2372
        %v2374 = vpop.f32.mrb[0].mxu0
        %v2375 = vpop.f32.mrb[0].mxu0
        %v2376 = vadd.f32 %v2156, %v2375
        %v2377 = vpop.f32.mrb[0].mxu0
        %2378 = vmatprep.mubr.bf16.mxu0 0
        %2379 = vmatmul.mubr.bf16.gmra.mrb[0].mxu0 %v2220
        %v2380 = vpop.f32.mrb[0].mxu0
        %v2381 = vadd.f32 %v2156, %v2380
        %v2382 = vpop.f32.mrb[0].mxu0
        %v2383 = vpop.f32.mrb[0].mxu0
        %v2384 = vadd.f32 %v2156, %v2383
        %v2385 = vpop.f32.mrb[0].mxu0
        %2386 = vdwg.mxu0
        %s2387 = smul.u32 %s25, 256
        %s2388 = scalar_lea.vmem [#allocation4], %s2387
        %2389 = vst.msk [vmem:[%s2388] sm:$0xff] %vm1899, %v2261
        %2390 = vst.msk [vmem:[%s2388 + $0x8] sm:$0xff] %vm1899, %v2264
        %2391 = vst.msk [vmem:[%s2388 + $0x10] sm:$0xff] %vm1899, %v2269
        %2392 = vst.msk [vmem:[%s2388 + $0x18] sm:$0xff] %vm1899, %v2272
        %2393 = vst.msk [vmem:[%s2388 + $0x20] sm:$0xff] %vm1899, %v2277
        %2394 = vst.msk [vmem:[%s2388 + $0x28] sm:$0xff] %vm1899, %v2280
        %2395 = vst.msk [vmem:[%s2388 + $0x30] sm:$0xff] %vm1899, %v2285
        %2396 = vst.msk [vmem:[%s2388 + $0x38] sm:$0xff] %vm1899, %v2288
        %2397 = vst.msk [vmem:[%s2388 + $0x40] sm:$0xff] %vm1899, %v2293
        %2398 = vst.msk [vmem:[%s2388 + $0x48] sm:$0xff] %vm1899, %v2296
        %2399 = vst.msk [vmem:[%s2388 + $0x50] sm:$0xff] %vm1899, %v2301
        %2400 = vst.msk [vmem:[%s2388 + $0x58] sm:$0xff] %vm1899, %v2304
        %2401 = vst.msk [vmem:[%s2388 + $0x60] sm:$0xff] %vm1899, %v2309
        %2402 = vst.msk [vmem:[%s2388 + $0x68] sm:$0xff] %vm1899, %v2312
        %2403 = vst.msk [vmem:[%s2388 + $0x70] sm:$0xff] %vm1899, %v2317
        %2404 = vst.msk [vmem:[%s2388 + $0x78] sm:$0xff] %vm1899, %v2320
        %2405 = vst.msk [vmem:[%s2388 + $0x80] sm:$0xff] %vm1899, %v2325
        %2406 = vst.msk [vmem:[%s2388 + $0x88] sm:$0xff] %vm1899, %v2328
        %2407 = vst.msk [vmem:[%s2388 + $0x90] sm:$0xff] %vm1899, %v2333
        %2408 = vst.msk [vmem:[%s2388 + $0x98] sm:$0xff] %vm1899, %v2336
        %2409 = vst.msk [vmem:[%s2388 + $0xa0] sm:$0xff] %vm1899, %v2341
        %2410 = vst.msk [vmem:[%s2388 + $0xa8] sm:$0xff] %vm1899, %v2344
        %2411 = vst.msk [vmem:[%s2388 + $0xb0] sm:$0xff] %vm1899, %v2349
        %2412 = vst.msk [vmem:[%s2388 + $0xb8] sm:$0xff] %vm1899, %v2352
        %2413 = vst.msk [vmem:[%s2388 + $0xc0] sm:$0xff] %vm1899, %v2357
        %2414 = vst.msk [vmem:[%s2388 + $0xc8] sm:$0xff] %vm1899, %v2360
        %2415 = vst.msk [vmem:[%s2388 + $0xd0] sm:$0xff] %vm1899, %v2365
        %2416 = vst.msk [vmem:[%s2388 + $0xd8] sm:$0xff] %vm1899, %v2368
        %2417 = vst.msk [vmem:[%s2388 + $0xe0] sm:$0xff] %vm1899, %v2373
        %2418 = vst.msk [vmem:[%s2388 + $0xe8] sm:$0xff] %vm1899, %v2376
        %2419 = vst.msk [vmem:[%s2388 + $0xf0] sm:$0xff] %vm1899, %v2381
        %2420 = vst.msk [vmem:[%s2388 + $0xf8] sm:$0xff] %vm1899, %v2384
        %v2421 = vld [vmem:[#allocation6] sm:$0x1]
        %v2422 = vsel %vm1899, %v2261, 0.0
        %v2423 = vsel %vm1899, %v2264, 0.0
        %v2424 = vadd.f32 %v2422, %v2423
        %v2425 = vsel %vm1899, %v2269, 0.0
        %v2426 = vadd.f32 %v2424, %v2425
        %v2427 = vsel %vm1899, %v2272, 0.0
        %v2428 = vadd.f32 %v2426, %v2427
        %v2429 = vsel %vm1899, %v2277, 0.0
        %v2430 = vadd.f32 %v2428, %v2429
        %v2431 = vsel %vm1899, %v2280, 0.0
        %v2432 = vadd.f32 %v2430, %v2431
        %v2433 = vsel %vm1899, %v2285, 0.0
        %v2434 = vadd.f32 %v2432, %v2433
        %v2435 = vsel %vm1899, %v2288, 0.0
        %v2436 = vadd.f32 %v2434, %v2435
        %v2437 = vsel %vm1899, %v2293, 0.0
        %v2438 = vadd.f32 %v2436, %v2437
        %v2439 = vsel %vm1899, %v2296, 0.0
        %v2440 = vadd.f32 %v2438, %v2439
        %v2441 = vsel %vm1899, %v2301, 0.0
        %v2442 = vadd.f32 %v2440, %v2441
        %v2443 = vsel %vm1899, %v2304, 0.0
        %v2444 = vadd.f32 %v2442, %v2443
        %v2445 = vsel %vm1899, %v2309, 0.0
        %v2446 = vadd.f32 %v2444, %v2445
        %v2447 = vsel %vm1899, %v2312, 0.0
        %v2448 = vadd.f32 %v2446, %v2447
        %v2449 = vsel %vm1899, %v2317, 0.0
        %v2450 = vadd.f32 %v2448, %v2449
        %v2451 = vsel %vm1899, %v2320, 0.0
        %v2452 = vadd.f32 %v2450, %v2451
        %v2453 = vsel %vm1899, %v2325, 0.0
        %v2454 = vadd.f32 %v2452, %v2453
        %v2455 = vsel %vm1899, %v2328, 0.0
        %v2456 = vadd.f32 %v2454, %v2455
        %v2457 = vsel %vm1899, %v2333, 0.0
        %v2458 = vadd.f32 %v2456, %v2457
        %v2459 = vsel %vm1899, %v2336, 0.0
        %v2460 = vadd.f32 %v2458, %v2459
        %v2461 = vsel %vm1899, %v2341, 0.0
        %v2462 = vadd.f32 %v2460, %v2461
        %v2463 = vsel %vm1899, %v2344, 0.0
        %v2464 = vadd.f32 %v2462, %v2463
        %v2465 = vsel %vm1899, %v2349, 0.0
        %v2466 = vadd.f32 %v2464, %v2465
        %v2467 = vsel %vm1899, %v2352, 0.0
        %v2468 = vadd.f32 %v2466, %v2467
        %v2469 = vsel %vm1899, %v2357, 0.0
        %v2470 = vadd.f32 %v2468, %v2469
        %v2471 = vsel %vm1899, %v2360, 0.0
        %v2472 = vadd.f32 %v2470, %v2471
        %v2473 = vsel %vm1899, %v2365, 0.0
        %v2474 = vadd.f32 %v2472, %v2473
        %v2475 = vsel %vm1899, %v2368, 0.0
        %v2476 = vadd.f32 %v2474, %v2475
        %v2477 = vsel %vm1899, %v2373, 0.0
        %v2478 = vadd.f32 %v2476, %v2477
        %v2479 = vsel %vm1899, %v2376, 0.0
        %v2480 = vadd.f32 %v2478, %v2479
        %v2481 = vsel %vm1899, %v2381, 0.0
        %v2482 = vadd.f32 %v2480, %v2481
        %v2483 = vsel %vm1899, %v2384, 0.0
        %v2484 = vadd.f32 %v2482, %v2483
        %v2485 = vrot.slane %v2484, 4
        %v2486 = vadd.f32 %v2484, %v2485
        %v2487 = vrot.slane %v2486, 2
        %v2488 = vadd.f32 %v2486, %v2487
        %v2489 = vrot.slane %v2488, 1
        %v2490 = vadd.f32 %v2488, %v2489
        %v2491 = vadd.f32 %v2421, %v2490
        %vm2492 = vcmask 57344
        %2493 = vst.msk [vmem:[#allocation6] sm:$0x1] %vm2492, %v2491
      $region60: #{tpu_custom_call.1} parent=55 // pred_fallthru
        _
      %p2494 = scmp.eq.s32.totalorder %s24, 1
      // Predicated region
      $region65: #{tpu_custom_call.1} parent=55 // pred_check
        %p2495 = pneg %p2494
      $region66: #{tpu_custom_call.1} parent=55 // pred_check_branch
        %2497 = sbr.rel (%p2495) target = $region68
      $region67: #{tpu_custom_call.1} parent=55 // pred_region
        %p2498 = scmp.eq.s32.totalorder %s25, 0
        // Predicated region
        $region69: #{tpu_custom_call.1} parent=67 // pred_check
          %p2499 = pneg %p2498
        $region70: #{tpu_custom_call.1} parent=67 // pred_check_branch
          %2501 = sbr.rel (%p2499) target = $region72
        $region71: #{tpu_custom_call.1} parent=67 // pred_region
          %v2502 = vld [vmem:[#allocation6] sm:$0x1]
          %v2503 = vmul.f32 %v2502, 0.001953125
          %v2504 = vld [vmem:[#allocation4] sm:$0xff]
          %v2505 = vld [vmem:[#allocation4 + $0x8] sm:$0xff]
          %v2506 = vld [vmem:[#allocation4 + $0x10] sm:$0xff]
          %v2507 = vld [vmem:[#allocation4 + $0x18] sm:$0xff]
          %v2508 = vld [vmem:[#allocation4 + $0x20] sm:$0xff]
          %v2509 = vld [vmem:[#allocation4 + $0x28] sm:$0xff]
          %v2510 = vld [vmem:[#allocation4 + $0x30] sm:$0xff]
          %v2511 = vld [vmem:[#allocation4 + $0x38] sm:$0xff]
          %v2512 = vld [vmem:[#allocation4 + $0x40] sm:$0xff]
          %v2513 = vld [vmem:[#allocation4 + $0x48] sm:$0xff]
          %v2514 = vld [vmem:[#allocation4 + $0x50] sm:$0xff]
          %v2515 = vld [vmem:[#allocation4 + $0x58] sm:$0xff]
          %v2516 = vld [vmem:[#allocation4 + $0x60] sm:$0xff]
          %v2517 = vld [vmem:[#allocation4 + $0x68] sm:$0xff]
          %v2518 = vld [vmem:[#allocation4 + $0x70] sm:$0xff]
          %v2519 = vld [vmem:[#allocation4 + $0x78] sm:$0xff]
          %v2520 = vld [vmem:[#allocation4 + $0x80] sm:$0xff]
          %v2521 = vld [vmem:[#allocation4 + $0x88] sm:$0xff]
          %v2522 = vld [vmem:[#allocation4 + $0x90] sm:$0xff]
          %v2523 = vld [vmem:[#allocation4 + $0x98] sm:$0xff]
          %v2524 = vld [vmem:[#allocation4 + $0xa0] sm:$0xff]
          %v2525 = vld [vmem:[#allocation4 + $0xa8] sm:$0xff]
          %v2526 = vld [vmem:[#allocation4 + $0xb0] sm:$0xff]
          %v2527 = vld [vmem:[#allocation4 + $0xb8] sm:$0xff]
          %v2528 = vld [vmem:[#allocation4 + $0xc0] sm:$0xff]
          %v2529 = vld [vmem:[#allocation4 + $0xc8] sm:$0xff]
          %v2530 = vld [vmem:[#allocation4 + $0xd0] sm:$0xff]
          %v2531 = vld [vmem:[#allocation4 + $0xd8] sm:$0xff]
          %v2532 = vld [vmem:[#allocation4 + $0xe0] sm:$0xff]
          %v2533 = vld [vmem:[#allocation4 + $0xe8] sm:$0xff]
          %v2534 = vld [vmem:[#allocation4 + $0xf0] sm:$0xff]
          %v2535 = vld [vmem:[#allocation4 + $0xf8] sm:$0xff]
          %v2537 = vlaneseq
          %v2538 = vshrl.u32 %v2537, 7
          %v2539 = vsub.s32 0, %v2538
          %v2540 = vrot.slane %v2503, %v2539
          %v2542 = vsub.f32 %v2504, %v2540
          %v2543 = vsub.f32 %v2505, %v2540
          %v2544 = vsub.f32 %v2506, %v2540
          %v2545 = vsub.f32 %v2507, %v2540
          %v2546 = vsub.f32 %v2508, %v2540
          %v2547 = vsub.f32 %v2509, %v2540
          %v2548 = vsub.f32 %v2510, %v2540
          %v2549 = vsub.f32 %v2511, %v2540
          %v2550 = vsub.f32 %v2512, %v2540
          %v2551 = vsub.f32 %v2513, %v2540
          %v2552 = vsub.f32 %v2514, %v2540
          %v2553 = vsub.f32 %v2515, %v2540
          %v2554 = vsub.f32 %v2516, %v2540
          %v2555 = vsub.f32 %v2517, %v2540
          %v2556 = vsub.f32 %v2518, %v2540
          %v2557 = vsub.f32 %v2519, %v2540
          %v2558 = vsub.f32 %v2520, %v2540
          %v2559 = vsub.f32 %v2521, %v2540
          %v2560 = vsub.f32 %v2522, %v2540
          %v2561 = vsub.f32 %v2523, %v2540
          %v2562 = vsub.f32 %v2524, %v2540
          %v2563 = vsub.f32 %v2525, %v2540
          %v2564 = vsub.f32 %v2526, %v2540
          %v2565 = vsub.f32 %v2527, %v2540
          %v2566 = vsub.f32 %v2528, %v2540
          %v2567 = vsub.f32 %v2529, %v2540
          %v2568 = vsub.f32 %v2530, %v2540
          %v2569 = vsub.f32 %v2531, %v2540
          %v2570 = vsub.f32 %v2532, %v2540
          %v2571 = vsub.f32 %v2533, %v2540
          %v2572 = vsub.f32 %v2534, %v2540
          %v2573 = vsub.f32 %v2535, %v2540
          %v2574 = vmul.f32 %v2542, %v2542
          %v2575 = vmul.f32 %v2543, %v2543
          %v2576 = vmul.f32 %v2544, %v2544
          %v2577 = vmul.f32 %v2545, %v2545
          %v2578 = vmul.f32 %v2546, %v2546
          %v2579 = vmul.f32 %v2547, %v2547
          %v2580 = vmul.f32 %v2548, %v2548
          %v2581 = vmul.f32 %v2549, %v2549
          %v2582 = vmul.f32 %v2550, %v2550
          %v2583 = vmul.f32 %v2551, %v2551
          %v2584 = vmul.f32 %v2552, %v2552
          %v2585 = vmul.f32 %v2553, %v2553
          %v2586 = vmul.f32 %v2554, %v2554
          %v2587 = vmul.f32 %v2555, %v2555
          %v2588 = vmul.f32 %v2556, %v2556
          %v2589 = vmul.f32 %v2557, %v2557
          %v2590 = vmul.f32 %v2558, %v2558
          %v2591 = vmul.f32 %v2559, %v2559
          %v2592 = vmul.f32 %v2560, %v2560
          %v2593 = vmul.f32 %v2561, %v2561
          %v2594 = vmul.f32 %v2562, %v2562
          %v2595 = vmul.f32 %v2563, %v2563
          %v2596 = vmul.f32 %v2564, %v2564
          %v2597 = vmul.f32 %v2565, %v2565
          %v2598 = vmul.f32 %v2566, %v2566
          %v2599 = vmul.f32 %v2567, %v2567
          %v2600 = vmul.f32 %v2568, %v2568
          %v2601 = vmul.f32 %v2569, %v2569
          %v2602 = vmul.f32 %v2570, %v2570
          %v2603 = vmul.f32 %v2571, %v2571
          %v2604 = vmul.f32 %v2572, %v2572
          %v2605 = vmul.f32 %v2573, %v2573
          %vm2606 = vcmask 64512
          %v2607 = vsel %vm2606, %v2574, 0.0
          %v2608 = vsel %vm2606, %v2575, 0.0
          %v2609 = vadd.f32 %v2607, %v2608
          %v2610 = vsel %vm2606, %v2576, 0.0
          %v2611 = vadd.f32 %v2609, %v2610
          %v2612 = vsel %vm2606, %v2577, 0.0
          %v2613 = vadd.f32 %v2611, %v2612
          %v2614 = vsel %vm2606, %v2578, 0.0
          %v2615 = vadd.f32 %v2613, %v2614
          %v2616 = vsel %vm2606, %v2579, 0.0
          %v2617 = vadd.f32 %v2615, %v2616
          %v2618 = vsel %vm2606, %v2580, 0.0
          %v2619 = vadd.f32 %v2617, %v2618
          %v2620 = vsel %vm2606, %v2581, 0.0
          %v2621 = vadd.f32 %v2619, %v2620
          %v2622 = vsel %vm2606, %v2582, 0.0
          %v2623 = vadd.f32 %v2621, %v2622
          %v2624 = vsel %vm2606, %v2583, 0.0
          %v2625 = vadd.f32 %v2623, %v2624
          %v2626 = vsel %vm2606, %v2584, 0.0
          %v2627 = vadd.f32 %v2625, %v2626
          %v2628 = vsel %vm2606, %v2585, 0.0
          %v2629 = vadd.f32 %v2627, %v2628
          %v2630 = vsel %vm2606, %v2586, 0.0
          %v2631 = vadd.f32 %v2629, %v2630
          %v2632 = vsel %vm2606, %v2587, 0.0
          %v2633 = vadd.f32 %v2631, %v2632
          %v2634 = vsel %vm2606, %v2588, 0.0
          %v2635 = vadd.f32 %v2633, %v2634
          %v2636 = vsel %vm2606, %v2589, 0.0
          %v2637 = vadd.f32 %v2635, %v2636
          %v2638 = vsel %vm2606, %v2590, 0.0
          %v2639 = vadd.f32 %v2637, %v2638
          %v2640 = vsel %vm2606, %v2591, 0.0
          %v2641 = vadd.f32 %v2639, %v2640
          %v2642 = vsel %vm2606, %v2592, 0.0
          %v2643 = vadd.f32 %v2641, %v2642
          %v2644 = vsel %vm2606, %v2593, 0.0
          %v2645 = vadd.f32 %v2643, %v2644
          %v2646 = vsel %vm2606, %v2594, 0.0
          %v2647 = vadd.f32 %v2645, %v2646
          %v2648 = vsel %vm2606, %v2595, 0.0
          %v2649 = vadd.f32 %v2647, %v2648
          %v2650 = vsel %vm2606, %v2596, 0.0
          %v2651 = vadd.f32 %v2649, %v2650
          %v2652 = vsel %vm2606, %v2597, 0.0
          %v2653 = vadd.f32 %v2651, %v2652
          %v2654 = vsel %vm2606, %v2598, 0.0
          %v2655 = vadd.f32 %v2653, %v2654
          %v2656 = vsel %vm2606, %v2599, 0.0
          %v2657 = vadd.f32 %v2655, %v2656
          %v2658 = vsel %vm2606, %v2600, 0.0
          %v2659 = vadd.f32 %v2657, %v2658
          %v2660 = vsel %vm2606, %v2601, 0.0
          %v2661 = vadd.f32 %v2659, %v2660
          %v2662 = vsel %vm2606, %v2602, 0.0
          %v2663 = vadd.f32 %v2661, %v2662
          %v2664 = vsel %vm2606, %v2603, 0.0
          %v2665 = vadd.f32 %v2663, %v2664
          %v2666 = vsel %vm2606, %v2604, 0.0
          %v2667 = vadd.f32 %v2665, %v2666
          %v2668 = vsel %vm2606, %v2605, 0.0
          %v2669 = vadd.f32 %v2667, %v2668
          %v2670 = vrot.slane %v2669, 4
          %v2671 = vadd.f32 %v2669, %v2670
          %v2672 = vrot.slane %v2671, 2
          %v2673 = vadd.f32 %v2671, %v2672
          %v2674 = vrot.slane %v2673, 1
          %v2675 = vadd.f32 %v2673, %v2674
          %v2676 = vadd.f32 %v2675, 0.0
          %s2677 = scalar_lea.vmem [#allocation4], 256
          %v2678 = vld [vmem:[%s2677] sm:$0xff]
          %v2679 = vld [vmem:[%s2677 + $0x8] sm:$0xff]
          %v2680 = vld [vmem:[%s2677 + $0x10] sm:$0xff]
          %v2681 = vld [vmem:[%s2677 + $0x18] sm:$0xff]
          %v2682 = vld [vmem:[%s2677 + $0x20] sm:$0xff]
          %v2683 = vld [vmem:[%s2677 + $0x28] sm:$0xff]
          %v2684 = vld [vmem:[%s2677 + $0x30] sm:$0xff]
          %v2685 = vld [vmem:[%s2677 + $0x38] sm:$0xff]
          %v2686 = vld [vmem:[%s2677 + $0x40] sm:$0xff]
          %v2687 = vld [vmem:[%s2677 + $0x48] sm:$0xff]
          %v2688 = vld [vmem:[%s2677 + $0x50] sm:$0xff]
          %v2689 = vld [vmem:[%s2677 + $0x58] sm:$0xff]
          %v2690 = vld [vmem:[%s2677 + $0x60] sm:$0xff]
          %v2691 = vld [vmem:[%s2677 + $0x68] sm:$0xff]
          %v2692 = vld [vmem:[%s2677 + $0x70] sm:$0xff]
          %v2693 = vld [vmem:[%s2677 + $0x78] sm:$0xff]
          %v2694 = vld [vmem:[%s2677 + $0x80] sm:$0xff]
          %v2695 = vld [vmem:[%s2677 + $0x88] sm:$0xff]
          %v2696 = vld [vmem:[%s2677 + $0x90] sm:$0xff]
          %v2697 = vld [vmem:[%s2677 + $0x98] sm:$0xff]
          %v2698 = vld [vmem:[%s2677 + $0xa0] sm:$0xff]
          %v2699 = vld [vmem:[%s2677 + $0xa8] sm:$0xff]
          %v2700 = vld [vmem:[%s2677 + $0xb0] sm:$0xff]
          %v2701 = vld [vmem:[%s2677 + $0xb8] sm:$0xff]
          %v2702 = vld [vmem:[%s2677 + $0xc0] sm:$0xff]
          %v2703 = vld [vmem:[%s2677 + $0xc8] sm:$0xff]
          %v2704 = vld [vmem:[%s2677 + $0xd0] sm:$0xff]
          %v2705 = vld [vmem:[%s2677 + $0xd8] sm:$0xff]
          %v2706 = vld [vmem:[%s2677 + $0xe0] sm:$0xff]
          %v2707 = vld [vmem:[%s2677 + $0xe8] sm:$0xff]
          %v2708 = vld [vmem:[%s2677 + $0xf0] sm:$0xff]
          %v2709 = vld [vmem:[%s2677 + $0xf8] sm:$0xff]
          %v2710 = vsub.f32 %v2678, %v2540
          %v2711 = vsub.f32 %v2679, %v2540
          %v2712 = vsub.f32 %v2680, %v2540
          %v2713 = vsub.f32 %v2681, %v2540
          %v2714 = vsub.f32 %v2682, %v2540
          %v2715 = vsub.f32 %v2683, %v2540
          %v2716 = vsub.f32 %v2684, %v2540
          %v2717 = vsub.f32 %v2685, %v2540
          %v2718 = vsub.f32 %v2686, %v2540
          %v2719 = vsub.f32 %v2687, %v2540
          %v2720 = vsub.f32 %v2688, %v2540
          %v2721 = vsub.f32 %v2689, %v2540
          %v2722 = vsub.f32 %v2690, %v2540
          %v2723 = vsub.f32 %v2691, %v2540
          %v2724 = vsub.f32 %v2692, %v2540
          %v2725 = vsub.f32 %v2693, %v2540
          %v2726 = vsub.f32 %v2694, %v2540
          %v2727 = vsub.f32 %v2695, %v2540
          %v2728 = vsub.f32 %v2696, %v2540
          %v2729 = vsub.f32 %v2697, %v2540
          %v2730 = vsub.f32 %v2698, %v2540
          %v2731 = vsub.f32 %v2699, %v2540
          %v2732 = vsub.f32 %v2700, %v2540
          %v2733 = vsub.f32 %v2701, %v2540
          %v2734 = vsub.f32 %v2702, %v2540
          %v2735 = vsub.f32 %v2703, %v2540
          %v2736 = vsub.f32 %v2704, %v2540
          %v2737 = vsub.f32 %v2705, %v2540
          %v2738 = vsub.f32 %v2706, %v2540
          %v2739 = vsub.f32 %v2707, %v2540
          %v2740 = vsub.f32 %v2708, %v2540
          %v2741 = vsub.f32 %v2709, %v2540
          %v2742 = vmul.f32 %v2710, %v2710
          %v2743 = vmul.f32 %v2711, %v2711
          %v2744 = vmul.f32 %v2712, %v2712
          %v2745 = vmul.f32 %v2713, %v2713
          %v2746 = vmul.f32 %v2714, %v2714
          %v2747 = vmul.f32 %v2715, %v2715
          %v2748 = vmul.f32 %v2716, %v2716
          %v2749 = vmul.f32 %v2717, %v2717
          %v2750 = vmul.f32 %v2718, %v2718
          %v2751 = vmul.f32 %v2719, %v2719
          %v2752 = vmul.f32 %v2720, %v2720
          %v2753 = vmul.f32 %v2721, %v2721
          %v2754 = vmul.f32 %v2722, %v2722
          %v2755 = vmul.f32 %v2723, %v2723
          %v2756 = vmul.f32 %v2724, %v2724
          %v2757 = vmul.f32 %v2725, %v2725
          %v2758 = vmul.f32 %v2726, %v2726
          %v2759 = vmul.f32 %v2727, %v2727
          %v2760 = vmul.f32 %v2728, %v2728
          %v2761 = vmul.f32 %v2729, %v2729
          %v2762 = vmul.f32 %v2730, %v2730
          %v2763 = vmul.f32 %v2731, %v2731
          %v2764 = vmul.f32 %v2732, %v2732
          %v2765 = vmul.f32 %v2733, %v2733
          %v2766 = vmul.f32 %v2734, %v2734
          %v2767 = vmul.f32 %v2735, %v2735
          %v2768 = vmul.f32 %v2736, %v2736
          %v2769 = vmul.f32 %v2737, %v2737
          %v2770 = vmul.f32 %v2738, %v2738
          %v2771 = vmul.f32 %v2739, %v2739
          %v2772 = vmul.f32 %v2740, %v2740
          %v2773 = vmul.f32 %v2741, %v2741
          %v2774 = vsel %vm2606, %v2742, 0.0
          %v2775 = vsel %vm2606, %v2743, 0.0
          %v2776 = vadd.f32 %v2774, %v2775
          %v2777 = vsel %vm2606, %v2744, 0.0
          %v2778 = vadd.f32 %v2776, %v2777
          %v2779 = vsel %vm2606, %v2745, 0.0
          %v2780 = vadd.f32 %v2778, %v2779
          %v2781 = vsel %vm2606, %v2746, 0.0
          %v2782 = vadd.f32 %v2780, %v2781
          %v2783 = vsel %vm2606, %v2747, 0.0
          %v2784 = vadd.f32 %v2782, %v2783
          %v2785 = vsel %vm2606, %v2748, 0.0
          %v2786 = vadd.f32 %v2784, %v2785
          %v2787 = vsel %vm2606, %v2749, 0.0
          %v2788 = vadd.f32 %v2786, %v2787
          %v2789 = vsel %vm2606, %v2750, 0.0
          %v2790 = vadd.f32 %v2788, %v2789
          %v2791 = vsel %vm2606, %v2751, 0.0
          %v2792 = vadd.f32 %v2790, %v2791
          %v2793 = vsel %vm2606, %v2752, 0.0
          %v2794 = vadd.f32 %v2792, %v2793
          %v2795 = vsel %vm2606, %v2753, 0.0
          %v2796 = vadd.f32 %v2794, %v2795
          %v2797 = vsel %vm2606, %v2754, 0.0
          %v2798 = vadd.f32 %v2796, %v2797
          %v2799 = vsel %vm2606, %v2755, 0.0
          %v2800 = vadd.f32 %v2798, %v2799
          %v2801 = vsel %vm2606, %v2756, 0.0
          %v2802 = vadd.f32 %v2800, %v2801
          %v2803 = vsel %vm2606, %v2757, 0.0
          %v2804 = vadd.f32 %v2802, %v2803
          %v2805 = vsel %vm2606, %v2758, 0.0
          %v2806 = vadd.f32 %v2804, %v2805
          %v2807 = vsel %vm2606, %v2759, 0.0
          %v2808 = vadd.f32 %v2806, %v2807
          %v2809 = vsel %vm2606, %v2760, 0.0
          %v2810 = vadd.f32 %v2808, %v2809
          %v2811 = vsel %vm2606, %v2761, 0.0
          %v2812 = vadd.f32 %v2810, %v2811
          %v2813 = vsel %vm2606, %v2762, 0.0
          %v2814 = vadd.f32 %v2812, %v2813
          %v2815 = vsel %vm2606, %v2763, 0.0
          %v2816 = vadd.f32 %v2814, %v2815
          %v2817 = vsel %vm2606, %v2764, 0.0
          %v2818 = vadd.f32 %v2816, %v2817
          %v2819 = vsel %vm2606, %v2765, 0.0
          %v2820 = vadd.f32 %v2818, %v2819
          %v2821 = vsel %vm2606, %v2766, 0.0
          %v2822 = vadd.f32 %v2820, %v2821
          %v2823 = vsel %vm2606, %v2767, 0.0
          %v2824 = vadd.f32 %v2822, %v2823
          %v2825 = vsel %vm2606, %v2768, 0.0
          %v2826 = vadd.f32 %v2824, %v2825
          %v2827 = vsel %vm2606, %v2769, 0.0
          %v2828 = vadd.f32 %v2826, %v2827
          %v2829 = vsel %vm2606, %v2770, 0.0
          %v2830 = vadd.f32 %v2828, %v2829
          %v2831 = vsel %vm2606, %v2771, 0.0
          %v2832 = vadd.f32 %v2830, %v2831
          %v2833 = vsel %vm2606, %v2772, 0.0
          %v2834 = vadd.f32 %v2832, %v2833
          %v2835 = vsel %vm2606, %v2773, 0.0
          %v2836 = vadd.f32 %v2834, %v2835
          %v2837 = vrot.slane %v2836, 4
          %v2838 = vadd.f32 %v2836, %v2837
          %v2839 = vrot.slane %v2838, 2
          %v2840 = vadd.f32 %v2838, %v2839
          %v2841 = vrot.slane %v2840, 1
          %v2842 = vadd.f32 %v2840, %v2841
          %v2843 = vadd.f32 %v2676, %v2842
          %v2844 = vmul.f32 %v2843, 0.001953125
          %v2845 = vld [vmem:[%s3] sm:$0x1]
          %v2846 = vadd.f32 %v2844, 1e-05
          %v2847 = vrsqrt.pop %v2846
          %v2848 = vmul.f32 %v2845, %v2847
          %vm2849 = vcmask 57344
          %2850 = vst.msk [vmem:[#allocation7] sm:$0x1] %vm2849, %v2848
          %v2851 = vld [vmem:[%s4] sm:$0x1]
          %v2852 = vmul.f32 %v2503, %v2848
          %v2853 = vsub.f32 %v2851, %v2852
          %2854 = vst.msk [vmem:[#allocation8] sm:$0x1] %vm2849, %v2853
        $region72: #{tpu_custom_call.1} parent=67 // pred_fallthru
          _
        %s2855 = smul.u32 %s25, 256
        %s2856 = scalar_lea.vmem [#allocation4], %s2855
        %v2857 = vld [vmem:[%s2856] sm:$0xff]
        %v2858 = vld [vmem:[%s2856 + $0x8] sm:$0xff]
        %v2859 = vld [vmem:[%s2856 + $0x10] sm:$0xff]
        %v2860 = vld [vmem:[%s2856 + $0x18] sm:$0xff]
        %v2861 = vld [vmem:[%s2856 + $0x20] sm:$0xff]
        %v2862 = vld [vmem:[%s2856 + $0x28] sm:$0xff]
        %v2863 = vld [vmem:[%s2856 + $0x30] sm:$0xff]
        %v2864 = vld [vmem:[%s2856 + $0x38] sm:$0xff]
        %v2865 = vld [vmem:[%s2856 + $0x40] sm:$0xff]
        %v2866 = vld [vmem:[%s2856 + $0x48] sm:$0xff]
        %v2867 = vld [vmem:[%s2856 + $0x50] sm:$0xff]
        %v2868 = vld [vmem:[%s2856 + $0x58] sm:$0xff]
        %v2869 = vld [vmem:[%s2856 + $0x60] sm:$0xff]
        %v2870 = vld [vmem:[%s2856 + $0x68] sm:$0xff]
        %v2871 = vld [vmem:[%s2856 + $0x70] sm:$0xff]
        %v2872 = vld [vmem:[%s2856 + $0x78] sm:$0xff]
        %v2873 = vld [vmem:[%s2856 + $0x80] sm:$0xff]
        %v2874 = vld [vmem:[%s2856 + $0x88] sm:$0xff]
        %v2875 = vld [vmem:[%s2856 + $0x90] sm:$0xff]
        %v2876 = vld [vmem:[%s2856 + $0x98] sm:$0xff]
        %v2877 = vld [vmem:[%s2856 + $0xa0] sm:$0xff]
        %v2878 = vld [vmem:[%s2856 + $0xa8] sm:$0xff]
        %v2879 = vld [vmem:[%s2856 + $0xb0] sm:$0xff]
        %v2880 = vld [vmem:[%s2856 + $0xb8] sm:$0xff]
        %v2881 = vld [vmem:[%s2856 + $0xc0] sm:$0xff]
        %v2882 = vld [vmem:[%s2856 + $0xc8] sm:$0xff]
        %v2883 = vld [vmem:[%s2856 + $0xd0] sm:$0xff]
        %v2884 = vld [vmem:[%s2856 + $0xd8] sm:$0xff]
        %v2885 = vld [vmem:[%s2856 + $0xe0] sm:$0xff]
        %v2886 = vld [vmem:[%s2856 + $0xe8] sm:$0xff]
        %v2887 = vld [vmem:[%s2856 + $0xf0] sm:$0xff]
        %v2888 = vld [vmem:[%s2856 + $0xf8] sm:$0xff]
        %v2889 = vld [vmem:[#allocation7] sm:$0x1]
        %v2891 = vlaneseq
        %v2892 = vshrl.u32 %v2891, 7
        %v2893 = vsub.s32 0, %v2892
        %v2894 = vrot.slane %v2889, %v2893
        %v2896 = vmul.f32 %v2857, %v2894
        %v2897 = vmul.f32 %v2858, %v2894
        %v2898 = vmul.f32 %v2859, %v2894
        %v2899 = vmul.f32 %v2860, %v2894
        %v2900 = vmul.f32 %v2861, %v2894
        %v2901 = vmul.f32 %v2862, %v2894
        %v2902 = vmul.f32 %v2863, %v2894
        %v2903 = vmul.f32 %v2864, %v2894
        %v2904 = vmul.f32 %v2865, %v2894
        %v2905 = vmul.f32 %v2866, %v2894
        %v2906 = vmul.f32 %v2867, %v2894
        %v2907 = vmul.f32 %v2868, %v2894
        %v2908 = vmul.f32 %v2869, %v2894
        %v2909 = vmul.f32 %v2870, %v2894
        %v2910 = vmul.f32 %v2871, %v2894
        %v2911 = vmul.f32 %v2872, %v2894
        %v2912 = vmul.f32 %v2873, %v2894
        %v2913 = vmul.f32 %v2874, %v2894
        %v2914 = vmul.f32 %v2875, %v2894
        %v2915 = vmul.f32 %v2876, %v2894
        %v2916 = vmul.f32 %v2877, %v2894
        %v2917 = vmul.f32 %v2878, %v2894
        %v2918 = vmul.f32 %v2879, %v2894
        %v2919 = vmul.f32 %v2880, %v2894
        %v2920 = vmul.f32 %v2881, %v2894
        %v2921 = vmul.f32 %v2882, %v2894
        %v2922 = vmul.f32 %v2883, %v2894
        %v2923 = vmul.f32 %v2884, %v2894
        %v2924 = vmul.f32 %v2885, %v2894
        %v2925 = vmul.f32 %v2886, %v2894
        %v2926 = vmul.f32 %v2887, %v2894
        %v2927 = vmul.f32 %v2888, %v2894
        %v2928 = vld [vmem:[#allocation8] sm:$0x1]
        %v2930 = vlaneseq
        %v2931 = vshrl.u32 %v2930, 7
        %v2932 = vsub.s32 0, %v2931
        %v2933 = vrot.slane %v2928, %v2932
        %v2935 = vadd.f32 %v2896, %v2933
        %v2936 = vadd.f32 %v2897, %v2933
        %v2937 = vadd.f32 %v2898, %v2933
        %v2938 = vadd.f32 %v2899, %v2933
        %v2939 = vadd.f32 %v2900, %v2933
        %v2940 = vadd.f32 %v2901, %v2933
        %v2941 = vadd.f32 %v2902, %v2933
        %v2942 = vadd.f32 %v2903, %v2933
        %v2943 = vadd.f32 %v2904, %v2933
        %v2944 = vadd.f32 %v2905, %v2933
        %v2945 = vadd.f32 %v2906, %v2933
        %v2946 = vadd.f32 %v2907, %v2933
        %v2947 = vadd.f32 %v2908, %v2933
        %v2948 = vadd.f32 %v2909, %v2933
        %v2949 = vadd.f32 %v2910, %v2933
        %v2950 = vadd.f32 %v2911, %v2933
        %v2951 = vadd.f32 %v2912, %v2933
        %v2952 = vadd.f32 %v2913, %v2933
        %v2953 = vadd.f32 %v2914, %v2933
        %v2954 = vadd.f32 %v2915, %v2933
        %v2955 = vadd.f32 %v2916, %v2933
        %v2956 = vadd.f32 %v2917, %v2933
        %v2957 = vadd.f32 %v2918, %v2933
        %v2958 = vadd.f32 %v2919, %v2933
        %v2959 = vadd.f32 %v2920, %v2933
        %v2960 = vadd.f32 %v2921, %v2933
        %v2961 = vadd.f32 %v2922, %v2933
        %v2962 = vadd.f32 %v2923, %v2933
        %v2963 = vadd.f32 %v2924, %v2933
        %v2964 = vadd.f32 %v2925, %v2933
        %v2965 = vadd.f32 %v2926, %v2933
        %v2966 = vadd.f32 %v2927, %v2933
        %v2967 = vmax.f32 %v2935, 0.0
        %v2968 = vmax.f32 %v2936, 0.0
        %v2969 = vmax.f32 %v2937, 0.0
        %v2970 = vmax.f32 %v2938, 0.0
        %v2971 = vmax.f32 %v2939, 0.0
        %v2972 = vmax.f32 %v2940, 0.0
        %v2973 = vmax.f32 %v2941, 0.0
        %v2974 = vmax.f32 %v2942, 0.0
        %v2975 = vmax.f32 %v2943, 0.0
        %v2976 = vmax.f32 %v2944, 0.0
        %v2977 = vmax.f32 %v2945, 0.0
        %v2978 = vmax.f32 %v2946, 0.0
        %v2979 = vmax.f32 %v2947, 0.0
        %v2980 = vmax.f32 %v2948, 0.0
        %v2981 = vmax.f32 %v2949, 0.0
        %v2982 = vmax.f32 %v2950, 0.0
        %v2983 = vmax.f32 %v2951, 0.0
        %v2984 = vmax.f32 %v2952, 0.0
        %v2985 = vmax.f32 %v2953, 0.0
        %v2986 = vmax.f32 %v2954, 0.0
        %v2987 = vmax.f32 %v2955, 0.0
        %v2988 = vmax.f32 %v2956, 0.0
        %v2989 = vmax.f32 %v2957, 0.0
        %v2990 = vmax.f32 %v2958, 0.0
        %v2991 = vmax.f32 %v2959, 0.0
        %v2992 = vmax.f32 %v2960, 0.0
        %v2993 = vmax.f32 %v2961, 0.0
        %v2994 = vmax.f32 %v2962, 0.0
        %v2995 = vmax.f32 %v2963, 0.0
        %v2996 = vmax.f32 %v2964, 0.0
        %v2997 = vmax.f32 %v2965, 0.0
        %v2998 = vmax.f32 %v2966, 0.0
        %s2999 = scalar_lea.vmem [#allocation3], 32
        %vm3000 = vcmask 64512
        %3001 = vst.msk [vmem:[%s2999 + $0x8] sm:$0xff] %vm3000, %v2967
        %3002 = vst.msk [vmem:[%s2999 + $0x10] sm:$0xff] %vm3000, %v2968
        %3003 = vst.msk [vmem:[%s2999 + $0x28] sm:$0xff] %vm3000, %v2969
        %3004 = vst.msk [vmem:[%s2999 + $0x30] sm:$0xff] %vm3000, %v2970
        %3005 = vst.msk [vmem:[%s2999 + $0x48] sm:$0xff] %vm3000, %v2971
        %3006 = vst.msk [vmem:[%s2999 + $0x50] sm:$0xff] %vm3000, %v2972
        %3007 = vst.msk [vmem:[%s2999 + $0x68] sm:$0xff] %vm3000, %v2973
        %3008 = vst.msk [vmem:[%s2999 + $0x70] sm:$0xff] %vm3000, %v2974
        %3009 = vst.msk [vmem:[%s2999 + $0x88] sm:$0xff] %vm3000, %v2975
        %3010 = vst.msk [vmem:[%s2999 + $0x90] sm:$0xff] %vm3000, %v2976
        %3011 = vst.msk [vmem:[%s2999 + $0xa8] sm:$0xff] %vm3000, %v2977
        %3012 = vst.msk [vmem:[%s2999 + $0xb0] sm:$0xff] %vm3000, %v2978
        %3013 = vst.msk [vmem:[%s2999 + $0xc8] sm:$0xff] %vm3000, %v2979
        %3014 = vst.msk [vmem:[%s2999 + $0xd0] sm:$0xff] %vm3000, %v2980
        %3015 = vst.msk [vmem:[%s2999 + $0xe8] sm:$0xff] %vm3000, %v2981
        %3016 = vst.msk [vmem:[%s2999 + $0xf0] sm:$0xff] %vm3000, %v2982
        %3017 = vst.msk [vmem:[%s2999 + $0x108] sm:$0xff] %vm3000, %v2983
        %3018 = vst.msk [vmem:[%s2999 + $0x110] sm:$0xff] %vm3000, %v2984
        %3019 = vst.msk [vmem:[%s2999 + $0x128] sm:$0xff] %vm3000, %v2985
        %3020 = vst.msk [vmem:[%s2999 + $0x130] sm:$0xff] %vm3000, %v2986
        %3021 = vst.msk [vmem:[%s2999 + $0x148] sm:$0xff] %vm3000, %v2987
        %3022 = vst.msk [vmem:[%s2999 + $0x150] sm:$0xff] %vm3000, %v2988
        %3023 = vst.msk [vmem:[%s2999 + $0x168] sm:$0xff] %vm3000, %v2989
        %3024 = vst.msk [vmem:[%s2999 + $0x170] sm:$0xff] %vm3000, %v2990
        %3025 = vst.msk [vmem:[%s2999 + $0x188] sm:$0xff] %vm3000, %v2991
        %3026 = vst.msk [vmem:[%s2999 + $0x190] sm:$0xff] %vm3000, %v2992
        %3027 = vst.msk [vmem:[%s2999 + $0x1a8] sm:$0xff] %vm3000, %v2993
        %3028 = vst.msk [vmem:[%s2999 + $0x1b0] sm:$0xff] %vm3000, %v2994
        %3029 = vst.msk [vmem:[%s2999 + $0x1c8] sm:$0xff] %vm3000, %v2995
        %3030 = vst.msk [vmem:[%s2999 + $0x1d0] sm:$0xff] %vm3000, %v2996
        %3031 = vst.msk [vmem:[%s2999 + $0x1e8] sm:$0xff] %vm3000, %v2997
        %3032 = vst.msk [vmem:[%s2999 + $0x1f0] sm:$0xff] %vm3000, %v2998
        %v3033 = vld [vmem:[#allocation3 + $0x7] sm:$0xff]
        %v3034 = vld [vmem:[#allocation3 + $0xf] sm:$0xff]
        %v3035 = vld [vmem:[#allocation3 + $0x27] sm:$0xff]
        %v3036 = vld [vmem:[#allocation3 + $0x2f] sm:$0xff]
        %v3037 = vld [vmem:[#allocation3 + $0x47] sm:$0xff]
        %v3038 = vld [vmem:[#allocation3 + $0x4f] sm:$0xff]
        %v3039 = vld [vmem:[#allocation3 + $0x67] sm:$0xff]
        %v3040 = vld [vmem:[#allocation3 + $0x6f] sm:$0xff]
        %v3041 = vld [vmem:[#allocation3 + $0x87] sm:$0xff]
        %v3042 = vld [vmem:[#allocation3 + $0x8f] sm:$0xff]
        %v3043 = vld [vmem:[#allocation3 + $0xa7] sm:$0xff]
        %v3044 = vld [vmem:[#allocation3 + $0xaf] sm:$0xff]
        %v3045 = vld [vmem:[#allocation3 + $0xc7] sm:$0xff]
        %v3046 = vld [vmem:[#allocation3 + $0xcf] sm:$0xff]
        %v3047 = vld [vmem:[#allocation3 + $0xe7] sm:$0xff]
        %v3048 = vld [vmem:[#allocation3 + $0xef] sm:$0xff]
        %v3049 = vld [vmem:[#allocation3 + $0x107] sm:$0xff]
        %v3050 = vld [vmem:[#allocation3 + $0x10f] sm:$0xff]
        %v3051 = vld [vmem:[#allocation3 + $0x127] sm:$0xff]
        %v3052 = vld [vmem:[#allocation3 + $0x12f] sm:$0xff]
        %v3053 = vld [vmem:[#allocation3 + $0x147] sm:$0xff]
        %v3054 = vld [vmem:[#allocation3 + $0x14f] sm:$0xff]
        %v3055 = vld [vmem:[#allocation3 + $0x167] sm:$0xff]
        %v3056 = vld [vmem:[#allocation3 + $0x16f] sm:$0xff]
        %v3057 = vld [vmem:[#allocation3 + $0x187] sm:$0xff]
        %v3058 = vld [vmem:[#allocation3 + $0x18f] sm:$0xff]
        %v3059 = vld [vmem:[#allocation3 + $0x1a7] sm:$0xff]
        %v3060 = vld [vmem:[#allocation3 + $0x1af] sm:$0xff]
        %v3061 = vld [vmem:[#allocation3 + $0x1c7] sm:$0xff]
        %v3062 = vld [vmem:[#allocation3 + $0x1cf] sm:$0xff]
        %v3063 = vld [vmem:[#allocation3 + $0x1e7] sm:$0xff]
        %v3064 = vld [vmem:[#allocation3 + $0x1ef] sm:$0xff]
        %v3065 = vld [vmem:[#allocation3 + $0x8] sm:$0xff]
        %v3066 = vld [vmem:[#allocation3 + $0x10] sm:$0xff]
        %v3067 = vld [vmem:[#allocation3 + $0x28] sm:$0xff]
        %v3068 = vld [vmem:[#allocation3 + $0x30] sm:$0xff]
        %v3069 = vld [vmem:[#allocation3 + $0x48] sm:$0xff]
        %v3070 = vld [vmem:[#allocation3 + $0x50] sm:$0xff]
        %v3071 = vld [vmem:[#allocation3 + $0x68] sm:$0xff]
        %v3072 = vld [vmem:[#allocation3 + $0x70] sm:$0xff]
        %v3073 = vld [vmem:[#allocation3 + $0x88] sm:$0xff]
        %v3074 = vld [vmem:[#allocation3 + $0x90] sm:$0xff]
        %v3075 = vld [vmem:[#allocation3 + $0xa8] sm:$0xff]
        %v3076 = vld [vmem:[#allocation3 + $0xb0] sm:$0xff]
        %v3077 = vld [vmem:[#allocation3 + $0xc8] sm:$0xff]
        %v3078 = vld [vmem:[#allocation3 + $0xd0] sm:$0xff]
        %v3079 = vld [vmem:[#allocation3 + $0xe8] sm:$0xff]
        %v3080 = vld [vmem:[#allocation3 + $0xf0] sm:$0xff]
        %v3081 = vld [vmem:[#allocation3 + $0x108] sm:$0xff]
        %v3082 = vld [vmem:[#allocation3 + $0x110] sm:$0xff]
        %v3083 = vld [vmem:[#allocation3 + $0x128] sm:$0xff]
        %v3084 = vld [vmem:[#allocation3 + $0x130] sm:$0xff]
        %v3085 = vld [vmem:[#allocation3 + $0x148] sm:$0xff]
        %v3086 = vld [vmem:[#allocation3 + $0x150] sm:$0xff]
        %v3087 = vld [vmem:[#allocation3 + $0x168] sm:$0xff]
        %v3088 = vld [vmem:[#allocation3 + $0x170] sm:$0xff]
        %v3089 = vld [vmem:[#allocation3 + $0x188] sm:$0xff]
        %v3090 = vld [vmem:[#allocation3 + $0x190] sm:$0xff]
        %v3091 = vld [vmem:[#allocation3 + $0x1a8] sm:$0xff]
        %v3092 = vld [vmem:[#allocation3 + $0x1b0] sm:$0xff]
        %v3093 = vld [vmem:[#allocation3 + $0x1c8] sm:$0xff]
        %v3094 = vld [vmem:[#allocation3 + $0x1d0] sm:$0xff]
        %v3095 = vld [vmem:[#allocation3 + $0x1e8] sm:$0xff]
        %v3096 = vld [vmem:[#allocation3 + $0x1f0] sm:$0xff]
        %v3097 = vld [vmem:[#allocation3 + $0x9] sm:$0xff]
        %v3098 = vld [vmem:[#allocation3 + $0x11] sm:$0xff]
        %v3099 = vld [vmem:[#allocation3 + $0x29] sm:$0xff]
        %v3100 = vld [vmem:[#allocation3 + $0x31] sm:$0xff]
        %v3101 = vld [vmem:[#allocation3 + $0x49] sm:$0xff]
        %v3102 = vld [vmem:[#allocation3 + $0x51] sm:$0xff]
        %v3103 = vld [vmem:[#allocation3 + $0x69] sm:$0xff]
        %v3104 = vld [vmem:[#allocation3 + $0x71] sm:$0xff]
        %v3105 = vld [vmem:[#allocation3 + $0x89] sm:$0xff]
        %v3106 = vld [vmem:[#allocation3 + $0x91] sm:$0xff]
        %v3107 = vld [vmem:[#allocation3 + $0xa9] sm:$0xff]
        %v3108 = vld [vmem:[#allocation3 + $0xb1] sm:$0xff]
        %v3109 = vld [vmem:[#allocation3 + $0xc9] sm:$0xff]
        %v3110 = vld [vmem:[#allocation3 + $0xd1] sm:$0xff]
        %v3111 = vld [vmem:[#allocation3 + $0xe9] sm:$0xff]
        %v3112 = vld [vmem:[#allocation3 + $0xf1] sm:$0xff]
        %v3113 = vld [vmem:[#allocation3 + $0x109] sm:$0xff]
        %v3114 = vld [vmem:[#allocation3 + $0x111] sm:$0xff]
        %v3115 = vld [vmem:[#allocation3 + $0x129] sm:$0xff]
        %v3116 = vld [vmem:[#allocation3 + $0x131] sm:$0xff]
        %v3117 = vld [vmem:[#allocation3 + $0x149] sm:$0xff]
        %v3118 = vld [vmem:[#allocation3 + $0x151] sm:$0xff]
        %v3119 = vld [vmem:[#allocation3 + $0x169] sm:$0xff]
        %v3120 = vld [vmem:[#allocation3 + $0x171] sm:$0xff]
        %v3121 = vld [vmem:[#allocation3 + $0x189] sm:$0xff]
        %v3122 = vld [vmem:[#allocation3 + $0x191] sm:$0xff]
        %v3123 = vld [vmem:[#allocation3 + $0x1a9] sm:$0xff]
        %v3124 = vld [vmem:[#allocation3 + $0x1b1] sm:$0xff]
        %v3125 = vld [vmem:[#allocation3 + $0x1c9] sm:$0xff]
        %v3126 = vld [vmem:[#allocation3 + $0x1d1] sm:$0xff]
        %v3127 = vld [vmem:[#allocation3 + $0x1e9] sm:$0xff]
        %v3128 = vld [vmem:[#allocation3 + $0x1f1] sm:$0xff]
        %v3129 = vld [vmem:[%s2999 + $0x7] sm:$0xff]
        %v3130 = vld [vmem:[%s2999 + $0xf] sm:$0xff]
        %v3131 = vld [vmem:[%s2999 + $0x27] sm:$0xff]
        %v3132 = vld [vmem:[%s2999 + $0x2f] sm:$0xff]
        %v3133 = vld [vmem:[%s2999 + $0x47] sm:$0xff]
        %v3134 = vld [vmem:[%s2999 + $0x4f] sm:$0xff]
        %v3135 = vld [vmem:[%s2999 + $0x67] sm:$0xff]
        %v3136 = vld [vmem:[%s2999 + $0x6f] sm:$0xff]
        %v3137 = vld [vmem:[%s2999 + $0x87] sm:$0xff]
        %v3138 = vld [vmem:[%s2999 + $0x8f] sm:$0xff]
        %v3139 = vld [vmem:[%s2999 + $0xa7] sm:$0xff]
        %v3140 = vld [vmem:[%s2999 + $0xaf] sm:$0xff]
        %v3141 = vld [vmem:[%s2999 + $0xc7] sm:$0xff]
        %v3142 = vld [vmem:[%s2999 + $0xcf] sm:$0xff]
        %v3143 = vld [vmem:[%s2999 + $0xe7] sm:$0xff]
        %v3144 = vld [vmem:[%s2999 + $0xef] sm:$0xff]
        %v3145 = vld [vmem:[%s2999 + $0x107] sm:$0xff]
        %v3146 = vld [vmem:[%s2999 + $0x10f] sm:$0xff]
        %v3147 = vld [vmem:[%s2999 + $0x127] sm:$0xff]
        %v3148 = vld [vmem:[%s2999 + $0x12f] sm:$0xff]
        %v3149 = vld [vmem:[%s2999 + $0x147] sm:$0xff]
        %v3150 = vld [vmem:[%s2999 + $0x14f] sm:$0xff]
        %v3151 = vld [vmem:[%s2999 + $0x167] sm:$0xff]
        %v3152 = vld [vmem:[%s2999 + $0x16f] sm:$0xff]
        %v3153 = vld [vmem:[%s2999 + $0x187] sm:$0xff]
        %v3154 = vld [vmem:[%s2999 + $0x18f] sm:$0xff]
        %v3155 = vld [vmem:[%s2999 + $0x1a7] sm:$0xff]
        %v3156 = vld [vmem:[%s2999 + $0x1af] sm:$0xff]
        %v3157 = vld [vmem:[%s2999 + $0x1c7] sm:$0xff]
        %v3158 = vld [vmem:[%s2999 + $0x1cf] sm:$0xff]
        %v3159 = vld [vmem:[%s2999 + $0x1e7] sm:$0xff]
        %v3160 = vld [vmem:[%s2999 + $0x1ef] sm:$0xff]
        %v3161 = vld [vmem:[%s2999 + $0x8] sm:$0xff]
        %v3162 = vld [vmem:[%s2999 + $0x10] sm:$0xff]
        %v3163 = vld [vmem:[%s2999 + $0x28] sm:$0xff]
        %v3164 = vld [vmem:[%s2999 + $0x30] sm:$0xff]
        %v3165 = vld [vmem:[%s2999 + $0x48] sm:$0xff]
        %v3166 = vld [vmem:[%s2999 + $0x50] sm:$0xff]
        %v3167 = vld [vmem:[%s2999 + $0x68] sm:$0xff]
        %v3168 = vld [vmem:[%s2999 + $0x70] sm:$0xff]
        %v3169 = vld [vmem:[%s2999 + $0x88] sm:$0xff]
        %v3170 = vld [vmem:[%s2999 + $0x90] sm:$0xff]
        %v3171 = vld [vmem:[%s2999 + $0xa8] sm:$0xff]
        %v3172 = vld [vmem:[%s2999 + $0xb0] sm:$0xff]
        %v3173 = vld [vmem:[%s2999 + $0xc8] sm:$0xff]
        %v3174 = vld [vmem:[%s2999 + $0xd0] sm:$0xff]
        %v3175 = vld [vmem:[%s2999 + $0xe8] sm:$0xff]
        %v3176 = vld [vmem:[%s2999 + $0xf0] sm:$0xff]
        %v3177 = vld [vmem:[%s2999 + $0x108] sm:$0xff]
        %v3178 = vld [vmem:[%s2999 + $0x110] sm:$0xff]
        %v3179 = vld [vmem:[%s2999 + $0x128] sm:$0xff]
        %v3180 = vld [vmem:[%s2999 + $0x130] sm:$0xff]
        %v3181 = vld [vmem:[%s2999 + $0x148] sm:$0xff]
        %v3182 = vld [vmem:[%s2999 + $0x150] sm:$0xff]
        %v3183 = vld [vmem:[%s2999 + $0x168] sm:$0xff]
        %v3184 = vld [vmem:[%s2999 + $0x170] sm:$0xff]
        %v3185 = vld [vmem:[%s2999 + $0x188] sm:$0xff]
        %v3186 = vld [vmem:[%s2999 + $0x190] sm:$0xff]
        %v3187 = vld [vmem:[%s2999 + $0x1a8] sm:$0xff]
        %v3188 = vld [vmem:[%s2999 + $0x1b0] sm:$0xff]
        %v3189 = vld [vmem:[%s2999 + $0x1c8] sm:$0xff]
        %v3190 = vld [vmem:[%s2999 + $0x1d0] sm:$0xff]
        %v3191 = vld [vmem:[%s2999 + $0x1e8] sm:$0xff]
        %v3192 = vld [vmem:[%s2999 + $0x1f0] sm:$0xff]
        %v3193 = vld [vmem:[%s2999 + $0x9] sm:$0xff]
        %v3194 = vld [vmem:[%s2999 + $0x11] sm:$0xff]
        %v3195 = vld [vmem:[%s2999 + $0x29] sm:$0xff]
        %v3196 = vld [vmem:[%s2999 + $0x31] sm:$0xff]
        %v3197 = vld [vmem:[%s2999 + $0x49] sm:$0xff]
        %v3198 = vld [vmem:[%s2999 + $0x51] sm:$0xff]
        %v3199 = vld [vmem:[%s2999 + $0x69] sm:$0xff]
        %v3200 = vld [vmem:[%s2999 + $0x71] sm:$0xff]
        %v3201 = vld [vmem:[%s2999 + $0x89] sm:$0xff]
        %v3202 = vld [vmem:[%s2999 + $0x91] sm:$0xff]
        %v3203 = vld [vmem:[%s2999 + $0xa9] sm:$0xff]
        %v3204 = vld [vmem:[%s2999 + $0xb1] sm:$0xff]
        %v3205 = vld [vmem:[%s2999 + $0xc9] sm:$0xff]
        %v3206 = vld [vmem:[%s2999 + $0xd1] sm:$0xff]
        %v3207 = vld [vmem:[%s2999 + $0xe9] sm:$0xff]
        %v3208 = vld [vmem:[%s2999 + $0xf1] sm:$0xff]
        %v3209 = vld [vmem:[%s2999 + $0x109] sm:$0xff]
        %v3210 = vld [vmem:[%s2999 + $0x111] sm:$0xff]
        %v3211 = vld [vmem:[%s2999 + $0x129] sm:$0xff]
        %v3212 = vld [vmem:[%s2999 + $0x131] sm:$0xff]
        %v3213 = vld [vmem:[%s2999 + $0x149] sm:$0xff]
        %v3214 = vld [vmem:[%s2999 + $0x151] sm:$0xff]
        %v3215 = vld [vmem:[%s2999 + $0x169] sm:$0xff]
        %v3216 = vld [vmem:[%s2999 + $0x171] sm:$0xff]
        %v3217 = vld [vmem:[%s2999 + $0x189] sm:$0xff]
        %v3218 = vld [vmem:[%s2999 + $0x191] sm:$0xff]
        %v3219 = vld [vmem:[%s2999 + $0x1a9] sm:$0xff]
        %v3220 = vld [vmem:[%s2999 + $0x1b1] sm:$0xff]
        %v3221 = vld [vmem:[%s2999 + $0x1c9] sm:$0xff]
        %v3222 = vld [vmem:[%s2999 + $0x1d1] sm:$0xff]
        %v3223 = vld [vmem:[%s2999 + $0x1e9] sm:$0xff]
        %v3224 = vld [vmem:[%s2999 + $0x1f1] sm:$0xff]
        %s3225 = scalar_lea.vmem [#allocation3], 64
        %v3226 = vld [vmem:[%s3225 + $0x7] sm:$0xff]
        %v3227 = vld [vmem:[%s3225 + $0xf] sm:$0xff]
        %v3228 = vld [vmem:[%s3225 + $0x27] sm:$0xff]
        %v3229 = vld [vmem:[%s3225 + $0x2f] sm:$0xff]
        %v3230 = vld [vmem:[%s3225 + $0x47] sm:$0xff]
        %v3231 = vld [vmem:[%s3225 + $0x4f] sm:$0xff]
        %v3232 = vld [vmem:[%s3225 + $0x67] sm:$0xff]
        %v3233 = vld [vmem:[%s3225 + $0x6f] sm:$0xff]
        %v3234 = vld [vmem:[%s3225 + $0x87] sm:$0xff]
        %v3235 = vld [vmem:[%s3225 + $0x8f] sm:$0xff]
        %v3236 = vld [vmem:[%s3225 + $0xa7] sm:$0xff]
        %v3237 = vld [vmem:[%s3225 + $0xaf] sm:$0xff]
        %v3238 = vld [vmem:[%s3225 + $0xc7] sm:$0xff]
        %v3239 = vld [vmem:[%s3225 + $0xcf] sm:$0xff]
        %v3240 = vld [vmem:[%s3225 + $0xe7] sm:$0xff]
        %v3241 = vld [vmem:[%s3225 + $0xef] sm:$0xff]
        %v3242 = vld [vmem:[%s3225 + $0x107] sm:$0xff]
        %v3243 = vld [vmem:[%s3225 + $0x10f] sm:$0xff]
        %v3244 = vld [vmem:[%s3225 + $0x127] sm:$0xff]
        %v3245 = vld [vmem:[%s3225 + $0x12f] sm:$0xff]
        %v3246 = vld [vmem:[%s3225 + $0x147] sm:$0xff]
        %v3247 = vld [vmem:[%s3225 + $0x14f] sm:$0xff]
        %v3248 = vld [vmem:[%s3225 + $0x167] sm:$0xff]
        %v3249 = vld [vmem:[%s3225 + $0x16f] sm:$0xff]
        %v3250 = vld [vmem:[%s3225 + $0x187] sm:$0xff]
        %v3251 = vld [vmem:[%s3225 + $0x18f] sm:$0xff]
        %v3252 = vld [vmem:[%s3225 + $0x1a7] sm:$0xff]
        %v3253 = vld [vmem:[%s3225 + $0x1af] sm:$0xff]
        %v3254 = vld [vmem:[%s3225 + $0x1c7] sm:$0xff]
        %v3255 = vld [vmem:[%s3225 + $0x1cf] sm:$0xff]
        %v3256 = vld [vmem:[%s3225 + $0x1e7] sm:$0xff]
        %v3257 = vld [vmem:[%s3225 + $0x1ef] sm:$0xff]
        %v3258 = vld [vmem:[%s3225 + $0x8] sm:$0xff]
        %v3259 = vld [vmem:[%s3225 + $0x10] sm:$0xff]
        %v3260 = vld [vmem:[%s3225 + $0x28] sm:$0xff]
        %v3261 = vld [vmem:[%s3225 + $0x30] sm:$0xff]
        %v3262 = vld [vmem:[%s3225 + $0x48] sm:$0xff]
        %v3263 = vld [vmem:[%s3225 + $0x50] sm:$0xff]
        %v3264 = vld [vmem:[%s3225 + $0x68] sm:$0xff]
        %v3265 = vld [vmem:[%s3225 + $0x70] sm:$0xff]
        %v3266 = vld [vmem:[%s3225 + $0x88] sm:$0xff]
        %v3267 = vld [vmem:[%s3225 + $0x90] sm:$0xff]
        %v3268 = vld [vmem:[%s3225 + $0xa8] sm:$0xff]
        %v3269 = vld [vmem:[%s3225 + $0xb0] sm:$0xff]
        %v3270 = vld [vmem:[%s3225 + $0xc8] sm:$0xff]
        %v3271 = vld [vmem:[%s3225 + $0xd0] sm:$0xff]
        %v3272 = vld [vmem:[%s3225 + $0xe8] sm:$0xff]
        %v3273 = vld [vmem:[%s3225 + $0xf0] sm:$0xff]
        %v3274 = vld [vmem:[%s3225 + $0x108] sm:$0xff]
        %v3275 = vld [vmem:[%s3225 + $0x110] sm:$0xff]
        %v3276 = vld [vmem:[%s3225 + $0x128] sm:$0xff]
        %v3277 = vld [vmem:[%s3225 + $0x130] sm:$0xff]
        %v3278 = vld [vmem:[%s3225 + $0x148] sm:$0xff]
        %v3279 = vld [vmem:[%s3225 + $0x150] sm:$0xff]
        %v3280 = vld [vmem:[%s3225 + $0x168] sm:$0xff]
        %v3281 = vld [vmem:[%s3225 + $0x170] sm:$0xff]
        %v3282 = vld [vmem:[%s3225 + $0x188] sm:$0xff]
        %v3283 = vld [vmem:[%s3225 + $0x190] sm:$0xff]
        %v3284 = vld [vmem:[%s3225 + $0x1a8] sm:$0xff]
        %v3285 = vld [vmem:[%s3225 + $0x1b0] sm:$0xff]
        %v3286 = vld [vmem:[%s3225 + $0x1c8] sm:$0xff]
        %v3287 = vld [vmem:[%s3225 + $0x1d0] sm:$0xff]
        %v3288 = vld [vmem:[%s3225 + $0x1e8] sm:$0xff]
        %v3289 = vld [vmem:[%s3225 + $0x1f0] sm:$0xff]
        %v3290 = vld [vmem:[%s3225 + $0x9] sm:$0xff]
        %v3291 = vld [vmem:[%s3225 + $0x11] sm:$0xff]
        %v3292 = vld [vmem:[%s3225 + $0x29] sm:$0xff]
        %v3293 = vld [vmem:[%s3225 + $0x31] sm:$0xff]
        %v3294 = vld [vmem:[%s3225 + $0x49] sm:$0xff]
        %v3295 = vld [vmem:[%s3225 + $0x51] sm:$0xff]
        %v3296 = vld [vmem:[%s3225 + $0x69] sm:$0xff]
        %v3297 = vld [vmem:[%s3225 + $0x71] sm:$0xff]
        %v3298 = vld [vmem:[%s3225 + $0x89] sm:$0xff]
        %v3299 = vld [vmem:[%s3225 + $0x91] sm:$0xff]
        %v3300 = vld [vmem:[%s3225 + $0xa9] sm:$0xff]
        %v3301 = vld [vmem:[%s3225 + $0xb1] sm:$0xff]
        %v3302 = vld [vmem:[%s3225 + $0xc9] sm:$0xff]
        %v3303 = vld [vmem:[%s3225 + $0xd1] sm:$0xff]
        %v3304 = vld [vmem:[%s3225 + $0xe9] sm:$0xff]
        %v3305 = vld [vmem:[%s3225 + $0xf1] sm:$0xff]
        %v3306 = vld [vmem:[%s3225 + $0x109] sm:$0xff]
        %v3307 = vld [vmem:[%s3225 + $0x111] sm:$0xff]
        %v3308 = vld [vmem:[%s3225 + $0x129] sm:$0xff]
        %v3309 = vld [vmem:[%s3225 + $0x131] sm:$0xff]
        %v3310 = vld [vmem:[%s3225 + $0x149] sm:$0xff]
        %v3311 = vld [vmem:[%s3225 + $0x151] sm:$0xff]
        %v3312 = vld [vmem:[%s3225 + $0x169] sm:$0xff]
        %v3313 = vld [vmem:[%s3225 + $0x171] sm:$0xff]
        %v3314 = vld [vmem:[%s3225 + $0x189] sm:$0xff]
        %v3315 = vld [vmem:[%s3225 + $0x191] sm:$0xff]
        %v3316 = vld [vmem:[%s3225 + $0x1a9] sm:$0xff]
        %v3317 = vld [vmem:[%s3225 + $0x1b1] sm:$0xff]
        %v3318 = vld [vmem:[%s3225 + $0x1c9] sm:$0xff]
        %v3319 = vld [vmem:[%s3225 + $0x1d1] sm:$0xff]
        %v3320 = vld [vmem:[%s3225 + $0x1e9] sm:$0xff]
        %v3321 = vld [vmem:[%s3225 + $0x1f1] sm:$0xff]
        %3354 = vrot.lane.b32.xlu0 %v3065, 8
        %v3355 = vpop.permute.xlu0 %3354
        %3356 = vrot.lane.b32.xlu0 %v3066, 8
        %v3357 = vpop.permute.xlu0 %3356
        %3358 = vrot.lane.b32.xlu0 %v3067, 8
        %v3359 = vpop.permute.xlu0 %3358
        %3360 = vrot.lane.b32.xlu0 %v3068, 8
        %v3361 = vpop.permute.xlu0 %3360
        %3362 = vrot.lane.b32.xlu0 %v3069, 8
        %v3363 = vpop.permute.xlu0 %3362
        %3364 = vrot.lane.b32.xlu0 %v3070, 8
        %v3365 = vpop.permute.xlu0 %3364
        %3366 = vrot.lane.b32.xlu0 %v3071, 8
        %v3367 = vpop.permute.xlu0 %3366
        %3368 = vrot.lane.b32.xlu0 %v3072, 8
        %v3369 = vpop.permute.xlu0 %3368
        %3370 = vrot.lane.b32.xlu0 %v3073, 8
        %v3371 = vpop.permute.xlu0 %3370
        %3372 = vrot.lane.b32.xlu0 %v3074, 8
        %v3373 = vpop.permute.xlu0 %3372
        %3374 = vrot.lane.b32.xlu0 %v3075, 8
        %v3375 = vpop.permute.xlu0 %3374
        %3376 = vrot.lane.b32.xlu0 %v3076, 8
        %v3377 = vpop.permute.xlu0 %3376
        %3378 = vrot.lane.b32.xlu0 %v3077, 8
        %v3379 = vpop.permute.xlu0 %3378
        %3380 = vrot.lane.b32.xlu0 %v3078, 8
        %v3381 = vpop.permute.xlu0 %3380
        %3382 = vrot.lane.b32.xlu0 %v3079, 8
        %v3383 = vpop.permute.xlu0 %3382
        %3384 = vrot.lane.b32.xlu0 %v3080, 8
        %v3385 = vpop.permute.xlu0 %3384
        %3386 = vrot.lane.b32.xlu0 %v3081, 8
        %v3387 = vpop.permute.xlu0 %3386
        %3388 = vrot.lane.b32.xlu0 %v3082, 8
        %v3389 = vpop.permute.xlu0 %3388
        %3390 = vrot.lane.b32.xlu0 %v3083, 8
        %v3391 = vpop.permute.xlu0 %3390
        %3392 = vrot.lane.b32.xlu0 %v3084, 8
        %v3393 = vpop.permute.xlu0 %3392
        %3394 = vrot.lane.b32.xlu0 %v3085, 8
        %v3395 = vpop.permute.xlu0 %3394
        %3396 = vrot.lane.b32.xlu0 %v3086, 8
        %v3397 = vpop.permute.xlu0 %3396
        %3398 = vrot.lane.b32.xlu0 %v3087, 8
        %v3399 = vpop.permute.xlu0 %3398
        %3400 = vrot.lane.b32.xlu0 %v3088, 8
        %v3401 = vpop.permute.xlu0 %3400
        %3402 = vrot.lane.b32.xlu0 %v3089, 8
        %v3403 = vpop.permute.xlu0 %3402
        %3404 = vrot.lane.b32.xlu0 %v3090, 8
        %v3405 = vpop.permute.xlu0 %3404
        %3406 = vrot.lane.b32.xlu0 %v3091, 8
        %v3407 = vpop.permute.xlu0 %3406
        %3408 = vrot.lane.b32.xlu0 %v3092, 8
        %v3409 = vpop.permute.xlu0 %3408
        %3410 = vrot.lane.b32.xlu0 %v3093, 8
        %v3411 = vpop.permute.xlu0 %3410
        %3412 = vrot.lane.b32.xlu0 %v3094, 8
        %v3413 = vpop.permute.xlu0 %3412
        %3414 = vrot.lane.b32.xlu0 %v3095, 8
        %v3415 = vpop.permute.xlu0 %3414
        %3416 = vrot.lane.b32.xlu0 %v3096, 8
        %v3417 = vpop.permute.xlu0 %3416
        %3482 = vrot.lane.b32.xlu0 %v3097, 16
        %v3483 = vpop.permute.xlu0 %3482
        %3484 = vrot.lane.b32.xlu0 %v3098, 16
        %v3485 = vpop.permute.xlu0 %3484
        %3486 = vrot.lane.b32.xlu0 %v3099, 16
        %v3487 = vpop.permute.xlu0 %3486
        %3488 = vrot.lane.b32.xlu0 %v3100, 16
        %v3489 = vpop.permute.xlu0 %3488
        %3490 = vrot.lane.b32.xlu0 %v3101, 16
        %v3491 = vpop.permute.xlu0 %3490
        %3492 = vrot.lane.b32.xlu0 %v3102, 16
        %v3493 = vpop.permute.xlu0 %3492
        %3494 = vrot.lane.b32.xlu0 %v3103, 16
        %v3495 = vpop.permute.xlu0 %3494
        %3496 = vrot.lane.b32.xlu0 %v3104, 16
        %v3497 = vpop.permute.xlu0 %3496
        %3498 = vrot.lane.b32.xlu0 %v3105, 16
        %v3499 = vpop.permute.xlu0 %3498
        %3500 = vrot.lane.b32.xlu0 %v3106, 16
        %v3501 = vpop.permute.xlu0 %3500
        %3502 = vrot.lane.b32.xlu0 %v3107, 16
        %v3503 = vpop.permute.xlu0 %3502
        %3504 = vrot.lane.b32.xlu0 %v3108, 16
        %v3505 = vpop.permute.xlu0 %3504
        %3506 = vrot.lane.b32.xlu0 %v3109, 16
        %v3507 = vpop.permute.xlu0 %3506
        %3508 = vrot.lane.b32.xlu0 %v3110, 16
        %v3509 = vpop.permute.xlu0 %3508
        %3510 = vrot.lane.b32.xlu0 %v3111, 16
        %v3511 = vpop.permute.xlu0 %3510
        %3512 = vrot.lane.b32.xlu0 %v3112, 16
        %v3513 = vpop.permute.xlu0 %3512
        %3514 = vrot.lane.b32.xlu0 %v3113, 16
        %v3515 = vpop.permute.xlu0 %3514
        %3516 = vrot.lane.b32.xlu0 %v3114, 16
        %v3517 = vpop.permute.xlu0 %3516
        %3518 = vrot.lane.b32.xlu0 %v3115, 16
        %v3519 = vpop.permute.xlu0 %3518
        %3520 = vrot.lane.b32.xlu0 %v3116, 16
        %v3521 = vpop.permute.xlu0 %3520
        %3522 = vrot.lane.b32.xlu0 %v3117, 16
        %v3523 = vpop.permute.xlu0 %3522
        %3524 = vrot.lane.b32.xlu0 %v3118, 16
        %v3525 = vpop.permute.xlu0 %3524
        %3526 = vrot.lane.b32.xlu0 %v3119, 16
        %v3527 = vpop.permute.xlu0 %3526
        %3528 = vrot.lane.b32.xlu0 %v3120, 16
        %v3529 = vpop.permute.xlu0 %3528
        %3530 = vrot.lane.b32.xlu0 %v3121, 16
        %v3531 = vpop.permute.xlu0 %3530
        %3532 = vrot.lane.b32.xlu0 %v3122, 16
        %v3533 = vpop.permute.xlu0 %3532
        %3534 = vrot.lane.b32.xlu0 %v3123, 16
        %v3535 = vpop.permute.xlu0 %3534
        %3536 = vrot.lane.b32.xlu0 %v3124, 16
        %v3537 = vpop.permute.xlu0 %3536
        %3538 = vrot.lane.b32.xlu0 %v3125, 16
        %v3539 = vpop.permute.xlu0 %3538
        %3540 = vrot.lane.b32.xlu0 %v3126, 16
        %v3541 = vpop.permute.xlu0 %3540
        %3542 = vrot.lane.b32.xlu0 %v3127, 16
        %v3543 = vpop.permute.xlu0 %3542
        %3544 = vrot.lane.b32.xlu0 %v3128, 16
        %v3545 = vpop.permute.xlu0 %3544
        %3610 = vrot.lane.b32.xlu0 %v3129, 24
        %v3611 = vpop.permute.xlu0 %3610
        %3612 = vrot.lane.b32.xlu0 %v3130, 24
        %v3613 = vpop.permute.xlu0 %3612
        %3614 = vrot.lane.b32.xlu0 %v3131, 24
        %v3615 = vpop.permute.xlu0 %3614
        %3616 = vrot.lane.b32.xlu0 %v3132, 24
        %v3617 = vpop.permute.xlu0 %3616
        %3618 = vrot.lane.b32.xlu0 %v3133, 24
        %v3619 = vpop.permute.xlu0 %3618
        %3620 = vrot.lane.b32.xlu0 %v3134, 24
        %v3621 = vpop.permute.xlu0 %3620
        %3622 = vrot.lane.b32.xlu0 %v3135, 24
        %v3623 = vpop.permute.xlu0 %3622
        %3624 = vrot.lane.b32.xlu0 %v3136, 24
        %v3625 = vpop.permute.xlu0 %3624
        %3626 = vrot.lane.b32.xlu0 %v3137, 24
        %v3627 = vpop.permute.xlu0 %3626
        %3628 = vrot.lane.b32.xlu0 %v3138, 24
        %v3629 = vpop.permute.xlu0 %3628
        %3630 = vrot.lane.b32.xlu0 %v3139, 24
        %v3631 = vpop.permute.xlu0 %3630
        %3632 = vrot.lane.b32.xlu0 %v3140, 24
        %v3633 = vpop.permute.xlu0 %3632
        %3634 = vrot.lane.b32.xlu0 %v3141, 24
        %v3635 = vpop.permute.xlu0 %3634
        %3636 = vrot.lane.b32.xlu0 %v3142, 24
        %v3637 = vpop.permute.xlu0 %3636
        %3638 = vrot.lane.b32.xlu0 %v3143, 24
        %v3639 = vpop.permute.xlu0 %3638
        %3640 = vrot.lane.b32.xlu0 %v3144, 24
        %v3641 = vpop.permute.xlu0 %3640
        %3642 = vrot.lane.b32.xlu0 %v3145, 24
        %v3643 = vpop.permute.xlu0 %3642
        %3644 = vrot.lane.b32.xlu0 %v3146, 24
        %v3645 = vpop.permute.xlu0 %3644
        %3646 = vrot.lane.b32.xlu0 %v3147, 24
        %v3647 = vpop.permute.xlu0 %3646
        %3648 = vrot.lane.b32.xlu0 %v3148, 24
        %v3649 = vpop.permute.xlu0 %3648
        %3650 = vrot.lane.b32.xlu0 %v3149, 24
        %v3651 = vpop.permute.xlu0 %3650
        %3652 = vrot.lane.b32.xlu0 %v3150, 24
        %v3653 = vpop.permute.xlu0 %3652
        %3654 = vrot.lane.b32.xlu0 %v3151, 24
        %v3655 = vpop.permute.xlu0 %3654
        %3656 = vrot.lane.b32.xlu0 %v3152, 24
        %v3657 = vpop.permute.xlu0 %3656
        %3658 = vrot.lane.b32.xlu0 %v3153, 24
        %v3659 = vpop.permute.xlu0 %3658
        %3660 = vrot.lane.b32.xlu0 %v3154, 24
        %v3661 = vpop.permute.xlu0 %3660
        %3662 = vrot.lane.b32.xlu0 %v3155, 24
        %v3663 = vpop.permute.xlu0 %3662
        %3664 = vrot.lane.b32.xlu0 %v3156, 24
        %v3665 = vpop.permute.xlu0 %3664
        %3666 = vrot.lane.b32.xlu0 %v3157, 24
        %v3667 = vpop.permute.xlu0 %3666
        %3668 = vrot.lane.b32.xlu0 %v3158, 24
        %v3669 = vpop.permute.xlu0 %3668
        %3670 = vrot.lane.b32.xlu0 %v3159, 24
        %v3671 = vpop.permute.xlu0 %3670
        %3672 = vrot.lane.b32.xlu0 %v3160, 24
        %v3673 = vpop.permute.xlu0 %3672
        %3738 = vrot.lane.b32.xlu0 %v3161, 32
        %v3739 = vpop.permute.xlu0 %3738
        %3740 = vrot.lane.b32.xlu0 %v3162, 32
        %v3741 = vpop.permute.xlu0 %3740
        %3742 = vrot.lane.b32.xlu0 %v3163, 32
        %v3743 = vpop.permute.xlu0 %3742
        %3744 = vrot.lane.b32.xlu0 %v3164, 32
        %v3745 = vpop.permute.xlu0 %3744
        %3746 = vrot.lane.b32.xlu0 %v3165, 32
        %v3747 = vpop.permute.xlu0 %3746
        %3748 = vrot.lane.b32.xlu0 %v3166, 32
        %v3749 = vpop.permute.xlu0 %3748
        %3750 = vrot.lane.b32.xlu0 %v3167, 32
        %v3751 = vpop.permute.xlu0 %3750
        %3752 = vrot.lane.b32.xlu0 %v3168, 32
        %v3753 = vpop.permute.xlu0 %3752
        %3754 = vrot.lane.b32.xlu0 %v3169, 32
        %v3755 = vpop.permute.xlu0 %3754
        %3756 = vrot.lane.b32.xlu0 %v3170, 32
        %v3757 = vpop.permute.xlu0 %3756
        %3758 = vrot.lane.b32.xlu0 %v3171, 32
        %v3759 = vpop.permute.xlu0 %3758
        %3760 = vrot.lane.b32.xlu0 %v3172, 32
        %v3761 = vpop.permute.xlu0 %3760
        %3762 = vrot.lane.b32.xlu0 %v3173, 32
        %v3763 = vpop.permute.xlu0 %3762
        %3764 = vrot.lane.b32.xlu0 %v3174, 32
        %v3765 = vpop.permute.xlu0 %3764
        %3766 = vrot.lane.b32.xlu0 %v3175, 32
        %v3767 = vpop.permute.xlu0 %3766
        %3768 = vrot.lane.b32.xlu0 %v3176, 32
        %v3769 = vpop.permute.xlu0 %3768
        %3770 = vrot.lane.b32.xlu0 %v3177, 32
        %v3771 = vpop.permute.xlu0 %3770
        %3772 = vrot.lane.b32.xlu0 %v3178, 32
        %v3773 = vpop.permute.xlu0 %3772
        %3774 = vrot.lane.b32.xlu0 %v3179, 32
        %v3775 = vpop.permute.xlu0 %3774
        %3776 = vrot.lane.b32.xlu0 %v3180, 32
        %v3777 = vpop.permute.xlu0 %3776
        %3778 = vrot.lane.b32.xlu0 %v3181, 32
        %v3779 = vpop.permute.xlu0 %3778
        %3780 = vrot.lane.b32.xlu0 %v3182, 32
        %v3781 = vpop.permute.xlu0 %3780
        %3782 = vrot.lane.b32.xlu0 %v3183, 32
        %v3783 = vpop.permute.xlu0 %3782
        %3784 = vrot.lane.b32.xlu0 %v3184, 32
        %v3785 = vpop.permute.xlu0 %3784
        %3786 = vrot.lane.b32.xlu0 %v3185, 32
        %v3787 = vpop.permute.xlu0 %3786
        %3788 = vrot.lane.b32.xlu0 %v3186, 32
        %v3789 = vpop.permute.xlu0 %3788
        %3790 = vrot.lane.b32.xlu0 %v3187, 32
        %v3791 = vpop.permute.xlu0 %3790
        %3792 = vrot.lane.b32.xlu0 %v3188, 32
        %v3793 = vpop.permute.xlu0 %3792
        %3794 = vrot.lane.b32.xlu0 %v3189, 32
        %v3795 = vpop.permute.xlu0 %3794
        %3796 = vrot.lane.b32.xlu0 %v3190, 32
        %v3797 = vpop.permute.xlu0 %3796
        %3798 = vrot.lane.b32.xlu0 %v3191, 32
        %v3799 = vpop.permute.xlu0 %3798
        %3800 = vrot.lane.b32.xlu0 %v3192, 32
        %v3801 = vpop.permute.xlu0 %3800
        %3866 = vrot.lane.b32.xlu0 %v3193, 40
        %v3867 = vpop.permute.xlu0 %3866
        %3868 = vrot.lane.b32.xlu0 %v3194, 40
        %v3869 = vpop.permute.xlu0 %3868
        %3870 = vrot.lane.b32.xlu0 %v3195, 40
        %v3871 = vpop.permute.xlu0 %3870
        %3872 = vrot.lane.b32.xlu0 %v3196, 40
        %v3873 = vpop.permute.xlu0 %3872
        %3874 = vrot.lane.b32.xlu0 %v3197, 40
        %v3875 = vpop.permute.xlu0 %3874
        %3876 = vrot.lane.b32.xlu0 %v3198, 40
        %v3877 = vpop.permute.xlu0 %3876
        %3878 = vrot.lane.b32.xlu0 %v3199, 40
        %v3879 = vpop.permute.xlu0 %3878
        %3880 = vrot.lane.b32.xlu0 %v3200, 40
        %v3881 = vpop.permute.xlu0 %3880
        %3882 = vrot.lane.b32.xlu0 %v3201, 40
        %v3883 = vpop.permute.xlu0 %3882
        %3884 = vrot.lane.b32.xlu0 %v3202, 40
        %v3885 = vpop.permute.xlu0 %3884
        %3886 = vrot.lane.b32.xlu0 %v3203, 40
        %v3887 = vpop.permute.xlu0 %3886
        %3888 = vrot.lane.b32.xlu0 %v3204, 40
        %v3889 = vpop.permute.xlu0 %3888
        %3890 = vrot.lane.b32.xlu0 %v3205, 40
        %v3891 = vpop.permute.xlu0 %3890
        %3892 = vrot.lane.b32.xlu0 %v3206, 40
        %v3893 = vpop.permute.xlu0 %3892
        %3894 = vrot.lane.b32.xlu0 %v3207, 40
        %v3895 = vpop.permute.xlu0 %3894
        %3896 = vrot.lane.b32.xlu0 %v3208, 40
        %v3897 = vpop.permute.xlu0 %3896
        %3898 = vrot.lane.b32.xlu0 %v3209, 40
        %v3899 = vpop.permute.xlu0 %3898
        %3900 = vrot.lane.b32.xlu0 %v3210, 40
        %v3901 = vpop.permute.xlu0 %3900
        %3902 = vrot.lane.b32.xlu0 %v3211, 40
        %v3903 = vpop.permute.xlu0 %3902
        %3904 = vrot.lane.b32.xlu0 %v3212, 40
        %v3905 = vpop.permute.xlu0 %3904
        %3906 = vrot.lane.b32.xlu0 %v3213, 40
        %v3907 = vpop.permute.xlu0 %3906
        %3908 = vrot.lane.b32.xlu0 %v3214, 40
        %v3909 = vpop.permute.xlu0 %3908
        %3910 = vrot.lane.b32.xlu0 %v3215, 40
        %v3911 = vpop.permute.xlu0 %3910
        %3912 = vrot.lane.b32.xlu0 %v3216, 40
        %v3913 = vpop.permute.xlu0 %3912
        %3914 = vrot.lane.b32.xlu0 %v3217, 40
        %v3915 = vpop.permute.xlu0 %3914
        %3916 = vrot.lane.b32.xlu0 %v3218, 40
        %v3917 = vpop.permute.xlu0 %3916
        %3918 = vrot.lane.b32.xlu0 %v3219, 40
        %v3919 = vpop.permute.xlu0 %3918
        %3920 = vrot.lane.b32.xlu0 %v3220, 40
        %v3921 = vpop.permute.xlu0 %3920
        %3922 = vrot.lane.b32.xlu0 %v3221, 40
        %v3923 = vpop.permute.xlu0 %3922
        %3924 = vrot.lane.b32.xlu0 %v3222, 40
        %v3925 = vpop.permute.xlu0 %3924
        %3926 = vrot.lane.b32.xlu0 %v3223, 40
        %v3927 = vpop.permute.xlu0 %3926
        %3928 = vrot.lane.b32.xlu0 %v3224, 40
        %v3929 = vpop.permute.xlu0 %3928
        %3994 = vrot.lane.b32.xlu0 %v3226, 48
        %v3995 = vpop.permute.xlu0 %3994
        %3996 = vrot.lane.b32.xlu0 %v3227, 48
        %v3997 = vpop.permute.xlu0 %3996
        %3998 = vrot.lane.b32.xlu0 %v3228, 48
        %v3999 = vpop.permute.xlu0 %3998
        %4000 = vrot.lane.b32.xlu0 %v3229, 48
        %v4001 = vpop.permute.xlu0 %4000
        %4002 = vrot.lane.b32.xlu0 %v3230, 48
        %v4003 = vpop.permute.xlu0 %4002
        %4004 = vrot.lane.b32.xlu0 %v3231, 48
        %v4005 = vpop.permute.xlu0 %4004
        %4006 = vrot.lane.b32.xlu0 %v3232, 48
        %v4007 = vpop.permute.xlu0 %4006
        %4008 = vrot.lane.b32.xlu0 %v3233, 48
        %v4009 = vpop.permute.xlu0 %4008
        %4010 = vrot.lane.b32.xlu0 %v3234, 48
        %v4011 = vpop.permute.xlu0 %4010
        %4012 = vrot.lane.b32.xlu0 %v3235, 48
        %v4013 = vpop.permute.xlu0 %4012
        %4014 = vrot.lane.b32.xlu0 %v3236, 48
        %v4015 = vpop.permute.xlu0 %4014
        %4016 = vrot.lane.b32.xlu0 %v3237, 48
        %v4017 = vpop.permute.xlu0 %4016
        %4018 = vrot.lane.b32.xlu0 %v3238, 48
        %v4019 = vpop.permute.xlu0 %4018
        %4020 = vrot.lane.b32.xlu0 %v3239, 48
        %v4021 = vpop.permute.xlu0 %4020
        %4022 = vrot.lane.b32.xlu0 %v3240, 48
        %v4023 = vpop.permute.xlu0 %4022
        %4024 = vrot.lane.b32.xlu0 %v3241, 48
        %v4025 = vpop.permute.xlu0 %4024
        %4026 = vrot.lane.b32.xlu0 %v3242, 48
        %v4027 = vpop.permute.xlu0 %4026
        %4028 = vrot.lane.b32.xlu0 %v3243, 48
        %v4029 = vpop.permute.xlu0 %4028
        %4030 = vrot.lane.b32.xlu0 %v3244, 48
        %v4031 = vpop.permute.xlu0 %4030
        %4032 = vrot.lane.b32.xlu0 %v3245, 48
        %v4033 = vpop.permute.xlu0 %4032
        %4034 = vrot.lane.b32.xlu0 %v3246, 48
        %v4035 = vpop.permute.xlu0 %4034
        %4036 = vrot.lane.b32.xlu0 %v3247, 48
        %v4037 = vpop.permute.xlu0 %4036
        %4038 = vrot.lane.b32.xlu0 %v3248, 48
        %v4039 = vpop.permute.xlu0 %4038
        %4040 = vrot.lane.b32.xlu0 %v3249, 48
        %v4041 = vpop.permute.xlu0 %4040
        %4042 = vrot.lane.b32.xlu0 %v3250, 48
        %v4043 = vpop.permute.xlu0 %4042
        %4044 = vrot.lane.b32.xlu0 %v3251, 48
        %v4045 = vpop.permute.xlu0 %4044
        %4046 = vrot.lane.b32.xlu0 %v3252, 48
        %v4047 = vpop.permute.xlu0 %4046
        %4048 = vrot.lane.b32.xlu0 %v3253, 48
        %v4049 = vpop.permute.xlu0 %4048
        %4050 = vrot.lane.b32.xlu0 %v3254, 48
        %v4051 = vpop.permute.xlu0 %4050
        %4052 = vrot.lane.b32.xlu0 %v3255, 48
        %v4053 = vpop.permute.xlu0 %4052
        %4054 = vrot.lane.b32.xlu0 %v3256, 48
        %v4055 = vpop.permute.xlu0 %4054
        %4056 = vrot.lane.b32.xlu0 %v3257, 48
        %v4057 = vpop.permute.xlu0 %4056
        %4122 = vrot.lane.b32.xlu0 %v3258, 56
        %v4123 = vpop.permute.xlu0 %4122
        %4124 = vrot.lane.b32.xlu0 %v3259, 56
        %v4125 = vpop.permute.xlu0 %4124
        %4126 = vrot.lane.b32.xlu0 %v3260, 56
        %v4127 = vpop.permute.xlu0 %4126
        %4128 = vrot.lane.b32.xlu0 %v3261, 56
        %v4129 = vpop.permute.xlu0 %4128
        %4130 = vrot.lane.b32.xlu0 %v3262, 56
        %v4131 = vpop.permute.xlu0 %4130
        %4132 = vrot.lane.b32.xlu0 %v3263, 56
        %v4133 = vpop.permute.xlu0 %4132
        %4134 = vrot.lane.b32.xlu0 %v3264, 56
        %v4135 = vpop.permute.xlu0 %4134
        %4136 = vrot.lane.b32.xlu0 %v3265, 56
        %v4137 = vpop.permute.xlu0 %4136
        %4138 = vrot.lane.b32.xlu0 %v3266, 56
        %v4139 = vpop.permute.xlu0 %4138
        %4140 = vrot.lane.b32.xlu0 %v3267, 56
        %v4141 = vpop.permute.xlu0 %4140
        %4142 = vrot.lane.b32.xlu0 %v3268, 56
        %v4143 = vpop.permute.xlu0 %4142
        %4144 = vrot.lane.b32.xlu0 %v3269, 56
        %v4145 = vpop.permute.xlu0 %4144
        %4146 = vrot.lane.b32.xlu0 %v3270, 56
        %v4147 = vpop.permute.xlu0 %4146
        %4148 = vrot.lane.b32.xlu0 %v3271, 56
        %v4149 = vpop.permute.xlu0 %4148
        %4150 = vrot.lane.b32.xlu0 %v3272, 56
        %v4151 = vpop.permute.xlu0 %4150
        %4152 = vrot.lane.b32.xlu0 %v3273, 56
        %v4153 = vpop.permute.xlu0 %4152
        %4154 = vrot.lane.b32.xlu0 %v3274, 56
        %v4155 = vpop.permute.xlu0 %4154
        %4156 = vrot.lane.b32.xlu0 %v3275, 56
        %v4157 = vpop.permute.xlu0 %4156
        %4158 = vrot.lane.b32.xlu0 %v3276, 56
        %v4159 = vpop.permute.xlu0 %4158
        %4160 = vrot.lane.b32.xlu0 %v3277, 56
        %v4161 = vpop.permute.xlu0 %4160
        %4162 = vrot.lane.b32.xlu0 %v3278, 56
        %v4163 = vpop.permute.xlu0 %4162
        %4164 = vrot.lane.b32.xlu0 %v3279, 56
        %v4165 = vpop.permute.xlu0 %4164
        %4166 = vrot.lane.b32.xlu0 %v3280, 56
        %v4167 = vpop.permute.xlu0 %4166
        %4168 = vrot.lane.b32.xlu0 %v3281, 56
        %v4169 = vpop.permute.xlu0 %4168
        %4170 = vrot.lane.b32.xlu0 %v3282, 56
        %v4171 = vpop.permute.xlu0 %4170
        %4172 = vrot.lane.b32.xlu0 %v3283, 56
        %v4173 = vpop.permute.xlu0 %4172
        %4174 = vrot.lane.b32.xlu0 %v3284, 56
        %v4175 = vpop.permute.xlu0 %4174
        %4176 = vrot.lane.b32.xlu0 %v3285, 56
        %v4177 = vpop.permute.xlu0 %4176
        %4178 = vrot.lane.b32.xlu0 %v3286, 56
        %v4179 = vpop.permute.xlu0 %4178
        %4180 = vrot.lane.b32.xlu0 %v3287, 56
        %v4181 = vpop.permute.xlu0 %4180
        %4182 = vrot.lane.b32.xlu0 %v3288, 56
        %v4183 = vpop.permute.xlu0 %4182
        %4184 = vrot.lane.b32.xlu0 %v3289, 56
        %v4185 = vpop.permute.xlu0 %4184
        %4250 = vrot.lane.b32.xlu0 %v3290, 64
        %v4251 = vpop.permute.xlu0 %4250
        %4252 = vrot.lane.b32.xlu0 %v3291, 64
        %v4253 = vpop.permute.xlu0 %4252
        %4254 = vrot.lane.b32.xlu0 %v3292, 64
        %v4255 = vpop.permute.xlu0 %4254
        %4256 = vrot.lane.b32.xlu0 %v3293, 64
        %v4257 = vpop.permute.xlu0 %4256
        %4258 = vrot.lane.b32.xlu0 %v3294, 64
        %v4259 = vpop.permute.xlu0 %4258
        %4260 = vrot.lane.b32.xlu0 %v3295, 64
        %v4261 = vpop.permute.xlu0 %4260
        %4262 = vrot.lane.b32.xlu0 %v3296, 64
        %v4263 = vpop.permute.xlu0 %4262
        %4264 = vrot.lane.b32.xlu0 %v3297, 64
        %v4265 = vpop.permute.xlu0 %4264
        %4266 = vrot.lane.b32.xlu0 %v3298, 64
        %v4267 = vpop.permute.xlu0 %4266
        %4268 = vrot.lane.b32.xlu0 %v3299, 64
        %v4269 = vpop.permute.xlu0 %4268
        %4270 = vrot.lane.b32.xlu0 %v3300, 64
        %v4271 = vpop.permute.xlu0 %4270
        %4272 = vrot.lane.b32.xlu0 %v3301, 64
        %v4273 = vpop.permute.xlu0 %4272
        %4274 = vrot.lane.b32.xlu0 %v3302, 64
        %v4275 = vpop.permute.xlu0 %4274
        %4276 = vrot.lane.b32.xlu0 %v3303, 64
        %v4277 = vpop.permute.xlu0 %4276
        %4278 = vrot.lane.b32.xlu0 %v3304, 64
        %v4279 = vpop.permute.xlu0 %4278
        %4280 = vrot.lane.b32.xlu0 %v3305, 64
        %v4281 = vpop.permute.xlu0 %4280
        %4282 = vrot.lane.b32.xlu0 %v3306, 64
        %v4283 = vpop.permute.xlu0 %4282
        %4284 = vrot.lane.b32.xlu0 %v3307, 64
        %v4285 = vpop.permute.xlu0 %4284
        %4286 = vrot.lane.b32.xlu0 %v3308, 64
        %v4287 = vpop.permute.xlu0 %4286
        %4288 = vrot.lane.b32.xlu0 %v3309, 64
        %v4289 = vpop.permute.xlu0 %4288
        %4290 = vrot.lane.b32.xlu0 %v3310, 64
        %v4291 = vpop.permute.xlu0 %4290
        %4292 = vrot.lane.b32.xlu0 %v3311, 64
        %v4293 = vpop.permute.xlu0 %4292
        %4294 = vrot.lane.b32.xlu0 %v3312, 64
        %v4295 = vpop.permute.xlu0 %4294
        %4296 = vrot.lane.b32.xlu0 %v3313, 64
        %v4297 = vpop.permute.xlu0 %4296
        %4298 = vrot.lane.b32.xlu0 %v3314, 64
        %v4299 = vpop.permute.xlu0 %4298
        %4300 = vrot.lane.b32.xlu0 %v3315, 64
        %v4301 = vpop.permute.xlu0 %4300
        %4302 = vrot.lane.b32.xlu0 %v3316, 64
        %v4303 = vpop.permute.xlu0 %4302
        %4304 = vrot.lane.b32.xlu0 %v3317, 64
        %v4305 = vpop.permute.xlu0 %4304
        %4306 = vrot.lane.b32.xlu0 %v3318, 64
        %v4307 = vpop.permute.xlu0 %4306
        %4308 = vrot.lane.b32.xlu0 %v3319, 64
        %v4309 = vpop.permute.xlu0 %4308
        %4310 = vrot.lane.b32.xlu0 %v3320, 64
        %v4311 = vpop.permute.xlu0 %4310
        %4312 = vrot.lane.b32.xlu0 %v3321, 64
        %v4313 = vpop.permute.xlu0 %4312
        %v4346 = vsel %vm3000, %v3033, %v3355
        %v4347 = vsel %vm3000, %v3034, %v3357
        %v4348 = vsel %vm3000, %v3035, %v3359
        %v4349 = vsel %vm3000, %v3036, %v3361
        %v4350 = vsel %vm3000, %v3037, %v3363
        %v4351 = vsel %vm3000, %v3038, %v3365
        %v4352 = vsel %vm3000, %v3039, %v3367
        %v4353 = vsel %vm3000, %v3040, %v3369
        %v4354 = vsel %vm3000, %v3041, %v3371
        %v4355 = vsel %vm3000, %v3042, %v3373
        %v4356 = vsel %vm3000, %v3043, %v3375
        %v4357 = vsel %vm3000, %v3044, %v3377
        %v4358 = vsel %vm3000, %v3045, %v3379
        %v4359 = vsel %vm3000, %v3046, %v3381
        %v4360 = vsel %vm3000, %v3047, %v3383
        %v4361 = vsel %vm3000, %v3048, %v3385
        %v4362 = vsel %vm3000, %v3049, %v3387
        %v4363 = vsel %vm3000, %v3050, %v3389
        %v4364 = vsel %vm3000, %v3051, %v3391
        %v4365 = vsel %vm3000, %v3052, %v3393
        %v4366 = vsel %vm3000, %v3053, %v3395
        %v4367 = vsel %vm3000, %v3054, %v3397
        %v4368 = vsel %vm3000, %v3055, %v3399
        %v4369 = vsel %vm3000, %v3056, %v3401
        %v4370 = vsel %vm3000, %v3057, %v3403
        %v4371 = vsel %vm3000, %v3058, %v3405
        %v4372 = vsel %vm3000, %v3059, %v3407
        %v4373 = vsel %vm3000, %v3060, %v3409
        %v4374 = vsel %vm3000, %v3061, %v3411
        %v4375 = vsel %vm3000, %v3062, %v3413
        %v4376 = vsel %vm3000, %v3063, %v3415
        %v4377 = vsel %vm3000, %v3064, %v3417
        %vm4378 = vcmask 130048
        %v4379 = vsel %vm4378, %v4346, %v3483
        %v4380 = vsel %vm4378, %v4347, %v3485
        %v4381 = vsel %vm4378, %v4348, %v3487
        %v4382 = vsel %vm4378, %v4349, %v3489
        %v4383 = vsel %vm4378, %v4350, %v3491
        %v4384 = vsel %vm4378, %v4351, %v3493
        %v4385 = vsel %vm4378, %v4352, %v3495
        %v4386 = vsel %vm4378, %v4353, %v3497
        %v4387 = vsel %vm4378, %v4354, %v3499
        %v4388 = vsel %vm4378, %v4355, %v3501
        %v4389 = vsel %vm4378, %v4356, %v3503
        %v4390 = vsel %vm4378, %v4357, %v3505
        %v4391 = vsel %vm4378, %v4358, %v3507
        %v4392 = vsel %vm4378, %v4359, %v3509
        %v4393 = vsel %vm4378, %v4360, %v3511
        %v4394 = vsel %vm4378, %v4361, %v3513
        %v4395 = vsel %vm4378, %v4362, %v3515
        %v4396 = vsel %vm4378, %v4363, %v3517
        %v4397 = vsel %vm4378, %v4364, %v3519
        %v4398 = vsel %vm4378, %v4365, %v3521
        %v4399 = vsel %vm4378, %v4366, %v3523
        %v4400 = vsel %vm4378, %v4367, %v3525
        %v4401 = vsel %vm4378, %v4368, %v3527
        %v4402 = vsel %vm4378, %v4369, %v3529
        %v4403 = vsel %vm4378, %v4370, %v3531
        %v4404 = vsel %vm4378, %v4371, %v3533
        %v4405 = vsel %vm4378, %v4372, %v3535
        %v4406 = vsel %vm4378, %v4373, %v3537
        %v4407 = vsel %vm4378, %v4374, %v3539
        %v4408 = vsel %vm4378, %v4375, %v3541
        %v4409 = vsel %vm4378, %v4376, %v3543
        %v4410 = vsel %vm4378, %v4377, %v3545
        %vm4411 = vcmask 195584
        %v4412 = vsel %vm4411, %v4379, %v3611
        %v4413 = vsel %vm4411, %v4380, %v3613
        %v4414 = vsel %vm4411, %v4381, %v3615
        %v4415 = vsel %vm4411, %v4382, %v3617
        %v4416 = vsel %vm4411, %v4383, %v3619
        %v4417 = vsel %vm4411, %v4384, %v3621
        %v4418 = vsel %vm4411, %v4385, %v3623
        %v4419 = vsel %vm4411, %v4386, %v3625
        %v4420 = vsel %vm4411, %v4387, %v3627
        %v4421 = vsel %vm4411, %v4388, %v3629
        %v4422 = vsel %vm4411, %v4389, %v3631
        %v4423 = vsel %vm4411, %v4390, %v3633
        %v4424 = vsel %vm4411, %v4391, %v3635
        %v4425 = vsel %vm4411, %v4392, %v3637
        %v4426 = vsel %vm4411, %v4393, %v3639
        %v4427 = vsel %vm4411, %v4394, %v3641
        %v4428 = vsel %vm4411, %v4395, %v3643
        %v4429 = vsel %vm4411, %v4396, %v3645
        %v4430 = vsel %vm4411, %v4397, %v3647
        %v4431 = vsel %vm4411, %v4398, %v3649
        %v4432 = vsel %vm4411, %v4399, %v3651
        %v4433 = vsel %vm4411, %v4400, %v3653
        %v4434 = vsel %vm4411, %v4401, %v3655
        %v4435 = vsel %vm4411, %v4402, %v3657
        %v4436 = vsel %vm4411, %v4403, %v3659
        %v4437 = vsel %vm4411, %v4404, %v3661
        %v4438 = vsel %vm4411, %v4405, %v3663
        %v4439 = vsel %vm4411, %v4406, %v3665
        %v4440 = vsel %vm4411, %v4407, %v3667
        %v4441 = vsel %vm4411, %v4408, %v3669
        %v4442 = vsel %vm4411, %v4409, %v3671
        %v4443 = vsel %vm4411, %v4410, %v3673
        %vm4444 = vcmask 261120
        %v4445 = vsel %vm4444, %v4412, %v3739
        %v4446 = vsel %vm4444, %v4413, %v3741
        %v4447 = vsel %vm4444, %v4414, %v3743
        %v4448 = vsel %vm4444, %v4415, %v3745
        %v4449 = vsel %vm4444, %v4416, %v3747
        %v4450 = vsel %vm4444, %v4417, %v3749
        %v4451 = vsel %vm4444, %v4418, %v3751
        %v4452 = vsel %vm4444, %v4419, %v3753
        %v4453 = vsel %vm4444, %v4420, %v3755
        %v4454 = vsel %vm4444, %v4421, %v3757
        %v4455 = vsel %vm4444, %v4422, %v3759
        %v4456 = vsel %vm4444, %v4423, %v3761
        %v4457 = vsel %vm4444, %v4424, %v3763
        %v4458 = vsel %vm4444, %v4425, %v3765
        %v4459 = vsel %vm4444, %v4426, %v3767
        %v4460 = vsel %vm4444, %v4427, %v3769
        %v4461 = vsel %vm4444, %v4428, %v3771
        %v4462 = vsel %vm4444, %v4429, %v3773
        %v4463 = vsel %vm4444, %v4430, %v3775
        %v4464 = vsel %vm4444, %v4431, %v3777
        %v4465 = vsel %vm4444, %v4432, %v3779
        %v4466 = vsel %vm4444, %v4433, %v3781
        %v4467 = vsel %vm4444, %v4434, %v3783
        %v4468 = vsel %vm4444, %v4435, %v3785
        %v4469 = vsel %vm4444, %v4436, %v3787
        %v4470 = vsel %vm4444, %v4437, %v3789
        %v4471 = vsel %vm4444, %v4438, %v3791
        %v4472 = vsel %vm4444, %v4439, %v3793
        %v4473 = vsel %vm4444, %v4440, %v3795
        %v4474 = vsel %vm4444, %v4441, %v3797
        %v4475 = vsel %vm4444, %v4442, %v3799
        %v4476 = vsel %vm4444, %v4443, %v3801
        %vm4477 = vcmask 326656
        %v4478 = vsel %vm4477, %v4445, %v3867
        %v4479 = vsel %vm4477, %v4446, %v3869
        %v4480 = vsel %vm4477, %v4447, %v3871
        %v4481 = vsel %vm4477, %v4448, %v3873
        %v4482 = vsel %vm4477, %v4449, %v3875
        %v4483 = vsel %vm4477, %v4450, %v3877
        %v4484 = vsel %vm4477, %v4451, %v3879
        %v4485 = vsel %vm4477, %v4452, %v3881
        %v4486 = vsel %vm4477, %v4453, %v3883
        %v4487 = vsel %vm4477, %v4454, %v3885
        %v4488 = vsel %vm4477, %v4455, %v3887
        %v4489 = vsel %vm4477, %v4456, %v3889
        %v4490 = vsel %vm4477, %v4457, %v3891
        %v4491 = vsel %vm4477, %v4458, %v3893
        %v4492 = vsel %vm4477, %v4459, %v3895
        %v4493 = vsel %vm4477, %v4460, %v3897
        %v4494 = vsel %vm4477, %v4461, %v3899
        %v4495 = vsel %vm4477, %v4462, %v3901
        %v4496 = vsel %vm4477, %v4463, %v3903
        %v4497 = vsel %vm4477, %v4464, %v3905
        %v4498 = vsel %vm4477, %v4465, %v3907
        %v4499 = vsel %vm4477, %v4466, %v3909
        %v4500 = vsel %vm4477, %v4467, %v3911
        %v4501 = vsel %vm4477, %v4468, %v3913
        %v4502 = vsel %vm4477, %v4469, %v3915
        %v4503 = vsel %vm4477, %v4470, %v3917
        %v4504 = vsel %vm4477, %v4471, %v3919
        %v4505 = vsel %vm4477, %v4472, %v3921
        %v4506 = vsel %vm4477, %v4473, %v3923
        %v4507 = vsel %vm4477, %v4474, %v3925
        %v4508 = vsel %vm4477, %v4475, %v3927
        %v4509 = vsel %vm4477, %v4476, %v3929
        %vm4510 = vcmask 392192
        %v4511 = vsel %vm4510, %v4478, %v3995
        %v4512 = vsel %vm4510, %v4479, %v3997
        %v4513 = vsel %vm4510, %v4480, %v3999
        %v4514 = vsel %vm4510, %v4481, %v4001
        %v4515 = vsel %vm4510, %v4482, %v4003
        %v4516 = vsel %vm4510, %v4483, %v4005
        %v4517 = vsel %vm4510, %v4484, %v4007
        %v4518 = vsel %vm4510, %v4485, %v4009
        %v4519 = vsel %vm4510, %v4486, %v4011
        %v4520 = vsel %vm4510, %v4487, %v4013
        %v4521 = vsel %vm4510, %v4488, %v4015
        %v4522 = vsel %vm4510, %v4489, %v4017
        %v4523 = vsel %vm4510, %v4490, %v4019
        %v4524 = vsel %vm4510, %v4491, %v4021
        %v4525 = vsel %vm4510, %v4492, %v4023
        %v4526 = vsel %vm4510, %v4493, %v4025
        %v4527 = vsel %vm4510, %v4494, %v4027
        %v4528 = vsel %vm4510, %v4495, %v4029
        %v4529 = vsel %vm4510, %v4496, %v4031
        %v4530 = vsel %vm4510, %v4497, %v4033
        %v4531 = vsel %vm4510, %v4498, %v4035
        %v4532 = vsel %vm4510, %v4499, %v4037
        %v4533 = vsel %vm4510, %v4500, %v4039
        %v4534 = vsel %vm4510, %v4501, %v4041
        %v4535 = vsel %vm4510, %v4502, %v4043
        %v4536 = vsel %vm4510, %v4503, %v4045
        %v4537 = vsel %vm4510, %v4504, %v4047
        %v4538 = vsel %vm4510, %v4505, %v4049
        %v4539 = vsel %vm4510, %v4506, %v4051
        %v4540 = vsel %vm4510, %v4507, %v4053
        %v4541 = vsel %vm4510, %v4508, %v4055
        %v4542 = vsel %vm4510, %v4509, %v4057
        %vm4543 = vcmask 457728
        %v4544 = vsel %vm4543, %v4511, %v4123
        %v4545 = vsel %vm4543, %v4512, %v4125
        %v4546 = vsel %vm4543, %v4513, %v4127
        %v4547 = vsel %vm4543, %v4514, %v4129
        %v4548 = vsel %vm4543, %v4515, %v4131
        %v4549 = vsel %vm4543, %v4516, %v4133
        %v4550 = vsel %vm4543, %v4517, %v4135
        %v4551 = vsel %vm4543, %v4518, %v4137
        %v4552 = vsel %vm4543, %v4519, %v4139
        %v4553 = vsel %vm4543, %v4520, %v4141
        %v4554 = vsel %vm4543, %v4521, %v4143
        %v4555 = vsel %vm4543, %v4522, %v4145
        %v4556 = vsel %vm4543, %v4523, %v4147
        %v4557 = vsel %vm4543, %v4524, %v4149
        %v4558 = vsel %vm4543, %v4525, %v4151
        %v4559 = vsel %vm4543, %v4526, %v4153
        %v4560 = vsel %vm4543, %v4527, %v4155
        %v4561 = vsel %vm4543, %v4528, %v4157
        %v4562 = vsel %vm4543, %v4529, %v4159
        %v4563 = vsel %vm4543, %v4530, %v4161
        %v4564 = vsel %vm4543, %v4531, %v4163
        %v4565 = vsel %vm4543, %v4532, %v4165
        %v4566 = vsel %vm4543, %v4533, %v4167
        %v4567 = vsel %vm4543, %v4534, %v4169
        %v4568 = vsel %vm4543, %v4535, %v4171
        %v4569 = vsel %vm4543, %v4536, %v4173
        %v4570 = vsel %vm4543, %v4537, %v4175
        %v4571 = vsel %vm4543, %v4538, %v4177
        %v4572 = vsel %vm4543, %v4539, %v4179
        %v4573 = vsel %vm4543, %v4540, %v4181
        %v4574 = vsel %vm4543, %v4541, %v4183
        %v4575 = vsel %vm4543, %v4542, %v4185
        %vm4576 = vcmask 523264
        %v4577 = vsel %vm4576, %v4544, %v4251
        %v4578 = vsel %vm4576, %v4545, %v4253
        %v4579 = vsel %vm4576, %v4546, %v4255
        %v4580 = vsel %vm4576, %v4547, %v4257
        %v4581 = vsel %vm4576, %v4548, %v4259
        %v4582 = vsel %vm4576, %v4549, %v4261
        %v4583 = vsel %vm4576, %v4550, %v4263
        %v4584 = vsel %vm4576, %v4551, %v4265
        %v4585 = vsel %vm4576, %v4552, %v4267
        %v4586 = vsel %vm4576, %v4553, %v4269
        %v4587 = vsel %vm4576, %v4554, %v4271
        %v4588 = vsel %vm4576, %v4555, %v4273
        %v4589 = vsel %vm4576, %v4556, %v4275
        %v4590 = vsel %vm4576, %v4557, %v4277
        %v4591 = vsel %vm4576, %v4558, %v4279
        %v4592 = vsel %vm4576, %v4559, %v4281
        %v4593 = vsel %vm4576, %v4560, %v4283
        %v4594 = vsel %vm4576, %v4561, %v4285
        %v4595 = vsel %vm4576, %v4562, %v4287
        %v4596 = vsel %vm4576, %v4563, %v4289
        %v4597 = vsel %vm4576, %v4564, %v4291
        %v4598 = vsel %vm4576, %v4565, %v4293
        %v4599 = vsel %vm4576, %v4566, %v4295
        %v4600 = vsel %vm4576, %v4567, %v4297
        %v4601 = vsel %vm4576, %v4568, %v4299
        %v4602 = vsel %vm4576, %v4569, %v4301
        %v4603 = vsel %vm4576, %v4570, %v4303
        %v4604 = vsel %vm4576, %v4571, %v4305
        %v4605 = vsel %vm4576, %v4572, %v4307
        %v4606 = vsel %vm4576, %v4573, %v4309
        %v4607 = vsel %vm4576, %v4574, %v4311
        %v4608 = vsel %vm4576, %v4575, %v4313
        %v4609 = vpack.c.bf16 %v4578, %v4577
        %v4610 = vpack.c.bf16 %v4580, %v4579
        %v4611 = vpack.c.bf16 %v4582, %v4581
        %v4612 = vpack.c.bf16 %v4584, %v4583
        %v4613 = vpack.c.bf16 %v4586, %v4585
        %v4614 = vpack.c.bf16 %v4588, %v4587
        %v4615 = vpack.c.bf16 %v4590, %v4589
        %v4616 = vpack.c.bf16 %v4592, %v4591
        %v4617 = vpack.c.bf16 %v4594, %v4593
        %v4618 = vpack.c.bf16 %v4596, %v4595
        %v4619 = vpack.c.bf16 %v4598, %v4597
        %v4620 = vpack.c.bf16 %v4600, %v4599
        %v4621 = vpack.c.bf16 %v4602, %v4601
        %v4622 = vpack.c.bf16 %v4604, %v4603
        %v4623 = vpack.c.bf16 %v4606, %v4605
        %v4624 = vpack.c.bf16 %v4608, %v4607
        %v4625 = vld [vmem:[%s6] sm:$0x1]
        %v4626 = vld [vmem:[%s5] sm:$0xf]
        %v4627 = vld [vmem:[%s5 + $0x4] sm:$0xf]
        %v4628 = vld [vmem:[%s5 + $0x8] sm:$0xf]
        %v4629 = vld [vmem:[%s5 + $0xc] sm:$0xf]
        %v4630 = vld [vmem:[%s5 + $0x10] sm:$0xf]
        %v4631 = vld [vmem:[%s5 + $0x14] sm:$0xf]
        %v4632 = vld [vmem:[%s5 + $0x18] sm:$0xf]
        %v4633 = vld [vmem:[%s5 + $0x1c] sm:$0xf]
        %v4634 = vld [vmem:[%s5 + $0x20] sm:$0xf]
        %v4636 = vlaneseq
        %v4637 = vshrl.u32 %v4636, 7
        %v4638 = vsub.s32 0, %v4637
        %v4639 = vrot.slane %v4625, %v4638
        %v4650 = vunpack.c.l.b16 %v4626
        %v4651 = vunpack.c.l.b16 %v4627
        %v4652 = vunpack.c.l.b16 %v4628
        %v4653 = vunpack.c.l.b16 %v4629
        %v4654 = vunpack.c.l.b16 %v4630
        %v4655 = vunpack.c.l.b16 %v4631
        %v4656 = vunpack.c.l.b16 %v4632
        %v4657 = vunpack.c.l.b16 %v4633
        %v4658 = vunpack.c.l.b16 %v4634
        %v4659 = vpack.c.b16 %v4651, %v4650
        %v4660 = vpack.c.b16 %v4653, %v4652
        %v4661 = vpack.c.b16 %v4655, %v4654
        %v4662 = vpack.c.b16 %v4657, %v4656
        %v4663 = vpack.c.b16 %v4658, %v4658
        %vm4668 = vcmask 588800
        %v4670 = vsel %vm4668, %v4609, 0
        %v4673 = vsel %vm4668, %v4610, 0
        %v4676 = vsel %vm4668, %v4611, 0
        %v4679 = vsel %vm4668, %v4612, 0
        %v4682 = vsel %vm4668, %v4613, 0
        %v4685 = vsel %vm4668, %v4614, 0
        %v4688 = vsel %vm4668, %v4615, 0
        %v4691 = vsel %vm4668, %v4616, 0
        %v4694 = vsel %vm4668, %v4617, 0
        %v4697 = vsel %vm4668, %v4618, 0
        %v4700 = vsel %vm4668, %v4619, 0
        %v4703 = vsel %vm4668, %v4620, 0
        %v4706 = vsel %vm4668, %v4621, 0
        %v4709 = vsel %vm4668, %v4622, 0
        %v4712 = vsel %vm4668, %v4623, 0
        %v4715 = vsel %vm4668, %v4624, 0
        %vm4717 = vcmask 1043456
        %v4719 = vsel %vm4717, %v4663, 0
        %4721 = vmatprep.subr.bf16.mxu0 0
        %4722 = vmatpush1.bf16.msra.mxu0 %v4659
        %4723 = vmatprep.subr.bf16.mxu0 0
        %4724 = vmatpush1.bf16.msra.mxu0 %v4660
        %4725 = vmatprep.subr.bf16.mxu0 0
        %4726 = vmatpush1.bf16.msra.mxu0 %v4661
        %4727 = vmatprep.subr.bf16.mxu0 0
        %4728 = vmatpush1.bf16.msra.mxu0 %v4662
        %4729 = vmatprep.subr.bf16.mxu0 0
        %4730 = vmatpush1.bf16.msra.mxu0 %v4719
        %4731 = vmatprep.subr.bf16.mxu0 0
        %4732 = vmatpush1.bf16.msra.mxu0 0
        %4733 = vmatprep.subr.bf16.mxu0 0
        %4734 = vmatpush1.bf16.msra.mxu0 0
        %4735 = vmatprep.subr.bf16.mxu0 0
        %4736 = vmatpush1.bf16.msra.mxu0 0
        %4737 = vmatprep.subr.bf16.mxu0 0
        %4738 = vmatpush1.bf16.msra.mxu0 0
        %4739 = vmatprep.subr.bf16.mxu0 0
        %4740 = vmatpush1.bf16.msra.mxu0 0
        %4741 = vmatprep.subr.bf16.mxu0 0
        %4742 = vmatpush1.bf16.msra.mxu0 0
        %4743 = vmatprep.subr.bf16.mxu0 0
        %4744 = vmatpush1.bf16.msra.mxu0 0
        %4745 = vmatprep.subr.bf16.mxu0 0
        %4746 = vmatpush1.bf16.msra.mxu0 0
        %4747 = vmatprep.subr.bf16.mxu0 0
        %4748 = vmatpush1.bf16.msra.mxu0 0
        %4749 = vmatprep.subr.bf16.mxu0 0
        %4750 = vmatpush1.bf16.msra.mxu0 0
        %4751 = vmatprep.subr.bf16.mxu0 0
        %4752 = vmatpush1.bf16.msra.mxu0 0
        %4753 = vmatprep.mubr.bf16.mxu0 0
        %4754 = vmatmul.mubr.bf16.gmra.mrb[0].mxu0 %v4670
        %v4755 = vpop.f32.mrb[0].mxu0
        %v4756 = vadd.f32 %v4639, %v4755
        %v4757 = vpop.f32.mrb[0].mxu0
        %v4758 = vpop.f32.mrb[0].mxu0
        %v4759 = vadd.f32 %v4639, %v4758
        %v4760 = vpop.f32.mrb[0].mxu0
        %4761 = vmatprep.mubr.bf16.mxu0 0
        %4762 = vmatmul.mubr.bf16.gmra.mrb[0].mxu0 %v4673
        %v4763 = vpop.f32.mrb[0].mxu0
        %v4764 = vadd.f32 %v4639, %v4763
        %v4765 = vpop.f32.mrb[0].mxu0
        %v4766 = vpop.f32.mrb[0].mxu0
        %v4767 = vadd.f32 %v4639, %v4766
        %v4768 = vpop.f32.mrb[0].mxu0
        %4769 = vmatprep.mubr.bf16.mxu0 0
        %4770 = vmatmul.mubr.bf16.gmra.mrb[0].mxu0 %v4676
        %v4771 = vpop.f32.mrb[0].mxu0
        %v4772 = vadd.f32 %v4639, %v4771
        %v4773 = vpop.f32.mrb[0].mxu0
        %v4774 = vpop.f32.mrb[0].mxu0
        %v4775 = vadd.f32 %v4639, %v4774
        %v4776 = vpop.f32.mrb[0].mxu0
        %4777 = vmatprep.mubr.bf16.mxu0 0
        %4778 = vmatmul.mubr.bf16.gmra.mrb[0].mxu0 %v4679
        %v4779 = vpop.f32.mrb[0].mxu0
        %v4780 = vadd.f32 %v4639, %v4779
        %v4781 = vpop.f32.mrb[0].mxu0
        %v4782 = vpop.f32.mrb[0].mxu0
        %v4783 = vadd.f32 %v4639, %v4782
        %v4784 = vpop.f32.mrb[0].mxu0
        %4785 = vmatprep.mubr.bf16.mxu0 0
        %4786 = vmatmul.mubr.bf16.gmra.mrb[0].mxu0 %v4682
        %v4787 = vpop.f32.mrb[0].mxu0
        %v4788 = vadd.f32 %v4639, %v4787
        %v4789 = vpop.f32.mrb[0].mxu0
        %v4790 = vpop.f32.mrb[0].mxu0
        %v4791 = vadd.f32 %v4639, %v4790
        %v4792 = vpop.f32.mrb[0].mxu0
        %4793 = vmatprep.mubr.bf16.mxu0 0
        %4794 = vmatmul.mubr.bf16.gmra.mrb[0].mxu0 %v4685
        %v4795 = vpop.f32.mrb[0].mxu0
        %v4796 = vadd.f32 %v4639, %v4795
        %v4797 = vpop.f32.mrb[0].mxu0
        %v4798 = vpop.f32.mrb[0].mxu0
        %v4799 = vadd.f32 %v4639, %v4798
        %v4800 = vpop.f32.mrb[0].mxu0
        %4801 = vmatprep.mubr.bf16.mxu0 0
        %4802 = vmatmul.mubr.bf16.gmra.mrb[0].mxu0 %v4688
        %v4803 = vpop.f32.mrb[0].mxu0
        %v4804 = vadd.f32 %v4639, %v4803
        %v4805 = vpop.f32.mrb[0].mxu0
        %v4806 = vpop.f32.mrb[0].mxu0
        %v4807 = vadd.f32 %v4639, %v4806
        %v4808 = vpop.f32.mrb[0].mxu0
        %4809 = vmatprep.mubr.bf16.mxu0 0
        %4810 = vmatmul.mubr.bf16.gmra.mrb[0].mxu0 %v4691
        %v4811 = vpop.f32.mrb[0].mxu0
        %v4812 = vadd.f32 %v4639, %v4811
        %v4813 = vpop.f32.mrb[0].mxu0
        %v4814 = vpop.f32.mrb[0].mxu0
        %v4815 = vadd.f32 %v4639, %v4814
        %v4816 = vpop.f32.mrb[0].mxu0
        %4817 = vmatprep.mubr.bf16.mxu0 0
        %4818 = vmatmul.mubr.bf16.gmra.mrb[0].mxu0 %v4694
        %v4819 = vpop.f32.mrb[0].mxu0
        %v4820 = vadd.f32 %v4639, %v4819
        %v4821 = vpop.f32.mrb[0].mxu0
        %v4822 = vpop.f32.mrb[0].mxu0
        %v4823 = vadd.f32 %v4639, %v4822
        %v4824 = vpop.f32.mrb[0].mxu0
        %4825 = vmatprep.mubr.bf16.mxu0 0
        %4826 = vmatmul.mubr.bf16.gmra.mrb[0].mxu0 %v4697
        %v4827 = vpop.f32.mrb[0].mxu0
        %v4828 = vadd.f32 %v4639, %v4827
        %v4829 = vpop.f32.mrb[0].mxu0
        %v4830 = vpop.f32.mrb[0].mxu0
        %v4831 = vadd.f32 %v4639, %v4830
        %v4832 = vpop.f32.mrb[0].mxu0
        %4833 = vmatprep.mubr.bf16.mxu0 0
        %4834 = vmatmul.mubr.bf16.gmra.mrb[0].mxu0 %v4700
        %v4835 = vpop.f32.mrb[0].mxu0
        %v4836 = vadd.f32 %v4639, %v4835
        %v4837 = vpop.f32.mrb[0].mxu0
        %v4838 = vpop.f32.mrb[0].mxu0
        %v4839 = vadd.f32 %v4639, %v4838
        %v4840 = vpop.f32.mrb[0].mxu0
        %4841 = vmatprep.mubr.bf16.mxu0 0
        %4842 = vmatmul.mubr.bf16.gmra.mrb[0].mxu0 %v4703
        %v4843 = vpop.f32.mrb[0].mxu0
        %v4844 = vadd.f32 %v4639, %v4843
        %v4845 = vpop.f32.mrb[0].mxu0
        %v4846 = vpop.f32.mrb[0].mxu0
        %v4847 = vadd.f32 %v4639, %v4846
        %v4848 = vpop.f32.mrb[0].mxu0
        %4849 = vmatprep.mubr.bf16.mxu0 0
        %4850 = vmatmul.mubr.bf16.gmra.mrb[0].mxu0 %v4706
        %v4851 = vpop.f32.mrb[0].mxu0
        %v4852 = vadd.f32 %v4639, %v4851
        %v4853 = vpop.f32.mrb[0].mxu0
        %v4854 = vpop.f32.mrb[0].mxu0
        %v4855 = vadd.f32 %v4639, %v4854
        %v4856 = vpop.f32.mrb[0].mxu0
        %4857 = vmatprep.mubr.bf16.mxu0 0
        %4858 = vmatmul.mubr.bf16.gmra.mrb[0].mxu0 %v4709
        %v4859 = vpop.f32.mrb[0].mxu0
        %v4860 = vadd.f32 %v4639, %v4859
        %v4861 = vpop.f32.mrb[0].mxu0
        %v4862 = vpop.f32.mrb[0].mxu0
        %v4863 = vadd.f32 %v4639, %v4862
        %v4864 = vpop.f32.mrb[0].mxu0
        %4865 = vmatprep.mubr.bf16.mxu0 0
        %4866 = vmatmul.mubr.bf16.gmra.mrb[0].mxu0 %v4712
        %v4867 = vpop.f32.mrb[0].mxu0
        %v4868 = vadd.f32 %v4639, %v4867
        %v4869 = vpop.f32.mrb[0].mxu0
        %v4870 = vpop.f32.mrb[0].mxu0
        %v4871 = vadd.f32 %v4639, %v4870
        %v4872 = vpop.f32.mrb[0].mxu0
        %4873 = vmatprep.mubr.bf16.mxu0 0
        %4874 = vmatmul.mubr.bf16.gmra.mrb[0].mxu0 %v4715
        %v4875 = vpop.f32.mrb[0].mxu0
        %v4876 = vadd.f32 %v4639, %v4875
        %v4877 = vpop.f32.mrb[0].mxu0
        %v4878 = vpop.f32.mrb[0].mxu0
        %v4879 = vadd.f32 %v4639, %v4878
        %v4880 = vpop.f32.mrb[0].mxu0
        %4881 = vdwg.mxu0
        %s4882 = scalar_lea.vmem [#allocation5], %s2855
        %4883 = vst.msk [vmem:[%s4882] sm:$0xff] %vm3000, %v4756
        %4884 = vst.msk [vmem:[%s4882 + $0x8] sm:$0xff] %vm3000, %v4759
        %4885 = vst.msk [vmem:[%s4882 + $0x10] sm:$0xff] %vm3000, %v4764
        %4886 = vst.msk [vmem:[%s4882 + $0x18] sm:$0xff] %vm3000, %v4767
        %4887 = vst.msk [vmem:[%s4882 + $0x20] sm:$0xff] %vm3000, %v4772
        %4888 = vst.msk [vmem:[%s4882 + $0x28] sm:$0xff] %vm3000, %v4775
        %4889 = vst.msk [vmem:[%s4882 + $0x30] sm:$0xff] %vm3000, %v4780
        %4890 = vst.msk [vmem:[%s4882 + $0x38] sm:$0xff] %vm3000, %v4783
        %4891 = vst.msk [vmem:[%s4882 + $0x40] sm:$0xff] %vm3000, %v4788
        %4892 = vst.msk [vmem:[%s4882 + $0x48] sm:$0xff] %vm3000, %v4791
        %4893 = vst.msk [vmem:[%s4882 + $0x50] sm:$0xff] %vm3000, %v4796
        %4894 = vst.msk [vmem:[%s4882 + $0x58] sm:$0xff] %vm3000, %v4799
        %4895 = vst.msk [vmem:[%s4882 + $0x60] sm:$0xff] %vm3000, %v4804
        %4896 = vst.msk [vmem:[%s4882 + $0x68] sm:$0xff] %vm3000, %v4807
        %4897 = vst.msk [vmem:[%s4882 + $0x70] sm:$0xff] %vm3000, %v4812
        %4898 = vst.msk [vmem:[%s4882 + $0x78] sm:$0xff] %vm3000, %v4815
        %4899 = vst.msk [vmem:[%s4882 + $0x80] sm:$0xff] %vm3000, %v4820
        %4900 = vst.msk [vmem:[%s4882 + $0x88] sm:$0xff] %vm3000, %v4823
        %4901 = vst.msk [vmem:[%s4882 + $0x90] sm:$0xff] %vm3000, %v4828
        %4902 = vst.msk [vmem:[%s4882 + $0x98] sm:$0xff] %vm3000, %v4831
        %4903 = vst.msk [vmem:[%s4882 + $0xa0] sm:$0xff] %vm3000, %v4836
        %4904 = vst.msk [vmem:[%s4882 + $0xa8] sm:$0xff] %vm3000, %v4839
        %4905 = vst.msk [vmem:[%s4882 + $0xb0] sm:$0xff] %vm3000, %v4844
        %4906 = vst.msk [vmem:[%s4882 + $0xb8] sm:$0xff] %vm3000, %v4847
        %4907 = vst.msk [vmem:[%s4882 + $0xc0] sm:$0xff] %vm3000, %v4852
        %4908 = vst.msk [vmem:[%s4882 + $0xc8] sm:$0xff] %vm3000, %v4855
        %4909 = vst.msk [vmem:[%s4882 + $0xd0] sm:$0xff] %vm3000, %v4860
        %4910 = vst.msk [vmem:[%s4882 + $0xd8] sm:$0xff] %vm3000, %v4863
        %4911 = vst.msk [vmem:[%s4882 + $0xe0] sm:$0xff] %vm3000, %v4868
        %4912 = vst.msk [vmem:[%s4882 + $0xe8] sm:$0xff] %vm3000, %v4871
        %4913 = vst.msk [vmem:[%s4882 + $0xf0] sm:$0xff] %vm3000, %v4876
        %4914 = vst.msk [vmem:[%s4882 + $0xf8] sm:$0xff] %vm3000, %v4879
        %v4915 = vld [vmem:[#allocation9] sm:$0x1]
        %v4916 = vsel %vm3000, %v4756, 0.0
        %v4917 = vsel %vm3000, %v4759, 0.0
        %v4918 = vadd.f32 %v4916, %v4917
        %v4919 = vsel %vm3000, %v4764, 0.0
        %v4920 = vadd.f32 %v4918, %v4919
        %v4921 = vsel %vm3000, %v4767, 0.0
        %v4922 = vadd.f32 %v4920, %v4921
        %v4923 = vsel %vm3000, %v4772, 0.0
        %v4924 = vadd.f32 %v4922, %v4923
        %v4925 = vsel %vm3000, %v4775, 0.0
        %v4926 = vadd.f32 %v4924, %v4925
        %v4927 = vsel %vm3000, %v4780, 0.0
        %v4928 = vadd.f32 %v4926, %v4927
        %v4929 = vsel %vm3000, %v4783, 0.0
        %v4930 = vadd.f32 %v4928, %v4929
        %v4931 = vsel %vm3000, %v4788, 0.0
        %v4932 = vadd.f32 %v4930, %v4931
        %v4933 = vsel %vm3000, %v4791, 0.0
        %v4934 = vadd.f32 %v4932, %v4933
        %v4935 = vsel %vm3000, %v4796, 0.0
        %v4936 = vadd.f32 %v4934, %v4935
        %v4937 = vsel %vm3000, %v4799, 0.0
        %v4938 = vadd.f32 %v4936, %v4937
        %v4939 = vsel %vm3000, %v4804, 0.0
        %v4940 = vadd.f32 %v4938, %v4939
        %v4941 = vsel %vm3000, %v4807, 0.0
        %v4942 = vadd.f32 %v4940, %v4941
        %v4943 = vsel %vm3000, %v4812, 0.0
        %v4944 = vadd.f32 %v4942, %v4943
        %v4945 = vsel %vm3000, %v4815, 0.0
        %v4946 = vadd.f32 %v4944, %v4945
        %v4947 = vsel %vm3000, %v4820, 0.0
        %v4948 = vadd.f32 %v4946, %v4947
        %v4949 = vsel %vm3000, %v4823, 0.0
        %v4950 = vadd.f32 %v4948, %v4949
        %v4951 = vsel %vm3000, %v4828, 0.0
        %v4952 = vadd.f32 %v4950, %v4951
        %v4953 = vsel %vm3000, %v4831, 0.0
        %v4954 = vadd.f32 %v4952, %v4953
        %v4955 = vsel %vm3000, %v4836, 0.0
        %v4956 = vadd.f32 %v4954, %v4955
        %v4957 = vsel %vm3000, %v4839, 0.0
        %v4958 = vadd.f32 %v4956, %v4957
        %v4959 = vsel %vm3000, %v4844, 0.0
        %v4960 = vadd.f32 %v4958, %v4959
        %v4961 = vsel %vm3000, %v4847, 0.0
        %v4962 = vadd.f32 %v4960, %v4961
        %v4963 = vsel %vm3000, %v4852, 0.0
        %v4964 = vadd.f32 %v4962, %v4963
        %v4965 = vsel %vm3000, %v4855, 0.0
        %v4966 = vadd.f32 %v4964, %v4965
        %v4967 = vsel %vm3000, %v4860, 0.0
        %v4968 = vadd.f32 %v4966, %v4967
        %v4969 = vsel %vm3000, %v4863, 0.0
        %v4970 = vadd.f32 %v4968, %v4969
        %v4971 = vsel %vm3000, %v4868, 0.0
        %v4972 = vadd.f32 %v4970, %v4971
        %v4973 = vsel %vm3000, %v4871, 0.0
        %v4974 = vadd.f32 %v4972, %v4973
        %v4975 = vsel %vm3000, %v4876, 0.0
        %v4976 = vadd.f32 %v4974, %v4975
        %v4977 = vsel %vm3000, %v4879, 0.0
        %v4978 = vadd.f32 %v4976, %v4977
        %v4979 = vrot.slane %v4978, 4
        %v4980 = vadd.f32 %v4978, %v4979
        %v4981 = vrot.slane %v4980, 2
        %v4982 = vadd.f32 %v4980, %v4981
        %v4983 = vrot.slane %v4982, 1
        %v4984 = vadd.f32 %v4982, %v4983
        %v4985 = vadd.f32 %v4915, %v4984
        %vm4986 = vcmask 57344
        %4987 = vst.msk [vmem:[#allocation9] sm:$0x1] %vm4986, %v4985
      $region68: #{tpu_custom_call.1} parent=55 // pred_fallthru
        _
      %p4988 = scmp.eq.s32.totalorder %s24, 2
      // Predicated region
      $region73: #{tpu_custom_call.1} parent=55 // pred_check
        %p4989 = pneg %p4988
      $region74: #{tpu_custom_call.1} parent=55 // pred_check_branch
        %4991 = sbr.rel (%p4989) target = $region76
      $region75: #{tpu_custom_call.1} parent=55 // pred_region
        %p4992 = scmp.eq.s32.totalorder %s25, 0
        // Predicated region
        $region77: #{tpu_custom_call.1} parent=75 // pred_check
          %p4993 = pneg %p4992
        $region78: #{tpu_custom_call.1} parent=75 // pred_check_branch
          %4995 = sbr.rel (%p4993) target = $region80
        $region79: #{tpu_custom_call.1} parent=75 // pred_region
          %v4996 = vld [vmem:[#allocation9] sm:$0x1]
          %v4997 = vmul.f32 %v4996, 0.001953125
          %v4998 = vld [vmem:[#allocation5] sm:$0xff]
          %v4999 = vld [vmem:[#allocation5 + $0x8] sm:$0xff]
          %v5000 = vld [vmem:[#allocation5 + $0x10] sm:$0xff]
          %v5001 = vld [vmem:[#allocation5 + $0x18] sm:$0xff]
          %v5002 = vld [vmem:[#allocation5 + $0x20] sm:$0xff]
          %v5003 = vld [vmem:[#allocation5 + $0x28] sm:$0xff]
          %v5004 = vld [vmem:[#allocation5 + $0x30] sm:$0xff]
          %v5005 = vld [vmem:[#allocation5 + $0x38] sm:$0xff]
          %v5006 = vld [vmem:[#allocation5 + $0x40] sm:$0xff]
          %v5007 = vld [vmem:[#allocation5 + $0x48] sm:$0xff]
          %v5008 = vld [vmem:[#allocation5 + $0x50] sm:$0xff]
          %v5009 = vld [vmem:[#allocation5 + $0x58] sm:$0xff]
          %v5010 = vld [vmem:[#allocation5 + $0x60] sm:$0xff]
          %v5011 = vld [vmem:[#allocation5 + $0x68] sm:$0xff]
          %v5012 = vld [vmem:[#allocation5 + $0x70] sm:$0xff]
          %v5013 = vld [vmem:[#allocation5 + $0x78] sm:$0xff]
          %v5014 = vld [vmem:[#allocation5 + $0x80] sm:$0xff]
          %v5015 = vld [vmem:[#allocation5 + $0x88] sm:$0xff]
          %v5016 = vld [vmem:[#allocation5 + $0x90] sm:$0xff]
          %v5017 = vld [vmem:[#allocation5 + $0x98] sm:$0xff]
          %v5018 = vld [vmem:[#allocation5 + $0xa0] sm:$0xff]
          %v5019 = vld [vmem:[#allocation5 + $0xa8] sm:$0xff]
          %v5020 = vld [vmem:[#allocation5 + $0xb0] sm:$0xff]
          %v5021 = vld [vmem:[#allocation5 + $0xb8] sm:$0xff]
          %v5022 = vld [vmem:[#allocation5 + $0xc0] sm:$0xff]
          %v5023 = vld [vmem:[#allocation5 + $0xc8] sm:$0xff]
          %v5024 = vld [vmem:[#allocation5 + $0xd0] sm:$0xff]
          %v5025 = vld [vmem:[#allocation5 + $0xd8] sm:$0xff]
          %v5026 = vld [vmem:[#allocation5 + $0xe0] sm:$0xff]
          %v5027 = vld [vmem:[#allocation5 + $0xe8] sm:$0xff]
          %v5028 = vld [vmem:[#allocation5 + $0xf0] sm:$0xff]
          %v5029 = vld [vmem:[#allocation5 + $0xf8] sm:$0xff]
          %v5031 = vlaneseq
          %v5032 = vshrl.u32 %v5031, 7
          %v5033 = vsub.s32 0, %v5032
          %v5034 = vrot.slane %v4997, %v5033
          %v5036 = vsub.f32 %v4998, %v5034
          %v5037 = vsub.f32 %v4999, %v5034
          %v5038 = vsub.f32 %v5000, %v5034
          %v5039 = vsub.f32 %v5001, %v5034
          %v5040 = vsub.f32 %v5002, %v5034
          %v5041 = vsub.f32 %v5003, %v5034
          %v5042 = vsub.f32 %v5004, %v5034
          %v5043 = vsub.f32 %v5005, %v5034
          %v5044 = vsub.f32 %v5006, %v5034
          %v5045 = vsub.f32 %v5007, %v5034
          %v5046 = vsub.f32 %v5008, %v5034
          %v5047 = vsub.f32 %v5009, %v5034
          %v5048 = vsub.f32 %v5010, %v5034
          %v5049 = vsub.f32 %v5011, %v5034
          %v5050 = vsub.f32 %v5012, %v5034
          %v5051 = vsub.f32 %v5013, %v5034
          %v5052 = vsub.f32 %v5014, %v5034
          %v5053 = vsub.f32 %v5015, %v5034
          %v5054 = vsub.f32 %v5016, %v5034
          %v5055 = vsub.f32 %v5017, %v5034
          %v5056 = vsub.f32 %v5018, %v5034
          %v5057 = vsub.f32 %v5019, %v5034
          %v5058 = vsub.f32 %v5020, %v5034
          %v5059 = vsub.f32 %v5021, %v5034
          %v5060 = vsub.f32 %v5022, %v5034
          %v5061 = vsub.f32 %v5023, %v5034
          %v5062 = vsub.f32 %v5024, %v5034
          %v5063 = vsub.f32 %v5025, %v5034
          %v5064 = vsub.f32 %v5026, %v5034
          %v5065 = vsub.f32 %v5027, %v5034
          %v5066 = vsub.f32 %v5028, %v5034
          %v5067 = vsub.f32 %v5029, %v5034
          %v5068 = vmul.f32 %v5036, %v5036
          %v5069 = vmul.f32 %v5037, %v5037
          %v5070 = vmul.f32 %v5038, %v5038
          %v5071 = vmul.f32 %v5039, %v5039
          %v5072 = vmul.f32 %v5040, %v5040
          %v5073 = vmul.f32 %v5041, %v5041
          %v5074 = vmul.f32 %v5042, %v5042
          %v5075 = vmul.f32 %v5043, %v5043
          %v5076 = vmul.f32 %v5044, %v5044
          %v5077 = vmul.f32 %v5045, %v5045
          %v5078 = vmul.f32 %v5046, %v5046
          %v5079 = vmul.f32 %v5047, %v5047
          %v5080 = vmul.f32 %v5048, %v5048
          %v5081 = vmul.f32 %v5049, %v5049
          %v5082 = vmul.f32 %v5050, %v5050
          %v5083 = vmul.f32 %v5051, %v5051
          %v5084 = vmul.f32 %v5052, %v5052
          %v5085 = vmul.f32 %v5053, %v5053
          %v5086 = vmul.f32 %v5054, %v5054
          %v5087 = vmul.f32 %v5055, %v5055
          %v5088 = vmul.f32 %v5056, %v5056
          %v5089 = vmul.f32 %v5057, %v5057
          %v5090 = vmul.f32 %v5058, %v5058
          %v5091 = vmul.f32 %v5059, %v5059
          %v5092 = vmul.f32 %v5060, %v5060
          %v5093 = vmul.f32 %v5061, %v5061
          %v5094 = vmul.f32 %v5062, %v5062
          %v5095 = vmul.f32 %v5063, %v5063
          %v5096 = vmul.f32 %v5064, %v5064
          %v5097 = vmul.f32 %v5065, %v5065
          %v5098 = vmul.f32 %v5066, %v5066
          %v5099 = vmul.f32 %v5067, %v5067
          %vm5100 = vcmask 64512
          %v5101 = vsel %vm5100, %v5068, 0.0
          %v5102 = vsel %vm5100, %v5069, 0.0
          %v5103 = vadd.f32 %v5101, %v5102
          %v5104 = vsel %vm5100, %v5070, 0.0
          %v5105 = vadd.f32 %v5103, %v5104
          %v5106 = vsel %vm5100, %v5071, 0.0
          %v5107 = vadd.f32 %v5105, %v5106
          %v5108 = vsel %vm5100, %v5072, 0.0
          %v5109 = vadd.f32 %v5107, %v5108
          %v5110 = vsel %vm5100, %v5073, 0.0
          %v5111 = vadd.f32 %v5109, %v5110
          %v5112 = vsel %vm5100, %v5074, 0.0
          %v5113 = vadd.f32 %v5111, %v5112
          %v5114 = vsel %vm5100, %v5075, 0.0
          %v5115 = vadd.f32 %v5113, %v5114
          %v5116 = vsel %vm5100, %v5076, 0.0
          %v5117 = vadd.f32 %v5115, %v5116
          %v5118 = vsel %vm5100, %v5077, 0.0
          %v5119 = vadd.f32 %v5117, %v5118
          %v5120 = vsel %vm5100, %v5078, 0.0
          %v5121 = vadd.f32 %v5119, %v5120
          %v5122 = vsel %vm5100, %v5079, 0.0
          %v5123 = vadd.f32 %v5121, %v5122
          %v5124 = vsel %vm5100, %v5080, 0.0
          %v5125 = vadd.f32 %v5123, %v5124
          %v5126 = vsel %vm5100, %v5081, 0.0
          %v5127 = vadd.f32 %v5125, %v5126
          %v5128 = vsel %vm5100, %v5082, 0.0
          %v5129 = vadd.f32 %v5127, %v5128
          %v5130 = vsel %vm5100, %v5083, 0.0
          %v5131 = vadd.f32 %v5129, %v5130
          %v5132 = vsel %vm5100, %v5084, 0.0
          %v5133 = vadd.f32 %v5131, %v5132
          %v5134 = vsel %vm5100, %v5085, 0.0
          %v5135 = vadd.f32 %v5133, %v5134
          %v5136 = vsel %vm5100, %v5086, 0.0
          %v5137 = vadd.f32 %v5135, %v5136
          %v5138 = vsel %vm5100, %v5087, 0.0
          %v5139 = vadd.f32 %v5137, %v5138
          %v5140 = vsel %vm5100, %v5088, 0.0
          %v5141 = vadd.f32 %v5139, %v5140
          %v5142 = vsel %vm5100, %v5089, 0.0
          %v5143 = vadd.f32 %v5141, %v5142
          %v5144 = vsel %vm5100, %v5090, 0.0
          %v5145 = vadd.f32 %v5143, %v5144
          %v5146 = vsel %vm5100, %v5091, 0.0
          %v5147 = vadd.f32 %v5145, %v5146
          %v5148 = vsel %vm5100, %v5092, 0.0
          %v5149 = vadd.f32 %v5147, %v5148
          %v5150 = vsel %vm5100, %v5093, 0.0
          %v5151 = vadd.f32 %v5149, %v5150
          %v5152 = vsel %vm5100, %v5094, 0.0
          %v5153 = vadd.f32 %v5151, %v5152
          %v5154 = vsel %vm5100, %v5095, 0.0
          %v5155 = vadd.f32 %v5153, %v5154
          %v5156 = vsel %vm5100, %v5096, 0.0
          %v5157 = vadd.f32 %v5155, %v5156
          %v5158 = vsel %vm5100, %v5097, 0.0
          %v5159 = vadd.f32 %v5157, %v5158
          %v5160 = vsel %vm5100, %v5098, 0.0
          %v5161 = vadd.f32 %v5159, %v5160
          %v5162 = vsel %vm5100, %v5099, 0.0
          %v5163 = vadd.f32 %v5161, %v5162
          %v5164 = vrot.slane %v5163, 4
          %v5165 = vadd.f32 %v5163, %v5164
          %v5166 = vrot.slane %v5165, 2
          %v5167 = vadd.f32 %v5165, %v5166
          %v5168 = vrot.slane %v5167, 1
          %v5169 = vadd.f32 %v5167, %v5168
          %v5170 = vadd.f32 %v5169, 0.0
          %s5171 = scalar_lea.vmem [#allocation5], 256
          %v5172 = vld [vmem:[%s5171] sm:$0xff]
          %v5173 = vld [vmem:[%s5171 + $0x8] sm:$0xff]
          %v5174 = vld [vmem:[%s5171 + $0x10] sm:$0xff]
          %v5175 = vld [vmem:[%s5171 + $0x18] sm:$0xff]
          %v5176 = vld [vmem:[%s5171 + $0x20] sm:$0xff]
          %v5177 = vld [vmem:[%s5171 + $0x28] sm:$0xff]
          %v5178 = vld [vmem:[%s5171 + $0x30] sm:$0xff]
          %v5179 = vld [vmem:[%s5171 + $0x38] sm:$0xff]
          %v5180 = vld [vmem:[%s5171 + $0x40] sm:$0xff]
          %v5181 = vld [vmem:[%s5171 + $0x48] sm:$0xff]
          %v5182 = vld [vmem:[%s5171 + $0x50] sm:$0xff]
          %v5183 = vld [vmem:[%s5171 + $0x58] sm:$0xff]
          %v5184 = vld [vmem:[%s5171 + $0x60] sm:$0xff]
          %v5185 = vld [vmem:[%s5171 + $0x68] sm:$0xff]
          %v5186 = vld [vmem:[%s5171 + $0x70] sm:$0xff]
          %v5187 = vld [vmem:[%s5171 + $0x78] sm:$0xff]
          %v5188 = vld [vmem:[%s5171 + $0x80] sm:$0xff]
          %v5189 = vld [vmem:[%s5171 + $0x88] sm:$0xff]
          %v5190 = vld [vmem:[%s5171 + $0x90] sm:$0xff]
          %v5191 = vld [vmem:[%s5171 + $0x98] sm:$0xff]
          %v5192 = vld [vmem:[%s5171 + $0xa0] sm:$0xff]
          %v5193 = vld [vmem:[%s5171 + $0xa8] sm:$0xff]
          %v5194 = vld [vmem:[%s5171 + $0xb0] sm:$0xff]
          %v5195 = vld [vmem:[%s5171 + $0xb8] sm:$0xff]
          %v5196 = vld [vmem:[%s5171 + $0xc0] sm:$0xff]
          %v5197 = vld [vmem:[%s5171 + $0xc8] sm:$0xff]
          %v5198 = vld [vmem:[%s5171 + $0xd0] sm:$0xff]
          %v5199 = vld [vmem:[%s5171 + $0xd8] sm:$0xff]
          %v5200 = vld [vmem:[%s5171 + $0xe0] sm:$0xff]
          %v5201 = vld [vmem:[%s5171 + $0xe8] sm:$0xff]
          %v5202 = vld [vmem:[%s5171 + $0xf0] sm:$0xff]
          %v5203 = vld [vmem:[%s5171 + $0xf8] sm:$0xff]
          %v5204 = vsub.f32 %v5172, %v5034
          %v5205 = vsub.f32 %v5173, %v5034
          %v5206 = vsub.f32 %v5174, %v5034
          %v5207 = vsub.f32 %v5175, %v5034
          %v5208 = vsub.f32 %v5176, %v5034
          %v5209 = vsub.f32 %v5177, %v5034
          %v5210 = vsub.f32 %v5178, %v5034
          %v5211 = vsub.f32 %v5179, %v5034
          %v5212 = vsub.f32 %v5180, %v5034
          %v5213 = vsub.f32 %v5181, %v5034
          %v5214 = vsub.f32 %v5182, %v5034
          %v5215 = vsub.f32 %v5183, %v5034
          %v5216 = vsub.f32 %v5184, %v5034
          %v5217 = vsub.f32 %v5185, %v5034
          %v5218 = vsub.f32 %v5186, %v5034
          %v5219 = vsub.f32 %v5187, %v5034
          %v5220 = vsub.f32 %v5188, %v5034
          %v5221 = vsub.f32 %v5189, %v5034
          %v5222 = vsub.f32 %v5190, %v5034
          %v5223 = vsub.f32 %v5191, %v5034
          %v5224 = vsub.f32 %v5192, %v5034
          %v5225 = vsub.f32 %v5193, %v5034
          %v5226 = vsub.f32 %v5194, %v5034
          %v5227 = vsub.f32 %v5195, %v5034
          %v5228 = vsub.f32 %v5196, %v5034
          %v5229 = vsub.f32 %v5197, %v5034
          %v5230 = vsub.f32 %v5198, %v5034
          %v5231 = vsub.f32 %v5199, %v5034
          %v5232 = vsub.f32 %v5200, %v5034
          %v5233 = vsub.f32 %v5201, %v5034
          %v5234 = vsub.f32 %v5202, %v5034
          %v5235 = vsub.f32 %v5203, %v5034
          %v5236 = vmul.f32 %v5204, %v5204
          %v5237 = vmul.f32 %v5205, %v5205
          %v5238 = vmul.f32 %v5206, %v5206
          %v5239 = vmul.f32 %v5207, %v5207
          %v5240 = vmul.f32 %v5208, %v5208
          %v5241 = vmul.f32 %v5209, %v5209
          %v5242 = vmul.f32 %v5210, %v5210
          %v5243 = vmul.f32 %v5211, %v5211
          %v5244 = vmul.f32 %v5212, %v5212
          %v5245 = vmul.f32 %v5213, %v5213
          %v5246 = vmul.f32 %v5214, %v5214
          %v5247 = vmul.f32 %v5215, %v5215
          %v5248 = vmul.f32 %v5216, %v5216
          %v5249 = vmul.f32 %v5217, %v5217
          %v5250 = vmul.f32 %v5218, %v5218
          %v5251 = vmul.f32 %v5219, %v5219
          %v5252 = vmul.f32 %v5220, %v5220
          %v5253 = vmul.f32 %v5221, %v5221
          %v5254 = vmul.f32 %v5222, %v5222
          %v5255 = vmul.f32 %v5223, %v5223
          %v5256 = vmul.f32 %v5224, %v5224
          %v5257 = vmul.f32 %v5225, %v5225
          %v5258 = vmul.f32 %v5226, %v5226
          %v5259 = vmul.f32 %v5227, %v5227
          %v5260 = vmul.f32 %v5228, %v5228
          %v5261 = vmul.f32 %v5229, %v5229
          %v5262 = vmul.f32 %v5230, %v5230
          %v5263 = vmul.f32 %v5231, %v5231
          %v5264 = vmul.f32 %v5232, %v5232
          %v5265 = vmul.f32 %v5233, %v5233
          %v5266 = vmul.f32 %v5234, %v5234
          %v5267 = vmul.f32 %v5235, %v5235
          %v5268 = vsel %vm5100, %v5236, 0.0
          %v5269 = vsel %vm5100, %v5237, 0.0
          %v5270 = vadd.f32 %v5268, %v5269
          %v5271 = vsel %vm5100, %v5238, 0.0
          %v5272 = vadd.f32 %v5270, %v5271
          %v5273 = vsel %vm5100, %v5239, 0.0
          %v5274 = vadd.f32 %v5272, %v5273
          %v5275 = vsel %vm5100, %v5240, 0.0
          %v5276 = vadd.f32 %v5274, %v5275
          %v5277 = vsel %vm5100, %v5241, 0.0
          %v5278 = vadd.f32 %v5276, %v5277
          %v5279 = vsel %vm5100, %v5242, 0.0
          %v5280 = vadd.f32 %v5278, %v5279
          %v5281 = vsel %vm5100, %v5243, 0.0
          %v5282 = vadd.f32 %v5280, %v5281
          %v5283 = vsel %vm5100, %v5244, 0.0
          %v5284 = vadd.f32 %v5282, %v5283
          %v5285 = vsel %vm5100, %v5245, 0.0
          %v5286 = vadd.f32 %v5284, %v5285
          %v5287 = vsel %vm5100, %v5246, 0.0
          %v5288 = vadd.f32 %v5286, %v5287
          %v5289 = vsel %vm5100, %v5247, 0.0
          %v5290 = vadd.f32 %v5288, %v5289
          %v5291 = vsel %vm5100, %v5248, 0.0
          %v5292 = vadd.f32 %v5290, %v5291
          %v5293 = vsel %vm5100, %v5249, 0.0
          %v5294 = vadd.f32 %v5292, %v5293
          %v5295 = vsel %vm5100, %v5250, 0.0
          %v5296 = vadd.f32 %v5294, %v5295
          %v5297 = vsel %vm5100, %v5251, 0.0
          %v5298 = vadd.f32 %v5296, %v5297
          %v5299 = vsel %vm5100, %v5252, 0.0
          %v5300 = vadd.f32 %v5298, %v5299
          %v5301 = vsel %vm5100, %v5253, 0.0
          %v5302 = vadd.f32 %v5300, %v5301
          %v5303 = vsel %vm5100, %v5254, 0.0
          %v5304 = vadd.f32 %v5302, %v5303
          %v5305 = vsel %vm5100, %v5255, 0.0
          %v5306 = vadd.f32 %v5304, %v5305
          %v5307 = vsel %vm5100, %v5256, 0.0
          %v5308 = vadd.f32 %v5306, %v5307
          %v5309 = vsel %vm5100, %v5257, 0.0
          %v5310 = vadd.f32 %v5308, %v5309
          %v5311 = vsel %vm5100, %v5258, 0.0
          %v5312 = vadd.f32 %v5310, %v5311
          %v5313 = vsel %vm5100, %v5259, 0.0
          %v5314 = vadd.f32 %v5312, %v5313
          %v5315 = vsel %vm5100, %v5260, 0.0
          %v5316 = vadd.f32 %v5314, %v5315
          %v5317 = vsel %vm5100, %v5261, 0.0
          %v5318 = vadd.f32 %v5316, %v5317
          %v5319 = vsel %vm5100, %v5262, 0.0
          %v5320 = vadd.f32 %v5318, %v5319
          %v5321 = vsel %vm5100, %v5263, 0.0
          %v5322 = vadd.f32 %v5320, %v5321
          %v5323 = vsel %vm5100, %v5264, 0.0
          %v5324 = vadd.f32 %v5322, %v5323
          %v5325 = vsel %vm5100, %v5265, 0.0
          %v5326 = vadd.f32 %v5324, %v5325
          %v5327 = vsel %vm5100, %v5266, 0.0
          %v5328 = vadd.f32 %v5326, %v5327
          %v5329 = vsel %vm5100, %v5267, 0.0
          %v5330 = vadd.f32 %v5328, %v5329
          %v5331 = vrot.slane %v5330, 4
          %v5332 = vadd.f32 %v5330, %v5331
          %v5333 = vrot.slane %v5332, 2
          %v5334 = vadd.f32 %v5332, %v5333
          %v5335 = vrot.slane %v5334, 1
          %v5336 = vadd.f32 %v5334, %v5335
          %v5337 = vadd.f32 %v5170, %v5336
          %v5338 = vmul.f32 %v5337, 0.001953125
          %v5339 = vld [vmem:[%s7] sm:$0x1]
          %v5340 = vadd.f32 %v5338, 1e-05
          %v5341 = vrsqrt.pop %v5340
          %v5342 = vmul.f32 %v5339, %v5341
          %vm5343 = vcmask 57344
          %5344 = vst.msk [vmem:[#allocation10] sm:$0x1] %vm5343, %v5342
          %v5345 = vld [vmem:[%s8] sm:$0x1]
          %v5346 = vmul.f32 %v4997, %v5342
          %v5347 = vsub.f32 %v5345, %v5346
          %5348 = vst.msk [vmem:[#allocation11] sm:$0x1] %vm5343, %v5347
        $region80: #{tpu_custom_call.1} parent=75 // pred_fallthru
          _
        %s5349 = smul.u32 %s25, 256
        %s5350 = scalar_lea.vmem [#allocation5], %s5349
        %v5351 = vld [vmem:[%s5350] sm:$0xff]
        %v5352 = vld [vmem:[%s5350 + $0x8] sm:$0xff]
        %v5353 = vld [vmem:[%s5350 + $0x10] sm:$0xff]
        %v5354 = vld [vmem:[%s5350 + $0x18] sm:$0xff]
        %v5355 = vld [vmem:[%s5350 + $0x20] sm:$0xff]
        %v5356 = vld [vmem:[%s5350 + $0x28] sm:$0xff]
        %v5357 = vld [vmem:[%s5350 + $0x30] sm:$0xff]
        %v5358 = vld [vmem:[%s5350 + $0x38] sm:$0xff]
        %v5359 = vld [vmem:[%s5350 + $0x40] sm:$0xff]
        %v5360 = vld [vmem:[%s5350 + $0x48] sm:$0xff]
        %v5361 = vld [vmem:[%s5350 + $0x50] sm:$0xff]
        %v5362 = vld [vmem:[%s5350 + $0x58] sm:$0xff]
        %v5363 = vld [vmem:[%s5350 + $0x60] sm:$0xff]
        %v5364 = vld [vmem:[%s5350 + $0x68] sm:$0xff]
        %v5365 = vld [vmem:[%s5350 + $0x70] sm:$0xff]
        %v5366 = vld [vmem:[%s5350 + $0x78] sm:$0xff]
        %v5367 = vld [vmem:[%s5350 + $0x80] sm:$0xff]
        %v5368 = vld [vmem:[%s5350 + $0x88] sm:$0xff]
        %v5369 = vld [vmem:[%s5350 + $0x90] sm:$0xff]
        %v5370 = vld [vmem:[%s5350 + $0x98] sm:$0xff]
        %v5371 = vld [vmem:[%s5350 + $0xa0] sm:$0xff]
        %v5372 = vld [vmem:[%s5350 + $0xa8] sm:$0xff]
        %v5373 = vld [vmem:[%s5350 + $0xb0] sm:$0xff]
        %v5374 = vld [vmem:[%s5350 + $0xb8] sm:$0xff]
        %v5375 = vld [vmem:[%s5350 + $0xc0] sm:$0xff]
        %v5376 = vld [vmem:[%s5350 + $0xc8] sm:$0xff]
        %v5377 = vld [vmem:[%s5350 + $0xd0] sm:$0xff]
        %v5378 = vld [vmem:[%s5350 + $0xd8] sm:$0xff]
        %v5379 = vld [vmem:[%s5350 + $0xe0] sm:$0xff]
        %v5380 = vld [vmem:[%s5350 + $0xe8] sm:$0xff]
        %v5381 = vld [vmem:[%s5350 + $0xf0] sm:$0xff]
        %v5382 = vld [vmem:[%s5350 + $0xf8] sm:$0xff]
        %v5383 = vld [vmem:[#allocation10] sm:$0x1]
        %v5385 = vlaneseq
        %v5386 = vshrl.u32 %v5385, 7
        %v5387 = vsub.s32 0, %v5386
        %v5388 = vrot.slane %v5383, %v5387
        %v5390 = vmul.f32 %v5351, %v5388
        %v5391 = vmul.f32 %v5352, %v5388
        %v5392 = vmul.f32 %v5353, %v5388
        %v5393 = vmul.f32 %v5354, %v5388
        %v5394 = vmul.f32 %v5355, %v5388
        %v5395 = vmul.f32 %v5356, %v5388
        %v5396 = vmul.f32 %v5357, %v5388
        %v5397 = vmul.f32 %v5358, %v5388
        %v5398 = vmul.f32 %v5359, %v5388
        %v5399 = vmul.f32 %v5360, %v5388
        %v5400 = vmul.f32 %v5361, %v5388
        %v5401 = vmul.f32 %v5362, %v5388
        %v5402 = vmul.f32 %v5363, %v5388
        %v5403 = vmul.f32 %v5364, %v5388
        %v5404 = vmul.f32 %v5365, %v5388
        %v5405 = vmul.f32 %v5366, %v5388
        %v5406 = vmul.f32 %v5367, %v5388
        %v5407 = vmul.f32 %v5368, %v5388
        %v5408 = vmul.f32 %v5369, %v5388
        %v5409 = vmul.f32 %v5370, %v5388
        %v5410 = vmul.f32 %v5371, %v5388
        %v5411 = vmul.f32 %v5372, %v5388
        %v5412 = vmul.f32 %v5373, %v5388
        %v5413 = vmul.f32 %v5374, %v5388
        %v5414 = vmul.f32 %v5375, %v5388
        %v5415 = vmul.f32 %v5376, %v5388
        %v5416 = vmul.f32 %v5377, %v5388
        %v5417 = vmul.f32 %v5378, %v5388
        %v5418 = vmul.f32 %v5379, %v5388
        %v5419 = vmul.f32 %v5380, %v5388
        %v5420 = vmul.f32 %v5381, %v5388
        %v5421 = vmul.f32 %v5382, %v5388
        %v5422 = vld [vmem:[#allocation11] sm:$0x1]
        %v5424 = vlaneseq
        %v5425 = vshrl.u32 %v5424, 7
        %v5426 = vsub.s32 0, %v5425
        %v5427 = vrot.slane %v5422, %v5426
        %v5429 = vadd.f32 %v5390, %v5427
        %v5430 = vadd.f32 %v5391, %v5427
        %v5431 = vadd.f32 %v5392, %v5427
        %v5432 = vadd.f32 %v5393, %v5427
        %v5433 = vadd.f32 %v5394, %v5427
        %v5434 = vadd.f32 %v5395, %v5427
        %v5435 = vadd.f32 %v5396, %v5427
        %v5436 = vadd.f32 %v5397, %v5427
        %v5437 = vadd.f32 %v5398, %v5427
        %v5438 = vadd.f32 %v5399, %v5427
        %v5439 = vadd.f32 %v5400, %v5427
        %v5440 = vadd.f32 %v5401, %v5427
        %v5441 = vadd.f32 %v5402, %v5427
        %v5442 = vadd.f32 %v5403, %v5427
        %v5443 = vadd.f32 %v5404, %v5427
        %v5444 = vadd.f32 %v5405, %v5427
        %v5445 = vadd.f32 %v5406, %v5427
        %v5446 = vadd.f32 %v5407, %v5427
        %v5447 = vadd.f32 %v5408, %v5427
        %v5448 = vadd.f32 %v5409, %v5427
        %v5449 = vadd.f32 %v5410, %v5427
        %v5450 = vadd.f32 %v5411, %v5427
        %v5451 = vadd.f32 %v5412, %v5427
        %v5452 = vadd.f32 %v5413, %v5427
        %v5453 = vadd.f32 %v5414, %v5427
        %v5454 = vadd.f32 %v5415, %v5427
        %v5455 = vadd.f32 %v5416, %v5427
        %v5456 = vadd.f32 %v5417, %v5427
        %v5457 = vadd.f32 %v5418, %v5427
        %v5458 = vadd.f32 %v5419, %v5427
        %v5459 = vadd.f32 %v5420, %v5427
        %v5460 = vadd.f32 %v5421, %v5427
        %v5461 = vmax.f32 %v5429, 0.0
        %v5462 = vmax.f32 %v5430, 0.0
        %v5463 = vmax.f32 %v5431, 0.0
        %v5464 = vmax.f32 %v5432, 0.0
        %v5465 = vmax.f32 %v5433, 0.0
        %v5466 = vmax.f32 %v5434, 0.0
        %v5467 = vmax.f32 %v5435, 0.0
        %v5468 = vmax.f32 %v5436, 0.0
        %v5469 = vmax.f32 %v5437, 0.0
        %v5470 = vmax.f32 %v5438, 0.0
        %v5471 = vmax.f32 %v5439, 0.0
        %v5472 = vmax.f32 %v5440, 0.0
        %v5473 = vmax.f32 %v5441, 0.0
        %v5474 = vmax.f32 %v5442, 0.0
        %v5475 = vmax.f32 %v5443, 0.0
        %v5476 = vmax.f32 %v5444, 0.0
        %v5477 = vmax.f32 %v5445, 0.0
        %v5478 = vmax.f32 %v5446, 0.0
        %v5479 = vmax.f32 %v5447, 0.0
        %v5480 = vmax.f32 %v5448, 0.0
        %v5481 = vmax.f32 %v5449, 0.0
        %v5482 = vmax.f32 %v5450, 0.0
        %v5483 = vmax.f32 %v5451, 0.0
        %v5484 = vmax.f32 %v5452, 0.0
        %v5485 = vmax.f32 %v5453, 0.0
        %v5486 = vmax.f32 %v5454, 0.0
        %v5487 = vmax.f32 %v5455, 0.0
        %v5488 = vmax.f32 %v5456, 0.0
        %v5489 = vmax.f32 %v5457, 0.0
        %v5490 = vmax.f32 %v5458, 0.0
        %v5491 = vmax.f32 %v5459, 0.0
        %v5492 = vmax.f32 %v5460, 0.0
        %s5493 = scalar_lea.vmem %s9, %s5349
        %vm5494 = vcmask 64512
        %5495 = vst.msk [vmem:[%s5493] sm:$0xff] %vm5494, %v5461
        %5496 = vst.msk [vmem:[%s5493 + $0x8] sm:$0xff] %vm5494, %v5462
        %5497 = vst.msk [vmem:[%s5493 + $0x10] sm:$0xff] %vm5494, %v5463
        %5498 = vst.msk [vmem:[%s5493 + $0x18] sm:$0xff] %vm5494, %v5464
        %5499 = vst.msk [vmem:[%s5493 + $0x20] sm:$0xff] %vm5494, %v5465
        %5500 = vst.msk [vmem:[%s5493 + $0x28] sm:$0xff] %vm5494, %v5466
        %5501 = vst.msk [vmem:[%s5493 + $0x30] sm:$0xff] %vm5494, %v5467
        %5502 = vst.msk [vmem:[%s5493 + $0x38] sm:$0xff] %vm5494, %v5468
        %5503 = vst.msk [vmem:[%s5493 + $0x40] sm:$0xff] %vm5494, %v5469
        %5504 = vst.msk [vmem:[%s5493 + $0x48] sm:$0xff] %vm5494, %v5470
        %5505 = vst.msk [vmem:[%s5493 + $0x50] sm:$0xff] %vm5494, %v5471
        %5506 = vst.msk [vmem:[%s5493 + $0x58] sm:$0xff] %vm5494, %v5472
        %5507 = vst.msk [vmem:[%s5493 + $0x60] sm:$0xff] %vm5494, %v5473
        %5508 = vst.msk [vmem:[%s5493 + $0x68] sm:$0xff] %vm5494, %v5474
        %5509 = vst.msk [vmem:[%s5493 + $0x70] sm:$0xff] %vm5494, %v5475
        %5510 = vst.msk [vmem:[%s5493 + $0x78] sm:$0xff] %vm5494, %v5476
        %5511 = vst.msk [vmem:[%s5493 + $0x80] sm:$0xff] %vm5494, %v5477
        %5512 = vst.msk [vmem:[%s5493 + $0x88] sm:$0xff] %vm5494, %v5478
        %5513 = vst.msk [vmem:[%s5493 + $0x90] sm:$0xff] %vm5494, %v5479
        %5514 = vst.msk [vmem:[%s5493 + $0x98] sm:$0xff] %vm5494, %v5480
        %5515 = vst.msk [vmem:[%s5493 + $0xa0] sm:$0xff] %vm5494, %v5481
        %5516 = vst.msk [vmem:[%s5493 + $0xa8] sm:$0xff] %vm5494, %v5482
        %5517 = vst.msk [vmem:[%s5493 + $0xb0] sm:$0xff] %vm5494, %v5483
        %5518 = vst.msk [vmem:[%s5493 + $0xb8] sm:$0xff] %vm5494, %v5484
        %5519 = vst.msk [vmem:[%s5493 + $0xc0] sm:$0xff] %vm5494, %v5485
        %5520 = vst.msk [vmem:[%s5493 + $0xc8] sm:$0xff] %vm5494, %v5486
        %5521 = vst.msk [vmem:[%s5493 + $0xd0] sm:$0xff] %vm5494, %v5487
        %5522 = vst.msk [vmem:[%s5493 + $0xd8] sm:$0xff] %vm5494, %v5488
        %5523 = vst.msk [vmem:[%s5493 + $0xe0] sm:$0xff] %vm5494, %v5489
        %5524 = vst.msk [vmem:[%s5493 + $0xe8] sm:$0xff] %vm5494, %v5490
        %5525 = vst.msk [vmem:[%s5493 + $0xf0] sm:$0xff] %vm5494, %v5491
        %5526 = vst.msk [vmem:[%s5493 + $0xf8] sm:$0xff] %vm5494, %v5492
      $region76: #{tpu_custom_call.1} parent=55 // pred_fallthru
        _
      // Predicated region
      $region81: #{tpu_custom_call.1} parent=55 // pred_check
        %p5527 = pneg %p239
      $region82: #{tpu_custom_call.1} parent=55 // pred_check_branch
        %5529 = sbr.rel (%p5527) target = $region84
      $region83: #{tpu_custom_call.1} parent=55 // pred_region
        _
      $region84: #{tpu_custom_call.1} parent=55 // pred_fallthru
        _
      // Predicated region
      $region85: #{tpu_custom_call.1} parent=55 // pred_check
        %p5530 = pneg %p239
      $region86: #{tpu_custom_call.1} parent=55 // pred_check_branch
        %5532 = sbr.rel (%p5530) target = $region88
      $region87: #{tpu_custom_call.1} parent=55 // pred_region
        _
      $region88: #{tpu_custom_call.1} parent=55 // pred_fallthru
        _
    $region56: #{tpu_custom_call.1} parent=5 // pred_fallthru
      _
    %p5533 = scmp.le.s32.totalorder 2, %s15
    // Predicated region
    $region89: #{tpu_custom_call.1} parent=5 // pred_check
      %p5534 = pneg %p5533
    $region90: #{tpu_custom_call.1} parent=5 // pred_check_branch
      %5536 = sbr.rel (%p5534) target = $region92
    $region91: #{tpu_custom_call.1} parent=5 // pred_region
      %s5537 = ssub.s32 %s15, 2
    $region92: #{tpu_custom_call.1} parent=5 // pred_fallthru
      _
  $region6: #{tpu_custom_call.1} parent=0 // loop_footer
    %s19 = sadd.s32 1, %s15
  $region7: #{tpu_custom_call.1} parent=0 // loop_footer_branch
    %14 = sbr.rel target = $region3
  $region8: #{tpu_custom_call.1} parent=0 // loop_exit
    _

</llo_original>
